<compile_context>
chip_gen: v6e
topology: v6e:2x2x1
jax: 0.10.0
libtpu: 0.0.40
codegen_flags: <defaults>
</compile_context>

<pallas_src>
import functools

import numpy as np

import jax
import jax.numpy as jnp
from jax.experimental import pallas as pl
from jax.experimental.pallas import tpu as pltpu

# MNIST geometry (fixed by the module: Linear(7*7*2N, ...) => 28x28 inputs).
_IMG = 28          # input spatial
_H1 = 14           # conv1 output spatial
_H2 = 7            # conv2 output spatial
_P = _H2 * _H2     # 49 conv2 spatial positions
_P_PAD = 56        # padded to a multiple of _G
_G = 8             # conv2 positions handled per grid step  -> 7 grid steps
_KK = 16           # 4x4 kernel taps


def _build_gather_tables():
    """Fold im2col(conv1) o im2col(conv2) into one gather over the 28x28 image.

    Returns (idx, feat_valid, group_valid):
      idx[p, t*16+f]        flat pixel index feeding conv1 feature f of the conv1
                            patch at conv2 tap t of conv2 output position p.
      feat_valid[p, t*16+f] 0 where that pixel falls in conv1's zero padding
                            (or the whole tap is conv2 padding).
      group_valid[p, t]     0 where tap t of position p reads conv2's zero
                            padding (conv1 bias must be suppressed there too).
    """
    idx = np.zeros((_P_PAD, _KK, _KK), np.int32)
    feat_valid = np.zeros((_P_PAD, _KK, _KK), np.float32)
    group_valid = np.zeros((_P_PAD, _KK), np.float32)
    for p in range(_P):
        ho, wo = divmod(p, _H2)
        for t in range(_KK):
            i, j = divmod(t, 4)
            h1, w1 = 2 * ho + i - 1, 2 * wo + j - 1
            if not (0 <= h1 < _H1 and 0 <= w1 < _H1):
                continue                      # conv2 zero padding: whole tap is 0
            group_valid[p, t] = 1.0
            for f in range(_KK):
                ki, kj = divmod(f, 4)
                r, c = 2 * h1 + ki - 1, 2 * w1 + kj - 1
                if 0 <= r < _IMG and 0 <= c < _IMG:
                    idx[p, t, f] = r * _IMG + c
                    feat_valid[p, t, f] = 1.0
    return (idx.reshape(_P_PAD, _KK * _KK),
            feat_valid.reshape(_P_PAD, _KK * _KK),
            group_valid)


# ------------------------------ fused kernel ------------------------------- #

def _fused_mnist_kernel(patches_ref, b1m_ref, w1k_ref, w2_ref, b2_ref,
                        w3_ref, b3_ref, w4_ref, b4_ref, o_ref,
                        h_ref, y2_ref, *, batch, groups):
    k = pl.program_id(0)

    @pl.when(k == 0)
    def _init():
        h_ref[...] = jnp.zeros_like(h_ref)

    # conv1 (input clamp fused) for all 16 taps of this step's conv2 positions.
    # Lanes of w1k/b1m are (tap, conv1-out-channel) and match w2's row order.
    pa = jnp.clip(patches_ref[...], 0.0, 1.0)                     # (G*B, 256)
    y1 = jnp.dot(pa, w1k_ref[...], preferred_element_type=jnp.float32)
    y1 = jnp.maximum(y1 + b1m_ref[...], 0.0)                      # (G*B, 512)

    # conv2 for the same positions.
    y2 = jnp.dot(y1, w2_ref[...], preferred_element_type=jnp.float32)
    y2_ref[...] = jnp.maximum(y2 + b2_ref[...], 0.0)              # (G*B, 64)

    # fc1 partial contraction against this step's w3 row slab (bf16 weights,
    # f32 accumulation in the resident h scratch).
    c2 = y2_ref.shape[1]
    for g in range(groups):
        a = y2_ref[g * batch:(g + 1) * batch, :].astype(jnp.bfloat16)   # (B, 64)
        w = w3_ref[g * c2:(g + 1) * c2, :]                              # (64, 1024)
        h_ref[...] += jnp.dot(a, w, preferred_element_type=jnp.float32)

    # Finalize on the last slab: fc1 bias + ReLU, then fc2 (128-lane padded).
    @pl.when(k == pl.num_programs(0) - 1)
    def _final():
        hidden = jnp.maximum(h_ref[...] + b3_ref[...], 0.0)       # (B, 1024)
        o_ref[...] = (jnp.dot(hidden, w4_ref[...],
                              preferred_element_type=jnp.float32) + b4_ref[...])


def mnist_fused(patches, b1m, w1k, w2, b2, w3p, b3, w4p, b4, *, batch):
    rows, kd = patches.shape            # (P_PAD*B, 256)
    c1k = w1k.shape[1]                  # 512
    c2 = w2.shape[1]                    # 64
    hid = w3p.shape[1]                  # 1024
    nout = w4p.shape[1]                 # 128
    steps = rows // (_G * batch)        # 7
    assert steps * _G * batch == rows and w3p.shape[0] == steps * _G * c2

    kernel = functools.partial(_fused_mnist_kernel, batch=batch, groups=_G)
    return pl.pallas_call(
        kernel,
        out_shape=jax.ShapeDtypeStruct((batch, nout), jnp.float32),
        grid_spec=pltpu.PrefetchScalarGridSpec(
            num_scalar_prefetch=0,
            grid=(steps,),
            in_specs=[
                pl.BlockSpec((_G * batch, kd), lambda k: (k, 0)),    # patches
                pl.BlockSpec((_G * batch, c1k), lambda k: (k, 0)),   # masked conv1 bias
                pl.BlockSpec((kd, c1k), lambda k: (0, 0)),           # kron(I16, w1)
                pl.BlockSpec((c1k, c2), lambda k: (0, 0)),           # w2
                pl.BlockSpec((1, c2), lambda k: (0, 0)),             # b2
                pl.BlockSpec((_G * c2, hid), lambda k: (k, 0)),      # w3 slab (bf16)
                pl.BlockSpec((1, hid), lambda k: (0, 0)),            # b3
                pl.BlockSpec((hid, nout), lambda k: (0, 0)),         # w4 (128-lane pad)
                pl.BlockSpec((1, nout), lambda k: (0, 0)),           # b4
            ],
            out_specs=pl.BlockSpec((batch, nout), lambda k: (0, 0)),
            scratch_shapes=[
                pltpu.VMEM((batch, hid), jnp.float32),               # fc1 accumulator
                pltpu.VMEM((_G * batch, c2), jnp.float32),           # conv2 tile
            ],
        ),
        compiler_params=pltpu.CompilerParams(
            dimension_semantics=("arbitrary",)),   # grid axis is a reduction
    )(patches, b1m, w1k, w2, b2, w3p, b3, w4p, b4)


# ------------------------------- parameters -------------------------------- #

def init_params(key, N=32):
    """Deterministic PyTorch-style uniform init (same layout as the nn.Module)."""
    def uni(k, shape, fan_in):
        bound = 1.0 / jnp.sqrt(fan_in)
        return jax.random.uniform(k, shape, jnp.float32, -bound, bound)

    ks = jax.random.split(key, 8)
    return {
        "w1": uni(ks[0], (N, 1, 4, 4), 1 * 4 * 4),
        "b1": uni(ks[1], (N,), 1 * 4 * 4),
        "w2": uni(ks[2], (2 * N, N, 4, 4), N * 4 * 4),
        "b2": uni(ks[3], (2 * N,), N * 4 * 4),
        "w3": uni(ks[4], (32 * N, 7 * 7 * 2 * N), 7 * 7 * 2 * N),
        "b3": uni(ks[5], (32 * N,), 7 * 7 * 2 * N),
        "w4": uni(ks[6], (10, 32 * N), 32 * N),
        "b4": uni(ks[7], (10,), 32 * N),
    }


def prepare_params(params, batch):
    """One-time weight repack / gather-table build (hoisted out of the forward)."""
    N = params["w1"].shape[0]          # 32
    C2 = 2 * N                         # 64
    HID = 32 * N                       # 1024

    idx_np, feat_valid_np, group_valid_np = _build_gather_tables()

    # conv1 weight as (16 features, N) then block-diagonal over the 16 conv2 taps
    # so lanes of the conv1 matmul output are (tap, channel) == w2's row order.
    w1m = params["w1"].transpose(2, 3, 1, 0).reshape(_KK, N)          # (16, 32)
    w1k = jnp.kron(jnp.eye(_KK, dtype=jnp.float32), w1m)              # (256, 512)

    # conv2 weight (O,I,kh,kw) -> (kh*kw*I, O) = (512, 64).
    w2 = params["w2"].transpose(2, 3, 1, 0).reshape(_KK * N, C2)

    # fc1 weight: NCHW-flatten columns -> NHWC-flatten rows (p*C2 + c), pad the
    # spatial axis 49 -> 56 with zero rows, cast to bf16 (dominant HBM stream).
    w3 = params["w3"].reshape(HID, C2, _H2, _H2).transpose(0, 2, 3, 1)
    w3 = w3.reshape(HID, _P * C2).T                                   # (3136, 1024)
    w3 = jnp.pad(w3, ((0, (_P_PAD - _P) * C2), (0, 0))).astype(jnp.bfloat16)

    # fc2 weight/bias padded once to 128 output lanes (lane-dense store).
    w4 = jnp.zeros((HID, 128), jnp.float32).at[:, :10].set(params["w4"].T)
    b4 = jnp.zeros((1, 128), jnp.float32).at[0, :10].set(params["b4"])

    # conv1 bias, zeroed where the tap falls in conv2's zero padding; replicated
    # to match the (p, batch) row order of the patch tensor.
    group_valid = jnp.asarray(group_valid_np)                         # (56, 16)
    b1m = (group_valid[:, :, None] * params["b1"][None, None, :])
    b1m = jnp.repeat(b1m.reshape(_P_PAD, _KK * N), batch, axis=0)     # (56*B, 512)

    return {
        "idx": jnp.asarray(idx_np),           # (56, 256) int32
        "valid": jnp.asarray(feat_valid_np),  # (56, 256) f32
        "w1k": w1k, "b1m": b1m,
        "w2": w2, "b2": params["b2"].reshape(1, C2),
        "w3": w3, "b3": params["b3"].reshape(1, HID),
        "w4": w4, "b4": b4,
    }


# ------------------------------- forward pass ------------------------------ #

@jax.jit
def pallas_forward(x_nchw, pp):
    B = x_nchw.shape[0]
    assert x_nchw.shape[1:] == (1, _IMG, _IMG)
    assert pp["b1m"].shape[0] == _P_PAD * B

    # Double im2col (conv1 patches for every conv2 tap) as ONE precomputed gather;
    # `valid` zeroes both conv1- and conv2-padding positions.  Row = p*B + b.
    xflat = x_nchw.reshape(B, _IMG * _IMG)
    g = jnp.take(xflat, pp["idx"], axis=1) * pp["valid"]          # (B, 56, 256)
    patches = g.transpose(1, 0, 2).reshape(_P_PAD * B, _KK * _KK)

    logits = mnist_fused(patches, pp["b1m"], pp["w1k"], pp["w2"], pp["b2"],
                         pp["w3"], pp["b3"], pp["w4"], pp["b4"], batch=B)
    return logits[:, :10]


def reference_forward(x, params):
    """Pure-JAX reference replicating the PyTorch forward (original layouts)."""
    x = jnp.clip(x, 0.0, 1.0)
    dn = ("NCHW", "OIHW", "NCHW")
    y = jax.lax.conv_general_dilated(x, params["w1"], (2, 2), ((1, 1), (1, 1)),
                                     dimension_numbers=dn)
    y = jax.nn.relu(y + params["b1"][None, :, None, None])
    y = jax.lax.conv_general_dilated(y, params["w2"], (2, 2), ((1, 1), (1, 1)),
                                     dimension_numbers=dn)
    y = jax.nn.relu(y + params["b2"][None, :, None, None])
    y = y.reshape(y.shape[0], -1)
    y = jax.nn.relu(y @ params["w3"].T + params["b3"])
    return y @ params["w4"].T + params["b4"]


if __name__ == "__main__":
    N = 32          # module default
    B = 2           # small batch
    key = jax.random.PRNGKey(0)
    k_x, k_p = jax.random.split(key)
    # MNIST-shaped input (Linear(7*7*2N, ...) implies 28x28 inputs), NCHW like torch.
    x = jax.random.uniform(k_x, (B, 1, 28, 28), jnp.float32, -0.5, 1.5)
    params = init_params(k_p, N)
    # One-time weight repack / gather-table build (out of the per-call path).
    pp = jax.tree_util.tree_map(jax.block_until_ready, prepare_params(params, B))

    out = jax.block_until_ready(pallas_forward(x, pp))
    ref = jax.block_until_ready(reference_forward(x, params))

    assert out.shape == (B, 10), out.shape
    max_err = float(jnp.max(jnp.abs(out - ref)))
    # Tolerance sized for bf16 fc1 weights/activations (expected max err ~1e-4).
    assert jnp.allclose(out, ref, atol=2e-3, rtol=2e-2), max_err
    print("KERNEL_OK")
</pallas_src>

<mosaic_0001>
module attributes {stable_mosaic.version = 11 : i64} {
  func.func @_fused_mnist_kernel(%arg0: i32, %arg1: memref<16x256xf32, #tpu.memory_space<vmem>>, %arg2: memref<16x512xf32, #tpu.memory_space<vmem>>, %arg3: memref<256x512xf32, #tpu.memory_space<vmem>>, %arg4: memref<512x64xf32, #tpu.memory_space<vmem>>, %arg5: memref<1x64xf32, #tpu.memory_space<vmem>>, %arg6: memref<512x1024xbf16, #tpu.memory_space<vmem>>, %arg7: memref<1x1024xf32, #tpu.memory_space<vmem>>, %arg8: memref<1024x128xf32, #tpu.memory_space<vmem>>, %arg9: memref<1x128xf32, #tpu.memory_space<vmem>>, %arg10: memref<2x128xf32, #tpu.memory_space<vmem>>, %arg11: memref<2x1024xf32, #tpu.memory_space<vmem>>, %arg12: memref<16x64xf32, #tpu.memory_space<vmem>>) attributes {dimension_semantics = [#tpu.dimension_semantics<arbitrary>], iteration_bounds = array<i64: 7>, scalar_prefetch = 0 : i64, scratch_operands = 2 : i64, tpu.core_type = #tpu.core_type<tc>, window_params = [{transform_indices = @transform_0, window_bounds = array<i64: 16, 256>}, {transform_indices = @transform_1, window_bounds = array<i64: 16, 512>}, {pipeline_mode = #tpu.pipeline_mode<synchronous>, transform_indices = @transform_2, window_bounds = array<i64: 256, 512>}, {pipeline_mode = #tpu.pipeline_mode<synchronous>, transform_indices = @transform_3, window_bounds = array<i64: 512, 64>}, {pipeline_mode = #tpu.pipeline_mode<synchronous>, transform_indices = @transform_4, window_bounds = array<i64: 1, 64>}, {transform_indices = @transform_5, window_bounds = array<i64: 512, 1024>}, {pipeline_mode = #tpu.pipeline_mode<synchronous>, transform_indices = @transform_6, window_bounds = array<i64: 1, 1024>}, {pipeline_mode = #tpu.pipeline_mode<synchronous>, transform_indices = @transform_7, window_bounds = array<i64: 1024, 128>}, {pipeline_mode = #tpu.pipeline_mode<synchronous>, transform_indices = @transform_8, window_bounds = array<i64: 1, 128>}, {pipeline_mode = #tpu.pipeline_mode<synchronous>, transform_indices = @transform_9, window_bounds = array<i64: 2, 128>}]} {
    %c0_i32 = arith.constant 0 : i32
    %0 = arith.cmpi eq, %arg0, %c0_i32 : i32
    %1 = arith.extui %0 : i1 to i32
    %c0_i32_0 = arith.constant 0 : i32
    %2 = arith.cmpi ne, %1, %c0_i32_0 : i32
    scf.if %2 {
      %cst_76 = arith.constant 0.000000e+00 : f32
      %81 = vector.broadcast %cst_76 : f32 to vector<2x1024xf32>
      %c0_77 = arith.constant 0 : index
      %c0_78 = arith.constant 0 : index
      %82 = vector.load %arg11[%c0_77, %c0_78] : memref<2x1024xf32, #tpu.memory_space<vmem>>, vector<2x1024xf32>
      tpu.vector_store %arg11[%c0_77, %c0_78], %81 {strides = array<i32>} : memref<2x1024xf32, #tpu.memory_space<vmem>>, vector<2x1024xf32>,
    } else {
    }
    %c0 = arith.constant 0 : index
    %c0_1 = arith.constant 0 : index
    %3 = vector.load %arg1[%c0, %c0_1] : memref<16x256xf32, #tpu.memory_space<vmem>>, vector<16x256xf32>
    %cst = arith.constant 0.000000e+00 : f32
    %cst_2 = arith.constant 1.000000e+00 : f32
    %4 = vector.broadcast %cst : f32 to vector<16x256xf32>
    %5 = arith.maximumf %4, %3 : vector<16x256xf32>
    %6 = vector.broadcast %cst_2 : f32 to vector<16x256xf32>
    %7 = arith.minimumf %6, %5 : vector<16x256xf32>
    %c0_3 = arith.constant 0 : index
    %c0_4 = arith.constant 0 : index
    %8 = vector.load %arg3[%c0_3, %c0_4] : memref<256x512xf32, #tpu.memory_space<vmem>>, vector<256x512xf32>
    %cst_5 = arith.constant dense<0.000000e+00> : vector<16x512xf32>
    %9 = tpu.matmul %7, %8, %cst_5 {dimension_numbers = #tpu.dot_dimension_numbers<[1], [0], [0], [1], [0, 0, 1, 1], [], []>} : vector<16x256xf32>, vector<256x512xf32>, vector<16x512xf32> -> vector<16x512xf32>
    %c0_6 = arith.constant 0 : index
    %c0_7 = arith.constant 0 : index
    %10 = vector.load %arg2[%c0_6, %c0_7] : memref<16x512xf32, #tpu.memory_space<vmem>>, vector<16x512xf32>
    %11 = arith.addf %9, %10 : vector<16x512xf32>
    %cst_8 = arith.constant 0.000000e+00 : f32
    %12 = vector.broadcast %cst_8 : f32 to vector<16x512xf32>
    %13 = arith.maximumf %11, %12 : vector<16x512xf32>
    %c0_9 = arith.constant 0 : index
    %c0_10 = arith.constant 0 : index
    %14 = vector.load %arg4[%c0_9, %c0_10] : memref<512x64xf32, #tpu.memory_space<vmem>>, vector<512x64xf32>
    %cst_11 = arith.constant dense<0.000000e+00> : vector<16x64xf32>
    %15 = tpu.matmul %13, %14, %cst_11 {dimension_numbers = #tpu.dot_dimension_numbers<[1], [0], [0], [1], [0, 0, 1, 1], [], []>} : vector<16x512xf32>, vector<512x64xf32>, vector<16x64xf32> -> vector<16x64xf32>
    %c0_12 = arith.constant 0 : index
    %c0_13 = arith.constant 0 : index
    %16 = vector.load %arg5[%c0_12, %c0_13] : memref<1x64xf32, #tpu.memory_space<vmem>>, vector<1x64xf32>
    %17 = vector.broadcast %16 : vector<1x64xf32> to vector<16x64xf32>
    %18 = arith.addf %15, %17 : vector<16x64xf32>
    %cst_14 = arith.constant 0.000000e+00 : f32
    %19 = vector.broadcast %cst_14 : f32 to vector<16x64xf32>
    %20 = arith.maximumf %18, %19 : vector<16x64xf32>
    %c0_15 = arith.constant 0 : index
    %c0_16 = arith.constant 0 : index
    %21 = vector.load %arg12[%c0_15, %c0_16] : memref<16x64xf32, #tpu.memory_space<vmem>>, vector<16x64xf32>
    tpu.vector_store %arg12[%c0_15, %c0_16], %20 {strides = array<i32>} : memref<16x64xf32, #tpu.memory_space<vmem>>, vector<16x64xf32>,
    %c0_17 = arith.constant 0 : index
    %c0_18 = arith.constant 0 : index
    %22 = vector.load %arg12[%c0_17, %c0_18] : memref<16x64xf32, #tpu.memory_space<vmem>>, vector<2x64xf32>
    %23 = arith.truncf %22 : vector<2x64xf32> to vector<2x64xbf16>
    %c0_19 = arith.constant 0 : index
    %c0_20 = arith.constant 0 : index
    %24 = vector.load %arg6[%c0_19, %c0_20] : memref<512x1024xbf16, #tpu.memory_space<vmem>>, vector<64x1024xbf16>
    %c0_21 = arith.constant 0 : index
    %c0_22 = arith.constant 0 : index
    %25 = vector.load %arg11[%c0_21, %c0_22] : memref<2x1024xf32, #tpu.memory_space<vmem>>, vector<2x1024xf32>
    %cst_23 = arith.constant dense<0.000000e+00> : vector<2x1024xf32>
    %26 = tpu.matmul %23, %24, %cst_23 {dimension_numbers = #tpu.dot_dimension_numbers<[1], [0], [0], [1], [0, 0, 1, 1], [], []>} : vector<2x64xbf16>, vector<64x1024xbf16>, vector<2x1024xf32> -> vector<2x1024xf32>
    %27 = arith.addf %25, %26 : vector<2x1024xf32>
    %c0_24 = arith.constant 0 : index
    %c0_25 = arith.constant 0 : index
    %28 = vector.load %arg11[%c0_24, %c0_25] : memref<2x1024xf32, #tpu.memory_space<vmem>>, vector<2x1024xf32>
    tpu.vector_store %arg11[%c0_24, %c0_25], %27 {strides = array<i32>} : memref<2x1024xf32, #tpu.memory_space<vmem>>, vector<2x1024xf32>,
    %c2 = arith.constant 2 : index
    %c0_26 = arith.constant 0 : index
    %29 = vector.load %arg12[%c2, %c0_26] : memref<16x64xf32, #tpu.memory_space<vmem>>, vector<2x64xf32>
    %30 = arith.truncf %29 : vector<2x64xf32> to vector<2x64xbf16>
    %c64 = arith.constant 64 : index
    %c0_27 = arith.constant 0 : index
    %31 = vector.load %arg6[%c64, %c0_27] : memref<512x1024xbf16, #tpu.memory_space<vmem>>, vector<64x1024xbf16>
    %c0_28 = arith.constant 0 : index
    %c0_29 = arith.constant 0 : index
    %32 = vector.load %arg11[%c0_28, %c0_29] : memref<2x1024xf32, #tpu.memory_space<vmem>>, vector<2x1024xf32>
    %cst_30 = arith.constant dense<0.000000e+00> : vector<2x1024xf32>
    %33 = tpu.matmul %30, %31, %cst_30 {dimension_numbers = #tpu.dot_dimension_numbers<[1], [0], [0], [1], [0, 0, 1, 1], [], []>} : vector<2x64xbf16>, vector<64x1024xbf16>, vector<2x1024xf32> -> vector<2x1024xf32>
    %34 = arith.addf %32, %33 : vector<2x1024xf32>
    %c0_31 = arith.constant 0 : index
    %c0_32 = arith.constant 0 : index
    %35 = vector.load %arg11[%c0_31, %c0_32] : memref<2x1024xf32, #tpu.memory_space<vmem>>, vector<2x1024xf32>
    tpu.vector_store %arg11[%c0_31, %c0_32], %34 {strides = array<i32>} : memref<2x1024xf32, #tpu.memory_space<vmem>>, vector<2x1024xf32>,
    %c4 = arith.constant 4 : index
    %c0_33 = arith.constant 0 : index
    %36 = vector.load %arg12[%c4, %c0_33] : memref<16x64xf32, #tpu.memory_space<vmem>>, vector<2x64xf32>
    %37 = arith.truncf %36 : vector<2x64xf32> to vector<2x64xbf16>
    %c128 = arith.constant 128 : index
    %c0_34 = arith.constant 0 : index
    %38 = vector.load %arg6[%c128, %c0_34] : memref<512x1024xbf16, #tpu.memory_space<vmem>>, vector<64x1024xbf16>
    %c0_35 = arith.constant 0 : index
    %c0_36 = arith.constant 0 : index
    %39 = vector.load %arg11[%c0_35, %c0_36] : memref<2x1024xf32, #tpu.memory_space<vmem>>, vector<2x1024xf32>
    %cst_37 = arith.constant dense<0.000000e+00> : vector<2x1024xf32>
    %40 = tpu.matmul %37, %38, %cst_37 {dimension_numbers = #tpu.dot_dimension_numbers<[1], [0], [0], [1], [0, 0, 1, 1], [], []>} : vector<2x64xbf16>, vector<64x1024xbf16>, vector<2x1024xf32> -> vector<2x1024xf32>
    %41 = arith.addf %39, %40 : vector<2x1024xf32>
    %c0_38 = arith.constant 0 : index
    %c0_39 = arith.constant 0 : index
    %42 = vector.load %arg11[%c0_38, %c0_39] : memref<2x1024xf32, #tpu.memory_space<vmem>>, vector<2x1024xf32>
    tpu.vector_store %arg11[%c0_38, %c0_39], %41 {strides = array<i32>} : memref<2x1024xf32, #tpu.memory_space<vmem>>, vector<2x1024xf32>,
    %c6 = arith.constant 6 : index
    %c0_40 = arith.constant 0 : index
    %43 = vector.load %arg12[%c6, %c0_40] : memref<16x64xf32, #tpu.memory_space<vmem>>, vector<2x64xf32>
    %44 = arith.truncf %43 : vector<2x64xf32> to vector<2x64xbf16>
    %c192 = arith.constant 192 : index
    %c0_41 = arith.constant 0 : index
    %45 = vector.load %arg6[%c192, %c0_41] : memref<512x1024xbf16, #tpu.memory_space<vmem>>, vector<64x1024xbf16>
    %c0_42 = arith.constant 0 : index
    %c0_43 = arith.constant 0 : index
    %46 = vector.load %arg11[%c0_42, %c0_43] : memref<2x1024xf32, #tpu.memory_space<vmem>>, vector<2x1024xf32>
    %cst_44 = arith.constant dense<0.000000e+00> : vector<2x1024xf32>
    %47 = tpu.matmul %44, %45, %cst_44 {dimension_numbers = #tpu.dot_dimension_numbers<[1], [0], [0], [1], [0, 0, 1, 1], [], []>} : vector<2x64xbf16>, vector<64x1024xbf16>, vector<2x1024xf32> -> vector<2x1024xf32>
    %48 = arith.addf %46, %47 : vector<2x1024xf32>
    %c0_45 = arith.constant 0 : index
    %c0_46 = arith.constant 0 : index
    %49 = vector.load %arg11[%c0_45, %c0_46] : memref<2x1024xf32, #tpu.memory_space<vmem>>, vector<2x1024xf32>
    tpu.vector_store %arg11[%c0_45, %c0_46], %48 {strides = array<i32>} : memref<2x1024xf32, #tpu.memory_space<vmem>>, vector<2x1024xf32>,
    %c8 = arith.constant 8 : index
    %c0_47 = arith.constant 0 : index
    %50 = vector.load %arg12[%c8, %c0_47] : memref<16x64xf32, #tpu.memory_space<vmem>>, vector<2x64xf32>
    %51 = arith.truncf %50 : vector<2x64xf32> to vector<2x64xbf16>
    %c256 = arith.constant 256 : index
    %c0_48 = arith.constant 0 : index
    %52 = vector.load %arg6[%c256, %c0_48] : memref<512x1024xbf16, #tpu.memory_space<vmem>>, vector<64x1024xbf16>
    %c0_49 = arith.constant 0 : index
    %c0_50 = arith.constant 0 : index
    %53 = vector.load %arg11[%c0_49, %c0_50] : memref<2x1024xf32, #tpu.memory_space<vmem>>, vector<2x1024xf32>
    %cst_51 = arith.constant dense<0.000000e+00> : vector<2x1024xf32>
    %54 = tpu.matmul %51, %52, %cst_51 {dimension_numbers = #tpu.dot_dimension_numbers<[1], [0], [0], [1], [0, 0, 1, 1], [], []>} : vector<2x64xbf16>, vector<64x1024xbf16>, vector<2x1024xf32> -> vector<2x1024xf32>
    %55 = arith.addf %53, %54 : vector<2x1024xf32>
    %c0_52 = arith.constant 0 : index
    %c0_53 = arith.constant 0 : index
    %56 = vector.load %arg11[%c0_52, %c0_53] : memref<2x1024xf32, #tpu.memory_space<vmem>>, vector<2x1024xf32>
    tpu.vector_store %arg11[%c0_52, %c0_53], %55 {strides = array<i32>} : memref<2x1024xf32, #tpu.memory_space<vmem>>, vector<2x1024xf32>,
    %c10 = arith.constant 10 : index
    %c0_54 = arith.constant 0 : index
    %57 = vector.load %arg12[%c10, %c0_54] : memref<16x64xf32, #tpu.memory_space<vmem>>, vector<2x64xf32>
    %58 = arith.truncf %57 : vector<2x64xf32> to vector<2x64xbf16>
    %c320 = arith.constant 320 : index
    %c0_55 = arith.constant 0 : index
    %59 = vector.load %arg6[%c320, %c0_55] : memref<512x1024xbf16, #tpu.memory_space<vmem>>, vector<64x1024xbf16>
    %c0_56 = arith.constant 0 : index
    %c0_57 = arith.constant 0 : index
    %60 = vector.load %arg11[%c0_56, %c0_57] : memref<2x1024xf32, #tpu.memory_space<vmem>>, vector<2x1024xf32>
    %cst_58 = arith.constant dense<0.000000e+00> : vector<2x1024xf32>
    %61 = tpu.matmul %58, %59, %cst_58 {dimension_numbers = #tpu.dot_dimension_numbers<[1], [0], [0], [1], [0, 0, 1, 1], [], []>} : vector<2x64xbf16>, vector<64x1024xbf16>, vector<2x1024xf32> -> vector<2x1024xf32>
    %62 = arith.addf %60, %61 : vector<2x1024xf32>
    %c0_59 = arith.constant 0 : index
    %c0_60 = arith.constant 0 : index
    %63 = vector.load %arg11[%c0_59, %c0_60] : memref<2x1024xf32, #tpu.memory_space<vmem>>, vector<2x1024xf32>
    tpu.vector_store %arg11[%c0_59, %c0_60], %62 {strides = array<i32>} : memref<2x1024xf32, #tpu.memory_space<vmem>>, vector<2x1024xf32>,
    %c12 = arith.constant 12 : index
    %c0_61 = arith.constant 0 : index
    %64 = vector.load %arg12[%c12, %c0_61] : memref<16x64xf32, #tpu.memory_space<vmem>>, vector<2x64xf32>
    %65 = arith.truncf %64 : vector<2x64xf32> to vector<2x64xbf16>
    %c384 = arith.constant 384 : index
    %c0_62 = arith.constant 0 : index
    %66 = vector.load %arg6[%c384, %c0_62] : memref<512x1024xbf16, #tpu.memory_space<vmem>>, vector<64x1024xbf16>
    %c0_63 = arith.constant 0 : index
    %c0_64 = arith.constant 0 : index
    %67 = vector.load %arg11[%c0_63, %c0_64] : memref<2x1024xf32, #tpu.memory_space<vmem>>, vector<2x1024xf32>
    %cst_65 = arith.constant dense<0.000000e+00> : vector<2x1024xf32>
    %68 = tpu.matmul %65, %66, %cst_65 {dimension_numbers = #tpu.dot_dimension_numbers<[1], [0], [0], [1], [0, 0, 1, 1], [], []>} : vector<2x64xbf16>, vector<64x1024xbf16>, vector<2x1024xf32> -> vector<2x1024xf32>
    %69 = arith.addf %67, %68 : vector<2x1024xf32>
    %c0_66 = arith.constant 0 : index
    %c0_67 = arith.constant 0 : index
    %70 = vector.load %arg11[%c0_66, %c0_67] : memref<2x1024xf32, #tpu.memory_space<vmem>>, vector<2x1024xf32>
    tpu.vector_store %arg11[%c0_66, %c0_67], %69 {strides = array<i32>} : memref<2x1024xf32, #tpu.memory_space<vmem>>, vector<2x1024xf32>,
    %c14 = arith.constant 14 : index
    %c0_68 = arith.constant 0 : index
    %71 = vector.load %arg12[%c14, %c0_68] : memref<16x64xf32, #tpu.memory_space<vmem>>, vector<2x64xf32>
    %72 = arith.truncf %71 : vector<2x64xf32> to vector<2x64xbf16>
    %c448 = arith.constant 448 : index
    %c0_69 = arith.constant 0 : index
    %73 = vector.load %arg6[%c448, %c0_69] : memref<512x1024xbf16, #tpu.memory_space<vmem>>, vector<64x1024xbf16>
    %c0_70 = arith.constant 0 : index
    %c0_71 = arith.constant 0 : index
    %74 = vector.load %arg11[%c0_70, %c0_71] : memref<2x1024xf32, #tpu.memory_space<vmem>>, vector<2x1024xf32>
    %cst_72 = arith.constant dense<0.000000e+00> : vector<2x1024xf32>
    %75 = tpu.matmul %72, %73, %cst_72 {dimension_numbers = #tpu.dot_dimension_numbers<[1], [0], [0], [1], [0, 0, 1, 1], [], []>} : vector<2x64xbf16>, vector<64x1024xbf16>, vector<2x1024xf32> -> vector<2x1024xf32>
    %76 = arith.addf %74, %75 : vector<2x1024xf32>
    %c0_73 = arith.constant 0 : index
    %c0_74 = arith.constant 0 : index
    %77 = vector.load %arg11[%c0_73, %c0_74] : memref<2x1024xf32, #tpu.memory_space<vmem>>, vector<2x1024xf32>
    tpu.vector_store %arg11[%c0_73, %c0_74], %76 {strides = array<i32>} : memref<2x1024xf32, #tpu.memory_space<vmem>>, vector<2x1024xf32>,
    %c6_i32 = arith.constant 6 : i32
    %78 = arith.cmpi eq, %arg0, %c6_i32 : i32
    %79 = arith.extui %78 : i1 to i32
    %c0_i32_75 = arith.constant 0 : i32
    %80 = arith.cmpi ne, %79, %c0_i32_75 : i32
    scf.if %80 {
      %c0_76 = arith.constant 0 : index
      %c0_77 = arith.constant 0 : index
      %81 = vector.load %arg11[%c0_76, %c0_77] : memref<2x1024xf32, #tpu.memory_space<vmem>>, vector<2x1024xf32>
      %c0_78 = arith.constant 0 : index
      %c0_79 = arith.constant 0 : index
      %82 = vector.load %arg7[%c0_78, %c0_79] : memref<1x1024xf32, #tpu.memory_space<vmem>>, vector<1x1024xf32>
      %83 = vector.broadcast %82 : vector<1x1024xf32> to vector<2x1024xf32>
      %84 = arith.addf %81, %83 : vector<2x1024xf32>
      %cst_80 = arith.constant 0.000000e+00 : f32
      %85 = vector.broadcast %cst_80 : f32 to vector<2x1024xf32>
      %86 = arith.maximumf %84, %85 : vector<2x1024xf32>
      %c0_81 = arith.constant 0 : index
      %c0_82 = arith.constant 0 : index
      %87 = vector.load %arg8[%c0_81, %c0_82] : memref<1024x128xf32, #tpu.memory_space<vmem>>, vector<1024x128xf32>
      %cst_83 = arith.constant dense<0.000000e+00> : vector<2x128xf32>
      %88 = tpu.matmul %86, %87, %cst_83 {dimension_numbers = #tpu.dot_dimension_numbers<[1], [0], [0], [1], [0, 0, 1, 1], [], []>} : vector<2x1024xf32>, vector<1024x128xf32>, vector<2x128xf32> -> vector<2x128xf32>
      %c0_84 = arith.constant 0 : index
      %c0_85 = arith.constant 0 : index
      %89 = vector.load %arg9[%c0_84, %c0_85] : memref<1x128xf32, #tpu.memory_space<vmem>>, vector<1x128xf32>
      %90 = vector.broadcast %89 : vector<1x128xf32> to vector<2x128xf32>
      %91 = arith.addf %88, %90 : vector<2x128xf32>
      %c0_86 = arith.constant 0 : index
      %c0_87 = arith.constant 0 : index
      %92 = vector.load %arg10[%c0_86, %c0_87] : memref<2x128xf32, #tpu.memory_space<vmem>>, vector<2x128xf32>
      tpu.vector_store %arg10[%c0_86, %c0_87], %91 {strides = array<i32>} : memref<2x128xf32, #tpu.memory_space<vmem>>, vector<2x128xf32>,
    } else {
    }
    return
  }
  func.func @transform_0(%arg0: i32) -> (i32, i32) {
    %c0_i32 = arith.constant 0 : i32
    %c0_i32_0 = arith.constant 0 : i32
    return %arg0, %c0_i32 : i32, i32
  }
  func.func @transform_1(%arg0: i32) -> (i32, i32) {
    %c0_i32 = arith.constant 0 : i32
    %c0_i32_0 = arith.constant 0 : i32
    return %arg0, %c0_i32 : i32, i32
  }
  func.func @transform_2(%arg0: i32) -> (i32, i32) {
    %c0_i32 = arith.constant 0 : i32
    %c0_i32_0 = arith.constant 0 : i32
    %c0_i32_1 = arith.constant 0 : i32
    return %c0_i32, %c0_i32_0 : i32, i32
  }
  func.func @transform_3(%arg0: i32) -> (i32, i32) {
    %c0_i32 = arith.constant 0 : i32
    %c0_i32_0 = arith.constant 0 : i32
    %c0_i32_1 = arith.constant 0 : i32
    return %c0_i32, %c0_i32_0 : i32, i32
  }
  func.func @transform_4(%arg0: i32) -> (i32, i32) {
    %c0_i32 = arith.constant 0 : i32
    %c0_i32_0 = arith.constant 0 : i32
    %c0_i32_1 = arith.constant 0 : i32
    return %c0_i32, %c0_i32_0 : i32, i32
  }
  func.func @transform_5(%arg0: i32) -> (i32, i32) {
    %c0_i32 = arith.constant 0 : i32
    %c0_i32_0 = arith.constant 0 : i32
    return %arg0, %c0_i32 : i32, i32
  }
  func.func @transform_6(%arg0: i32) -> (i32, i32) {
    %c0_i32 = arith.constant 0 : i32
    %c0_i32_0 = arith.constant 0 : i32
    %c0_i32_1 = arith.constant 0 : i32
    return %c0_i32, %c0_i32_0 : i32, i32
  }
  func.func @transform_7(%arg0: i32) -> (i32, i32) {
    %c0_i32 = arith.constant 0 : i32
    %c0_i32_0 = arith.constant 0 : i32
    %c0_i32_1 = arith.constant 0 : i32
    return %c0_i32, %c0_i32_0 : i32, i32
  }
  func.func @transform_8(%arg0: i32) -> (i32, i32) {
    %c0_i32 = arith.constant 0 : i32
    %c0_i32_0 = arith.constant 0 : i32
    %c0_i32_1 = arith.constant 0 : i32
    return %c0_i32, %c0_i32_0 : i32, i32
  }
  func.func @transform_9(%arg0: i32) -> (i32, i32) {
    %c0_i32 = arith.constant 0 : i32
    %c0_i32_0 = arith.constant 0 : i32
    %c0_i32_1 = arith.constant 0 : i32
    return %c0_i32, %c0_i32_0 : i32, i32
  }
}

</mosaic_0001>

<llo_original>
// kernel: pallas_forward.1
$region0: #{pallas_forward.1}
  #allocation0 [shape = 'u32[]', space=smem, size = 0x4, offset = 0x4, fixed_abs, tag = 'smem constant byte address 0x4 - core index']
  #allocation1 [shape = 'u32[144,128]{1,0:T(1,128)}', space=vmem, size = 0x12000, scoped, tag = 'internal scratch']
  #allocation2 [shape = 'f32[2,1024]{1,0:T(2,128)}', space=vmem, size = 0x2000, scoped, tag = 'scratch operand']
  #allocation3 [shape = 'f32[16,64]{1,0:T(8,128)}', space=vmem, size = 0x2000, scoped, tag = 'scratch operand']
  %s0 = inlined_call_operand.vmem [shape: f32[112,256], index: 0, kind: input, shape index: {}]
  %s1 = inlined_call_operand.vmem [shape: f32[112,512], index: 1, kind: input, shape index: {}]
  %s2 = inlined_call_operand.vmem [shape: f32[256,512], index: 2, kind: input, shape index: {}]
  %s3 = inlined_call_operand.vmem [shape: f32[512,64], index: 3, kind: input, shape index: {}]
  %s4 = inlined_call_operand.vmem [shape: f32[1,64], index: 4, kind: input, shape index: {}]
  %s5 = inlined_call_operand.vmem [shape: bf16[3584,1024], index: 5, kind: input, shape index: {}]
  %s6 = inlined_call_operand.vmem [shape: f32[1,1024], index: 6, kind: input, shape index: {}]
  %s7 = inlined_call_operand.vmem [shape: f32[1024,128], index: 7, kind: input, shape index: {}]
  %s8 = inlined_call_operand.vmem [shape: f32[1,128], index: 8, kind: input, shape index: {}]
  %s9 = inlined_call_operand.hbm [shape: f32[2,128], index: 9, kind: output, shape index: {}]
  %s10 = sld [smem:[#allocation0]]
  $region77: #{pallas_forward.1} parent=0
    _
  %s12 = ssub.s32 1, %s10
  %s13 = scalar_select 0, %s12, %s10
  $region1: #{pallas_forward.1} parent=0
    #allocation4 [shape = 'u8[1024]{0}', space=vmem, size = 0x400, scoped, tag = 'output window, operand 0, single buffered']
    #allocation5 [shape = 's32[2]{0}', space=sflag, size = 0x8, scoped, tag = 'scoped memory for pallas_forward.1']
    %14 = vsyncpa [#allocation5], 0
    loop: start=0, step=1, limit=9
    $region2: #{pallas_forward.1} parent=1 // loop_pre_header
      _
    $region3: #{pallas_forward.1} parent=1 // loop_header
      %s16 = sphi 0, %s20
      %p17 = scmp.ge.s32.totalorder %s16, 9
      %s26 = sphi 0, %s28
      %s29 = sphi 0, %s26
      %s30 = sphi 0, %s29
      %s46 = sphi 0, %s30
      %s52 = sphi 0, %s54
      %s55 = sphi 0, %s52
      %s56 = sphi 0, %s55
      %s72 = sphi 0, %s56
      %s76 = sphi 0, %s76
      %s78 = sphi 0, %s76
      %s79 = sphi 0, %s78
      %s93 = sphi 0, %s79
      %s97 = sphi 0, %s97
      %s99 = sphi 0, %s97
      %s100 = sphi 0, %s99
      %s114 = sphi 0, %s100
      %s118 = sphi 0, %s118
      %s120 = sphi 0, %s118
      %s121 = sphi 0, %s120
      %s135 = sphi 0, %s121
      %s141 = sphi 0, %s143
      %s144 = sphi 0, %s141
      %s145 = sphi 0, %s144
      %s161 = sphi 0, %s145
      %s165 = sphi 0, %s165
      %s167 = sphi 0, %s165
      %s168 = sphi 0, %s167
      %s182 = sphi 0, %s168
      %s186 = sphi 0, %s186
      %s188 = sphi 0, %s186
      %s189 = sphi 0, %s188
      %s203 = sphi 0, %s189
      %s207 = sphi 0, %s207
      %s209 = sphi 0, %s207
      %s210 = sphi 0, %s209
      %s224 = sphi 0, %s210
      %s228 = sphi 0, %s228
      %s230 = sphi 0, %s228
      %s231 = sphi 0, %s230
      %s245 = sphi 0, %s231
    $region4: #{pallas_forward.1} parent=1 // loop_header_branch
      %19 = sbr.rel (%p17) target = $region8
    $region5: #{pallas_forward.1} parent=1 // loop_body
      %s21 = ssub.s32 %s16, 1
      %s22 = ssub.s32 %s16, 2
      %s23 = sadd.s32 %s16, 1
      %s24 = ssub.s32 %s16, %s23
      %p25 = scmp.eq.s32.totalorder %s24, 0
      %s27 = sadd.s32 %s26, 1
      %s28 = scalar_select %p25, %s26, %s27
      %p31 = pneg %p25
      %p32 = scmp.eq.s32.totalorder %s16, 6
      %p33 = por %p31, %p32
      %p34 = scmp.ne.s32.totalorder %s26, %s29
      %p35 = scmp.eq.s32.totalorder %s16, 0
      %p36 = por %p34, %p35
      %p37 = scmp.ne.s32.totalorder %s26, %s29
      %p38 = scmp.eq.s32.totalorder %s21, 6
      %p39 = por %p37, %p38
      %p40 = scmp.ne.s32.totalorder %s29, %s30
      %p41 = scmp.eq.s32.totalorder %s21, 0
      %p42 = por %p40, %p41
      %p43 = scmp.ne.s32.totalorder %s29, %s30
      %p44 = scmp.eq.s32.totalorder %s22, 6
      %p45 = por %p43, %p44
      %p47 = scmp.ne.s32.totalorder %s30, %s46
      %p48 = scmp.eq.s32.totalorder %s22, 0
      %p49 = por %p47, %p48
      %s50 = ssub.s32 %s16, %s23
      %p51 = scmp.eq.s32.totalorder %s50, 0
      %s53 = sadd.s32 %s52, 1
      %s54 = scalar_select %p51, %s52, %s53
      %p57 = pneg %p51
      %p58 = scmp.eq.s32.totalorder %s16, 6
      %p59 = por %p57, %p58
      %p60 = scmp.ne.s32.totalorder %s52, %s55
      %p61 = scmp.eq.s32.totalorder %s16, 0
      %p62 = por %p60, %p61
      %p63 = scmp.ne.s32.totalorder %s52, %s55
      %p64 = scmp.eq.s32.totalorder %s21, 6
      %p65 = por %p63, %p64
      %p66 = scmp.ne.s32.totalorder %s55, %s56
      %p67 = scmp.eq.s32.totalorder %s21, 0
      %p68 = por %p66, %p67
      %p69 = scmp.ne.s32.totalorder %s55, %s56
      %p70 = scmp.eq.s32.totalorder %s22, 6
      %p71 = por %p69, %p70
      %p73 = scmp.ne.s32.totalorder %s56, %s72
      %p74 = scmp.eq.s32.totalorder %s22, 0
      %p75 = por %p73, %p74
      %s77 = sadd.s32 %s76, 1
      %p80 = scmp.eq.s32.totalorder %s16, 6
      %p81 = scmp.ne.s32.totalorder %s76, %s78
      %p82 = scmp.eq.s32.totalorder %s16, 0
      %p83 = por %p81, %p82
      %p84 = scmp.ne.s32.totalorder %s76, %s78
      %p85 = scmp.eq.s32.totalorder %s21, 6
      %p86 = por %p84, %p85
      %p87 = scmp.ne.s32.totalorder %s78, %s79
      %p88 = scmp.eq.s32.totalorder %s21, 0
      %p89 = por %p87, %p88
      %p90 = scmp.ne.s32.totalorder %s78, %s79
      %p91 = scmp.eq.s32.totalorder %s22, 6
      %p92 = por %p90, %p91
      %p94 = scmp.ne.s32.totalorder %s79, %s93
      %p95 = scmp.eq.s32.totalorder %s22, 0
      %p96 = por %p94, %p95
      %s98 = sadd.s32 %s97, 1
      %p101 = scmp.eq.s32.totalorder %s16, 6
      %p102 = scmp.ne.s32.totalorder %s97, %s99
      %p103 = scmp.eq.s32.totalorder %s16, 0
      %p104 = por %p102, %p103
      %p105 = scmp.ne.s32.totalorder %s97, %s99
      %p106 = scmp.eq.s32.totalorder %s21, 6
      %p107 = por %p105, %p106
      %p108 = scmp.ne.s32.totalorder %s99, %s100
      %p109 = scmp.eq.s32.totalorder %s21, 0
      %p110 = por %p108, %p109
      %p111 = scmp.ne.s32.totalorder %s99, %s100
      %p112 = scmp.eq.s32.totalorder %s22, 6
      %p113 = por %p111, %p112
      %p115 = scmp.ne.s32.totalorder %s100, %s114
      %p116 = scmp.eq.s32.totalorder %s22, 0
      %p117 = por %p115, %p116
      %s119 = sadd.s32 %s118, 1
      %p122 = scmp.eq.s32.totalorder %s16, 6
      %p123 = scmp.ne.s32.totalorder %s118, %s120
      %p124 = scmp.eq.s32.totalorder %s16, 0
      %p125 = por %p123, %p124
      %p126 = scmp.ne.s32.totalorder %s118, %s120
      %p127 = scmp.eq.s32.totalorder %s21, 6
      %p128 = por %p126, %p127
      %p129 = scmp.ne.s32.totalorder %s120, %s121
      %p130 = scmp.eq.s32.totalorder %s21, 0
      %p131 = por %p129, %p130
      %p132 = scmp.ne.s32.totalorder %s120, %s121
      %p133 = scmp.eq.s32.totalorder %s22, 6
      %p134 = por %p132, %p133
      %p136 = scmp.ne.s32.totalorder %s121, %s135
      %p137 = scmp.eq.s32.totalorder %s22, 0
      %p138 = por %p136, %p137
      %s139 = ssub.s32 %s16, %s23
      %p140 = scmp.eq.s32.totalorder %s139, 0
      %s142 = sadd.s32 %s141, 1
      %s143 = scalar_select %p140, %s141, %s142
      %p146 = pneg %p140
      %p147 = scmp.eq.s32.totalorder %s16, 6
      %p148 = por %p146, %p147
      %p149 = scmp.ne.s32.totalorder %s141, %s144
      %p150 = scmp.eq.s32.totalorder %s16, 0
      %p151 = por %p149, %p150
      %p152 = scmp.ne.s32.totalorder %s141, %s144
      %p153 = scmp.eq.s32.totalorder %s21, 6
      %p154 = por %p152, %p153
      %p155 = scmp.ne.s32.totalorder %s144, %s145
      %p156 = scmp.eq.s32.totalorder %s21, 0
      %p157 = por %p155, %p156
      %p158 = scmp.ne.s32.totalorder %s144, %s145
      %p159 = scmp.eq.s32.totalorder %s22, 6
      %p160 = por %p158, %p159
      %p162 = scmp.ne.s32.totalorder %s145, %s161
      %p163 = scmp.eq.s32.totalorder %s22, 0
      %p164 = por %p162, %p163
      %s166 = sadd.s32 %s165, 1
      %p169 = scmp.eq.s32.totalorder %s16, 6
      %p170 = scmp.ne.s32.totalorder %s165, %s167
      %p171 = scmp.eq.s32.totalorder %s16, 0
      %p172 = por %p170, %p171
      %p173 = scmp.ne.s32.totalorder %s165, %s167
      %p174 = scmp.eq.s32.totalorder %s21, 6
      %p175 = por %p173, %p174
      %p176 = scmp.ne.s32.totalorder %s167, %s168
      %p177 = scmp.eq.s32.totalorder %s21, 0
      %p178 = por %p176, %p177
      %p179 = scmp.ne.s32.totalorder %s167, %s168
      %p180 = scmp.eq.s32.totalorder %s22, 6
      %p181 = por %p179, %p180
      %p183 = scmp.ne.s32.totalorder %s168, %s182
      %p184 = scmp.eq.s32.totalorder %s22, 0
      %p185 = por %p183, %p184
      %s187 = sadd.s32 %s186, 1
      %p190 = scmp.eq.s32.totalorder %s16, 6
      %p191 = scmp.ne.s32.totalorder %s186, %s188
      %p192 = scmp.eq.s32.totalorder %s16, 0
      %p193 = por %p191, %p192
      %p194 = scmp.ne.s32.totalorder %s186, %s188
      %p195 = scmp.eq.s32.totalorder %s21, 6
      %p196 = por %p194, %p195
      %p197 = scmp.ne.s32.totalorder %s188, %s189
      %p198 = scmp.eq.s32.totalorder %s21, 0
      %p199 = por %p197, %p198
      %p200 = scmp.ne.s32.totalorder %s188, %s189
      %p201 = scmp.eq.s32.totalorder %s22, 6
      %p202 = por %p200, %p201
      %p204 = scmp.ne.s32.totalorder %s189, %s203
      %p205 = scmp.eq.s32.totalorder %s22, 0
      %p206 = por %p204, %p205
      %s208 = sadd.s32 %s207, 1
      %p211 = scmp.eq.s32.totalorder %s16, 6
      %p212 = scmp.ne.s32.totalorder %s207, %s209
      %p213 = scmp.eq.s32.totalorder %s16, 0
      %p214 = por %p212, %p213
      %p215 = scmp.ne.s32.totalorder %s207, %s209
      %p216 = scmp.eq.s32.totalorder %s21, 6
      %p217 = por %p215, %p216
      %p218 = scmp.ne.s32.totalorder %s209, %s210
      %p219 = scmp.eq.s32.totalorder %s21, 0
      %p220 = por %p218, %p219
      %p221 = scmp.ne.s32.totalorder %s209, %s210
      %p222 = scmp.eq.s32.totalorder %s22, 6
      %p223 = por %p221, %p222
      %p225 = scmp.ne.s32.totalorder %s210, %s224
      %p226 = scmp.eq.s32.totalorder %s22, 0
      %p227 = por %p225, %p226
      %s229 = sadd.s32 %s228, 1
      %p232 = scmp.eq.s32.totalorder %s16, 6
      %p233 = scmp.ne.s32.totalorder %s228, %s230
      %p234 = scmp.eq.s32.totalorder %s16, 0
      %p235 = por %p233, %p234
      %p236 = scmp.ne.s32.totalorder %s228, %s230
      %p237 = scmp.eq.s32.totalorder %s21, 6
      %p238 = por %p236, %p237
      %p239 = scmp.ne.s32.totalorder %s230, %s231
      %p240 = scmp.eq.s32.totalorder %s21, 0
      %p241 = por %p239, %p240
      %p242 = scmp.ne.s32.totalorder %s230, %s231
      %p243 = scmp.eq.s32.totalorder %s22, 6
      %p244 = por %p242, %p243
      %p246 = scmp.ne.s32.totalorder %s231, %s245
      %p247 = scmp.eq.s32.totalorder %s22, 0
      %p248 = por %p246, %p247
      %p249 = scmp.le.s32.totalorder 1, %s16
      %p250 = scmp.lt.s32.totalorder %s16, 8
      %p251 = pnand %p249, %p250
      %p252 = pneg %p251
      // Predicated region
      $region9: #{pallas_forward.1} parent=5 // pred_check
        _
      $region10: #{pallas_forward.1} parent=5 // pred_check_branch
        %254 = sbr.rel (%p251) target = $region12
      $region11: #{pallas_forward.1} parent=5 // pred_region
        %s255 = ssub.s32 %s16, 1
        // Predicated region
        $region13: #{pallas_forward.1} parent=11 // pred_check
          %p256 = pneg %p89
        $region14: #{pallas_forward.1} parent=11 // pred_check_branch
          %258 = sbr.rel (%p256) target = $region16
        $region15: #{pallas_forward.1} parent=11 // pred_region
          _
        $region16: #{pallas_forward.1} parent=11 // pred_fallthru
          _
        // Predicated region
        $region17: #{pallas_forward.1} parent=11 // pred_check
          %p259 = pneg %p110
        $region18: #{pallas_forward.1} parent=11 // pred_check_branch
          %261 = sbr.rel (%p259) target = $region20
        $region19: #{pallas_forward.1} parent=11 // pred_region
          _
        $region20: #{pallas_forward.1} parent=11 // pred_fallthru
          _
        // Predicated region
        $region21: #{pallas_forward.1} parent=11 // pred_check
          %p262 = pneg %p131
        $region22: #{pallas_forward.1} parent=11 // pred_check_branch
          %264 = sbr.rel (%p262) target = $region24
        $region23: #{pallas_forward.1} parent=11 // pred_region
          _
        $region24: #{pallas_forward.1} parent=11 // pred_fallthru
          _
        // Predicated region
        $region25: #{pallas_forward.1} parent=11 // pred_check
          %p265 = pneg %p178
        $region26: #{pallas_forward.1} parent=11 // pred_check_branch
          %267 = sbr.rel (%p265) target = $region28
        $region27: #{pallas_forward.1} parent=11 // pred_region
          _
        $region28: #{pallas_forward.1} parent=11 // pred_fallthru
          _
        // Predicated region
        $region29: #{pallas_forward.1} parent=11 // pred_check
          %p268 = pneg %p199
        $region30: #{pallas_forward.1} parent=11 // pred_check_branch
          %270 = sbr.rel (%p268) target = $region32
        $region31: #{pallas_forward.1} parent=11 // pred_region
          _
        $region32: #{pallas_forward.1} parent=11 // pred_fallthru
          _
        // Predicated region
        $region33: #{pallas_forward.1} parent=11 // pred_check
          %p271 = pneg %p220
        $region34: #{pallas_forward.1} parent=11 // pred_check_branch
          %273 = sbr.rel (%p271) target = $region36
        $region35: #{pallas_forward.1} parent=11 // pred_region
          _
        $region36: #{pallas_forward.1} parent=11 // pred_fallthru
          _
      $region12: #{pallas_forward.1} parent=5 // pred_fallthru
        _
      %p274 = scmp.lt.s32.totalorder %s16, 7
      // Predicated region
      $region37: #{pallas_forward.1} parent=5 // pred_check
        %p275 = pneg %p274
      $region38: #{pallas_forward.1} parent=5 // pred_check_branch
        %277 = sbr.rel (%p275) target = $region40
      $region39: #{pallas_forward.1} parent=5 // pred_region
        // Predicated region
        $region41: #{pallas_forward.1} parent=39 // pred_check
          %p278 = pneg %p36
        $region42: #{pallas_forward.1} parent=39 // pred_check_branch
          %280 = sbr.rel (%p278) target = $region44
        $region43: #{pallas_forward.1} parent=39 // pred_region
          %s281 = smul.u32 2, %s16
          %p282 = scmp.lt.s32.totalorder %s281, 13
          %s283 = scalar_select %p282, %s281, 13
          %s284 = smul.addr %s283, 2
          %s285 = smul.addr %s284, 8
          %s286 = scalar_lea.vmem %s0, %s285
          %s287 = smul.u32 2, %s16
        $region44: #{pallas_forward.1} parent=39 // pred_fallthru
          _
        // Predicated region
        $region45: #{pallas_forward.1} parent=39 // pred_check
          %p288 = pneg %p62
        $region46: #{pallas_forward.1} parent=39 // pred_check_branch
          %290 = sbr.rel (%p288) target = $region48
        $region47: #{pallas_forward.1} parent=39 // pred_region
          %s291 = smul.u32 2, %s16
          %p292 = scmp.lt.s32.totalorder %s291, 13
          %s293 = scalar_select %p292, %s291, 13
          %s294 = smul.addr %s293, 4
          %s295 = smul.addr %s294, 8
          %s296 = scalar_lea.vmem %s1, %s295
          %s297 = smul.u32 2, %s16
        $region48: #{pallas_forward.1} parent=39 // pred_fallthru
          _
        // Predicated region
        $region49: #{pallas_forward.1} parent=39 // pred_check
          %p298 = pneg %p151
        $region50: #{pallas_forward.1} parent=39 // pred_check_branch
          %300 = sbr.rel (%p298) target = $region52
        $region51: #{pallas_forward.1} parent=39 // pred_region
          %s301 = smul.u32 64, %s16
          %p302 = scmp.lt.s32.totalorder %s301, 447
          %s303 = scalar_select %p302, %s301, 447
          %s304 = smul.addr %s303, 8
          %s305 = smul.addr %s304, 4
          %s306 = scalar_lea.vmem %s5, %s305
          %s307 = smul.u32 64, %s16
        $region52: #{pallas_forward.1} parent=39 // pred_fallthru
          _
      $region40: #{pallas_forward.1} parent=5 // pred_fallthru
        _
      %p308 = scmp.le.s32.totalorder 1, %s16
      %p309 = scmp.lt.s32.totalorder %s16, 8
      %p310 = pnand %p308, %p309
      %p311 = pneg %p310
      // Predicated region
      $region53: #{pallas_forward.1} parent=5 // pred_check
        _
      $region54: #{pallas_forward.1} parent=5 // pred_check_branch
        %313 = sbr.rel (%p310) target = $region56
      $region55: #{pallas_forward.1} parent=5 // pred_region
        %s314 = ssub.s32 %s16, 1
        %s315 = smul.u32 2, %s21
        %p316 = scmp.lt.s32.totalorder %s315, 13
        %s317 = scalar_select %p316, %s315, 13
        %s318 = smul.addr %s317, 2
        %s319 = smul.addr %s318, 8
        %s320 = scalar_lea.vmem %s0, %s319
        %p321 = pneg %p42
        %p322 = pneg %p39
        %s323 = smul.u32 2, %s21
        %p324 = scmp.lt.s32.totalorder %s323, 13
        %s325 = scalar_select %p324, %s323, 13
        %s326 = smul.addr %s325, 4
        %s327 = smul.addr %s326, 8
        %s328 = scalar_lea.vmem %s1, %s327
        %p329 = pneg %p68
        %p330 = pneg %p65
        %p331 = pneg %p89
        %p332 = pneg %p86
        %p333 = pneg %p110
        %p334 = pneg %p107
        %p335 = pneg %p131
        %p336 = pneg %p128
        %s337 = smul.u32 64, %s21
        %p338 = scmp.lt.s32.totalorder %s337, 447
        %s339 = scalar_select %p338, %s337, 447
        %s340 = smul.addr %s339, 8
        %s341 = smul.addr %s340, 4
        %s342 = scalar_lea.vmem %s5, %s341
        %p343 = pneg %p157
        %p344 = pneg %p154
        %p345 = pneg %p178
        %p346 = pneg %p175
        %p347 = pneg %p199
        %p348 = pneg %p196
        %p349 = pneg %p220
        %p350 = pneg %p217
        %p351 = pneg %p241
        %p352 = pneg %p238
        %s353 = smul.u32 2, %s21
        %p354 = scmp.lt.s32.totalorder %s353, 13
        %s355 = scalar_select %p354, %s353, 13
        %s356 = smul.addr %s355, 2
        %s357 = smul.addr %s356, 8
        %s358 = scalar_lea.vmem %s0, %s357
        %s359 = smul.u32 2, %s21
        %s360 = smul.u32 2, %s21
        %p361 = scmp.lt.s32.totalorder %s360, 13
        %s362 = scalar_select %p361, %s360, 13
        %s363 = smul.addr %s362, 4
        %s364 = smul.addr %s363, 8
        %s365 = scalar_lea.vmem %s1, %s364
        %s366 = smul.u32 2, %s21
        %s367 = smul.u32 64, %s21
        %p368 = scmp.lt.s32.totalorder %s367, 447
        %s369 = scalar_select %p368, %s367, 447
        %s370 = smul.addr %s369, 8
        %s371 = smul.addr %s370, 4
        %s372 = scalar_lea.vmem %s5, %s371
        %s373 = smul.u32 64, %s21
        %p375 = scmp.eq.s32.totalorder %s21, 0
        // Predicated region
        $region57: #{pallas_forward.1} parent=55 // pred_check
          %p376 = pneg %p375
        $region58: #{pallas_forward.1} parent=55 // pred_check_branch
          %378 = sbr.rel (%p376) target = $region60
        $region59: #{pallas_forward.1} parent=55 // pred_region
          %379 = vst [vmem:[#allocation2] sm:$0xff] 0.0
          %380 = vst [vmem:[#allocation2 + $0x8] sm:$0xff] 0.0
        $region60: #{pallas_forward.1} parent=55 // pred_fallthru
          _
        %v381 = vld [vmem:[%s358] sm:$0xff]
        %v382 = vld [vmem:[%s358 + $0x8] sm:$0xff]
        %v383 = vld [vmem:[%s358 + $0x10] sm:$0xff]
        %v384 = vld [vmem:[%s358 + $0x18] sm:$0xff]
        %v385 = vmax.f32 %v381, 0.0
        %v386 = vmax.f32 %v382, 0.0
        %v387 = vmax.f32 %v383, 0.0
        %v388 = vmax.f32 %v384, 0.0
        %v389 = vmin.f32 %v385, 1.0
        %v390 = vmin.f32 %v386, 1.0
        %v391 = vmin.f32 %v387, 1.0
        %v392 = vmin.f32 %v388, 1.0
        %v393 = vld [vmem:[%s2] sm:$0xff]
        %v394 = vld [vmem:[%s2 + $0x8] sm:$0xff]
        %v395 = vld [vmem:[%s2 + $0x10] sm:$0xff]
        %v396 = vld [vmem:[%s2 + $0x18] sm:$0xff]
        %v397 = vld [vmem:[%s2 + $0x20] sm:$0xff]
        %v398 = vld [vmem:[%s2 + $0x28] sm:$0xff]
        %v399 = vld [vmem:[%s2 + $0x30] sm:$0xff]
        %v400 = vld [vmem:[%s2 + $0x38] sm:$0xff]
        %v401 = vld [vmem:[%s2 + $0x40] sm:$0xff]
        %v402 = vld [vmem:[%s2 + $0x48] sm:$0xff]
        %v403 = vld [vmem:[%s2 + $0x50] sm:$0xff]
        %v404 = vld [vmem:[%s2 + $0x58] sm:$0xff]
        %v405 = vld [vmem:[%s2 + $0x60] sm:$0xff]
        %v406 = vld [vmem:[%s2 + $0x68] sm:$0xff]
        %v407 = vld [vmem:[%s2 + $0x70] sm:$0xff]
        %v408 = vld [vmem:[%s2 + $0x78] sm:$0xff]
        %v409 = vld [vmem:[%s2 + $0x80] sm:$0xff]
        %v410 = vld [vmem:[%s2 + $0x88] sm:$0xff]
        %v411 = vld [vmem:[%s2 + $0x90] sm:$0xff]
        %v412 = vld [vmem:[%s2 + $0x98] sm:$0xff]
        %v413 = vld [vmem:[%s2 + $0xa0] sm:$0xff]
        %v414 = vld [vmem:[%s2 + $0xa8] sm:$0xff]
        %v415 = vld [vmem:[%s2 + $0xb0] sm:$0xff]
        %v416 = vld [vmem:[%s2 + $0xb8] sm:$0xff]
        %v417 = vld [vmem:[%s2 + $0xc0] sm:$0xff]
        %v418 = vld [vmem:[%s2 + $0xc8] sm:$0xff]
        %v419 = vld [vmem:[%s2 + $0xd0] sm:$0xff]
        %v420 = vld [vmem:[%s2 + $0xd8] sm:$0xff]
        %v421 = vld [vmem:[%s2 + $0xe0] sm:$0xff]
        %v422 = vld [vmem:[%s2 + $0xe8] sm:$0xff]
        %v423 = vld [vmem:[%s2 + $0xf0] sm:$0xff]
        %v424 = vld [vmem:[%s2 + $0xf8] sm:$0xff]
        %v425 = vld [vmem:[%s2 + $0x100] sm:$0xff]
        %v426 = vld [vmem:[%s2 + $0x108] sm:$0xff]
        %v427 = vld [vmem:[%s2 + $0x110] sm:$0xff]
        %v428 = vld [vmem:[%s2 + $0x118] sm:$0xff]
        %v429 = vld [vmem:[%s2 + $0x120] sm:$0xff]
        %v430 = vld [vmem:[%s2 + $0x128] sm:$0xff]
        %v431 = vld [vmem:[%s2 + $0x130] sm:$0xff]
        %v432 = vld [vmem:[%s2 + $0x138] sm:$0xff]
        %v433 = vld [vmem:[%s2 + $0x140] sm:$0xff]
        %v434 = vld [vmem:[%s2 + $0x148] sm:$0xff]
        %v435 = vld [vmem:[%s2 + $0x150] sm:$0xff]
        %v436 = vld [vmem:[%s2 + $0x158] sm:$0xff]
        %v437 = vld [vmem:[%s2 + $0x160] sm:$0xff]
        %v438 = vld [vmem:[%s2 + $0x168] sm:$0xff]
        %v439 = vld [vmem:[%s2 + $0x170] sm:$0xff]
        %v440 = vld [vmem:[%s2 + $0x178] sm:$0xff]
        %v441 = vld [vmem:[%s2 + $0x180] sm:$0xff]
        %v442 = vld [vmem:[%s2 + $0x188] sm:$0xff]
        %v443 = vld [vmem:[%s2 + $0x190] sm:$0xff]
        %v444 = vld [vmem:[%s2 + $0x198] sm:$0xff]
        %v445 = vld [vmem:[%s2 + $0x1a0] sm:$0xff]
        %v446 = vld [vmem:[%s2 + $0x1a8] sm:$0xff]
        %v447 = vld [vmem:[%s2 + $0x1b0] sm:$0xff]
        %v448 = vld [vmem:[%s2 + $0x1b8] sm:$0xff]
        %v449 = vld [vmem:[%s2 + $0x1c0] sm:$0xff]
        %v450 = vld [vmem:[%s2 + $0x1c8] sm:$0xff]
        %v451 = vld [vmem:[%s2 + $0x1d0] sm:$0xff]
        %v452 = vld [vmem:[%s2 + $0x1d8] sm:$0xff]
        %v453 = vld [vmem:[%s2 + $0x1e0] sm:$0xff]
        %v454 = vld [vmem:[%s2 + $0x1e8] sm:$0xff]
        %v455 = vld [vmem:[%s2 + $0x1f0] sm:$0xff]
        %v456 = vld [vmem:[%s2 + $0x1f8] sm:$0xff]
        %v457 = vld [vmem:[%s2 + $0x200] sm:$0xff]
        %v458 = vld [vmem:[%s2 + $0x208] sm:$0xff]
        %v459 = vld [vmem:[%s2 + $0x210] sm:$0xff]
        %v460 = vld [vmem:[%s2 + $0x218] sm:$0xff]
        %v461 = vld [vmem:[%s2 + $0x220] sm:$0xff]
        %v462 = vld [vmem:[%s2 + $0x228] sm:$0xff]
        %v463 = vld [vmem:[%s2 + $0x230] sm:$0xff]
        %v464 = vld [vmem:[%s2 + $0x238] sm:$0xff]
        %v465 = vld [vmem:[%s2 + $0x240] sm:$0xff]
        %v466 = vld [vmem:[%s2 + $0x248] sm:$0xff]
        %v467 = vld [vmem:[%s2 + $0x250] sm:$0xff]
        %v468 = vld [vmem:[%s2 + $0x258] sm:$0xff]
        %v469 = vld [vmem:[%s2 + $0x260] sm:$0xff]
        %v470 = vld [vmem:[%s2 + $0x268] sm:$0xff]
        %v471 = vld [vmem:[%s2 + $0x270] sm:$0xff]
        %v472 = vld [vmem:[%s2 + $0x278] sm:$0xff]
        %v473 = vld [vmem:[%s2 + $0x280] sm:$0xff]
        %v474 = vld [vmem:[%s2 + $0x288] sm:$0xff]
        %v475 = vld [vmem:[%s2 + $0x290] sm:$0xff]
        %v476 = vld [vmem:[%s2 + $0x298] sm:$0xff]
        %v477 = vld [vmem:[%s2 + $0x2a0] sm:$0xff]
        %v478 = vld [vmem:[%s2 + $0x2a8] sm:$0xff]
        %v479 = vld [vmem:[%s2 + $0x2b0] sm:$0xff]
        %v480 = vld [vmem:[%s2 + $0x2b8] sm:$0xff]
        %v481 = vld [vmem:[%s2 + $0x2c0] sm:$0xff]
        %v482 = vld [vmem:[%s2 + $0x2c8] sm:$0xff]
        %v483 = vld [vmem:[%s2 + $0x2d0] sm:$0xff]
        %v484 = vld [vmem:[%s2 + $0x2d8] sm:$0xff]
        %v485 = vld [vmem:[%s2 + $0x2e0] sm:$0xff]
        %v486 = vld [vmem:[%s2 + $0x2e8] sm:$0xff]
        %v487 = vld [vmem:[%s2 + $0x2f0] sm:$0xff]
        %v488 = vld [vmem:[%s2 + $0x2f8] sm:$0xff]
        %v489 = vld [vmem:[%s2 + $0x300] sm:$0xff]
        %v490 = vld [vmem:[%s2 + $0x308] sm:$0xff]
        %v491 = vld [vmem:[%s2 + $0x310] sm:$0xff]
        %v492 = vld [vmem:[%s2 + $0x318] sm:$0xff]
        %v493 = vld [vmem:[%s2 + $0x320] sm:$0xff]
        %v494 = vld [vmem:[%s2 + $0x328] sm:$0xff]
        %v495 = vld [vmem:[%s2 + $0x330] sm:$0xff]
        %v496 = vld [vmem:[%s2 + $0x338] sm:$0xff]
        %v497 = vld [vmem:[%s2 + $0x340] sm:$0xff]
        %v498 = vld [vmem:[%s2 + $0x348] sm:$0xff]
        %v499 = vld [vmem:[%s2 + $0x350] sm:$0xff]
        %v500 = vld [vmem:[%s2 + $0x358] sm:$0xff]
        %v501 = vld [vmem:[%s2 + $0x360] sm:$0xff]
        %v502 = vld [vmem:[%s2 + $0x368] sm:$0xff]
        %v503 = vld [vmem:[%s2 + $0x370] sm:$0xff]
        %v504 = vld [vmem:[%s2 + $0x378] sm:$0xff]
        %v505 = vld [vmem:[%s2 + $0x380] sm:$0xff]
        %v506 = vld [vmem:[%s2 + $0x388] sm:$0xff]
        %v507 = vld [vmem:[%s2 + $0x390] sm:$0xff]
        %v508 = vld [vmem:[%s2 + $0x398] sm:$0xff]
        %v509 = vld [vmem:[%s2 + $0x3a0] sm:$0xff]
        %v510 = vld [vmem:[%s2 + $0x3a8] sm:$0xff]
        %v511 = vld [vmem:[%s2 + $0x3b0] sm:$0xff]
        %v512 = vld [vmem:[%s2 + $0x3b8] sm:$0xff]
        %v513 = vld [vmem:[%s2 + $0x3c0] sm:$0xff]
        %v514 = vld [vmem:[%s2 + $0x3c8] sm:$0xff]
        %v515 = vld [vmem:[%s2 + $0x3d0] sm:$0xff]
        %v516 = vld [vmem:[%s2 + $0x3d8] sm:$0xff]
        %v517 = vld [vmem:[%s2 + $0x3e0] sm:$0xff]
        %v518 = vld [vmem:[%s2 + $0x3e8] sm:$0xff]
        %v519 = vld [vmem:[%s2 + $0x3f0] sm:$0xff]
        %v520 = vld [vmem:[%s2 + $0x3f8] sm:$0xff]
        %v521 = vld [vmem:[%s365] sm:$0xff]
        %v522 = vld [vmem:[%s365 + $0x8] sm:$0xff]
        %v523 = vld [vmem:[%s365 + $0x10] sm:$0xff]
        %v524 = vld [vmem:[%s365 + $0x18] sm:$0xff]
        %v525 = vld [vmem:[%s365 + $0x20] sm:$0xff]
        %v526 = vld [vmem:[%s365 + $0x28] sm:$0xff]
        %v527 = vld [vmem:[%s365 + $0x30] sm:$0xff]
        %v528 = vld [vmem:[%s365 + $0x38] sm:$0xff]
        %529 = vmatprep.subr.mxu0 %v454
        %530 = vmatpush1.msra.mxu0 %v453
        %531 = vmatprep.subr.mxu0 %v450
        %532 = vmatpush1.msra.mxu0 %v449
        %533 = vmatprep.subr.mxu0 %v446
        %534 = vmatpush1.msra.mxu0 %v445
        %535 = vmatprep.subr.mxu0 %v442
        %536 = vmatpush1.msra.mxu0 %v441
        %537 = vmatprep.subr.mxu0 %v438
        %538 = vmatpush1.msra.mxu0 %v437
        %539 = vmatprep.subr.mxu0 %v434
        %540 = vmatpush1.msra.mxu0 %v433
        %541 = vmatprep.subr.mxu0 %v430
        %542 = vmatpush1.msra.mxu0 %v429
        %543 = vmatprep.subr.mxu0 %v426
        %544 = vmatpush1.msra.mxu0 %v425
        %545 = vmatprep.subr.mxu0 %v422
        %546 = vmatpush1.msra.mxu0 %v421
        %547 = vmatprep.subr.mxu0 %v418
        %548 = vmatpush1.msra.mxu0 %v417
        %549 = vmatprep.subr.mxu0 %v414
        %550 = vmatpush1.msra.mxu0 %v413
        %551 = vmatprep.subr.mxu0 %v410
        %552 = vmatpush1.msra.mxu0 %v409
        %553 = vmatprep.subr.mxu0 %v406
        %554 = vmatpush1.msra.mxu0 %v405
        %555 = vmatprep.subr.mxu0 %v402
        %556 = vmatpush1.msra.mxu0 %v401
        %557 = vmatprep.subr.mxu0 %v398
        %558 = vmatpush1.msra.mxu0 %v397
        %559 = vmatprep.subr.mxu0 %v394
        %560 = vmatpush1.msra.mxu0 %v393
        %561 = vmatprep.subr.mxu0 %v518
        %562 = vmatpush2.msra.mxu0 %v517
        %563 = vmatprep.subr.mxu0 %v514
        %564 = vmatpush2.msra.mxu0 %v513
        %565 = vmatprep.subr.mxu0 %v510
        %566 = vmatpush2.msra.mxu0 %v509
        %567 = vmatprep.subr.mxu0 %v506
        %568 = vmatpush2.msra.mxu0 %v505
        %569 = vmatprep.subr.mxu0 %v502
        %570 = vmatpush2.msra.mxu0 %v501
        %571 = vmatprep.subr.mxu0 %v498
        %572 = vmatpush2.msra.mxu0 %v497
        %573 = vmatprep.subr.mxu0 %v494
        %574 = vmatpush2.msra.mxu0 %v493
        %575 = vmatprep.subr.mxu0 %v490
        %576 = vmatpush2.msra.mxu0 %v489
        %577 = vmatprep.subr.mxu0 %v486
        %578 = vmatpush2.msra.mxu0 %v485
        %579 = vmatprep.subr.mxu0 %v482
        %580 = vmatpush2.msra.mxu0 %v481
        %581 = vmatprep.subr.mxu0 %v478
        %582 = vmatpush2.msra.mxu0 %v477
        %583 = vmatprep.subr.mxu0 %v474
        %584 = vmatpush2.msra.mxu0 %v473
        %585 = vmatprep.subr.mxu0 %v470
        %586 = vmatpush2.msra.mxu0 %v469
        %587 = vmatprep.subr.mxu0 %v466
        %588 = vmatpush2.msra.mxu0 %v465
        %589 = vmatprep.subr.mxu0 %v462
        %590 = vmatpush2.msra.mxu0 %v461
        %591 = vmatprep.subr.mxu0 %v458
        %592 = vmatpush2.msra.mxu0 %v457
        %593 = vmatprep.mubr.f32.mxu0 %v390
        %594 = vmatmul.mubr.f32.gmra.mxu0 %v389
        %v595 = vpop.f32.mrf.mxu0
        %v596 = vadd.f32 %v521, %v595
        %v597 = vpop.f32.mrf.mxu0
        %v598 = vadd.f32 %v522, %v597
        %599 = vmatprep.mubr.f32.mxu0 %v392
        %600 = vmatmul.mubr.f32.gmra.mxu0 %v391
        %v601 = vpop.f32.mrf.mxu0
        %v602 = vadd.f32 %v525, %v601
        %v603 = vpop.f32.mrf.mxu0
        %v604 = vadd.f32 %v526, %v603
        %605 = vdwg.mxu0
        %606 = vmatprep.subr.mxu0 %v456
        %607 = vmatpush1.msra.mxu0 %v455
        %608 = vmatprep.subr.mxu0 %v452
        %609 = vmatpush1.msra.mxu0 %v451
        %610 = vmatprep.subr.mxu0 %v448
        %611 = vmatpush1.msra.mxu0 %v447
        %612 = vmatprep.subr.mxu0 %v444
        %613 = vmatpush1.msra.mxu0 %v443
        %614 = vmatprep.subr.mxu0 %v440
        %615 = vmatpush1.msra.mxu0 %v439
        %616 = vmatprep.subr.mxu0 %v436
        %617 = vmatpush1.msra.mxu0 %v435
        %618 = vmatprep.subr.mxu0 %v432
        %619 = vmatpush1.msra.mxu0 %v431
        %620 = vmatprep.subr.mxu0 %v428
        %621 = vmatpush1.msra.mxu0 %v427
        %622 = vmatprep.subr.mxu0 %v424
        %623 = vmatpush1.msra.mxu0 %v423
        %624 = vmatprep.subr.mxu0 %v420
        %625 = vmatpush1.msra.mxu0 %v419
        %626 = vmatprep.subr.mxu0 %v416
        %627 = vmatpush1.msra.mxu0 %v415
        %628 = vmatprep.subr.mxu0 %v412
        %629 = vmatpush1.msra.mxu0 %v411
        %630 = vmatprep.subr.mxu0 %v408
        %631 = vmatpush1.msra.mxu0 %v407
        %632 = vmatprep.subr.mxu0 %v404
        %633 = vmatpush1.msra.mxu0 %v403
        %634 = vmatprep.subr.mxu0 %v400
        %635 = vmatpush1.msra.mxu0 %v399
        %636 = vmatprep.subr.mxu0 %v396
        %637 = vmatpush1.msra.mxu0 %v395
        %638 = vmatprep.subr.mxu0 %v520
        %639 = vmatpush2.msra.mxu0 %v519
        %640 = vmatprep.subr.mxu0 %v516
        %641 = vmatpush2.msra.mxu0 %v515
        %642 = vmatprep.subr.mxu0 %v512
        %643 = vmatpush2.msra.mxu0 %v511
        %644 = vmatprep.subr.mxu0 %v508
        %645 = vmatpush2.msra.mxu0 %v507
        %646 = vmatprep.subr.mxu0 %v504
        %647 = vmatpush2.msra.mxu0 %v503
        %648 = vmatprep.subr.mxu0 %v500
        %649 = vmatpush2.msra.mxu0 %v499
        %650 = vmatprep.subr.mxu0 %v496
        %651 = vmatpush2.msra.mxu0 %v495
        %652 = vmatprep.subr.mxu0 %v492
        %653 = vmatpush2.msra.mxu0 %v491
        %654 = vmatprep.subr.mxu0 %v488
        %655 = vmatpush2.msra.mxu0 %v487
        %656 = vmatprep.subr.mxu0 %v484
        %657 = vmatpush2.msra.mxu0 %v483
        %658 = vmatprep.subr.mxu0 %v480
        %659 = vmatpush2.msra.mxu0 %v479
        %660 = vmatprep.subr.mxu0 %v476
        %661 = vmatpush2.msra.mxu0 %v475
        %662 = vmatprep.subr.mxu0 %v472
        %663 = vmatpush2.msra.mxu0 %v471
        %664 = vmatprep.subr.mxu0 %v468
        %665 = vmatpush2.msra.mxu0 %v467
        %666 = vmatprep.subr.mxu0 %v464
        %667 = vmatpush2.msra.mxu0 %v463
        %668 = vmatprep.subr.mxu0 %v460
        %669 = vmatpush2.msra.mxu0 %v459
        %670 = vmatprep.mubr.f32.mxu0 %v390
        %671 = vmatmul.mubr.f32.gmra.mxu0 %v389
        %v672 = vpop.f32.mrf.mxu0
        %v673 = vadd.f32 %v523, %v672
        %v674 = vpop.f32.mrf.mxu0
        %v675 = vadd.f32 %v524, %v674
        %676 = vmatprep.mubr.f32.mxu0 %v392
        %677 = vmatmul.mubr.f32.gmra.mxu0 %v391
        %v678 = vpop.f32.mrf.mxu0
        %v679 = vadd.f32 %v527, %v678
        %v680 = vpop.f32.mrf.mxu0
        %v681 = vadd.f32 %v528, %v680
        %682 = vdwg.mxu0
        %v683 = vmax.f32 %v596, 0.0
        %v684 = vmax.f32 %v598, 0.0
        %v685 = vmax.f32 %v673, 0.0
        %v686 = vmax.f32 %v675, 0.0
        %v687 = vmax.f32 %v602, 0.0
        %v688 = vmax.f32 %v604, 0.0
        %v689 = vmax.f32 %v679, 0.0
        %v690 = vmax.f32 %v681, 0.0
        %v691 = vld [vmem:[%s3] sm:$0xff]
        %v692 = vld [vmem:[%s3 + $0x8] sm:$0xff]
        %v693 = vld [vmem:[%s3 + $0x10] sm:$0xff]
        %v694 = vld [vmem:[%s3 + $0x18] sm:$0xff]
        %v695 = vld [vmem:[%s3 + $0x20] sm:$0xff]
        %v696 = vld [vmem:[%s3 + $0x28] sm:$0xff]
        %v697 = vld [vmem:[%s3 + $0x30] sm:$0xff]
        %v698 = vld [vmem:[%s3 + $0x38] sm:$0xff]
        %v699 = vld [vmem:[%s3 + $0x40] sm:$0xff]
        %v700 = vld [vmem:[%s3 + $0x48] sm:$0xff]
        %v701 = vld [vmem:[%s3 + $0x50] sm:$0xff]
        %v702 = vld [vmem:[%s3 + $0x58] sm:$0xff]
        %v703 = vld [vmem:[%s3 + $0x60] sm:$0xff]
        %v704 = vld [vmem:[%s3 + $0x68] sm:$0xff]
        %v705 = vld [vmem:[%s3 + $0x70] sm:$0xff]
        %v706 = vld [vmem:[%s3 + $0x78] sm:$0xff]
        %v707 = vld [vmem:[%s3 + $0x80] sm:$0xff]
        %v708 = vld [vmem:[%s3 + $0x88] sm:$0xff]
        %v709 = vld [vmem:[%s3 + $0x90] sm:$0xff]
        %v710 = vld [vmem:[%s3 + $0x98] sm:$0xff]
        %v711 = vld [vmem:[%s3 + $0xa0] sm:$0xff]
        %v712 = vld [vmem:[%s3 + $0xa8] sm:$0xff]
        %v713 = vld [vmem:[%s3 + $0xb0] sm:$0xff]
        %v714 = vld [vmem:[%s3 + $0xb8] sm:$0xff]
        %v715 = vld [vmem:[%s3 + $0xc0] sm:$0xff]
        %v716 = vld [vmem:[%s3 + $0xc8] sm:$0xff]
        %v717 = vld [vmem:[%s3 + $0xd0] sm:$0xff]
        %v718 = vld [vmem:[%s3 + $0xd8] sm:$0xff]
        %v719 = vld [vmem:[%s3 + $0xe0] sm:$0xff]
        %v720 = vld [vmem:[%s3 + $0xe8] sm:$0xff]
        %v721 = vld [vmem:[%s3 + $0xf0] sm:$0xff]
        %v722 = vld [vmem:[%s3 + $0xf8] sm:$0xff]
        %v723 = vld [vmem:[%s3 + $0x100] sm:$0xff]
        %v724 = vld [vmem:[%s3 + $0x108] sm:$0xff]
        %v725 = vld [vmem:[%s3 + $0x110] sm:$0xff]
        %v726 = vld [vmem:[%s3 + $0x118] sm:$0xff]
        %v727 = vld [vmem:[%s3 + $0x120] sm:$0xff]
        %v728 = vld [vmem:[%s3 + $0x128] sm:$0xff]
        %v729 = vld [vmem:[%s3 + $0x130] sm:$0xff]
        %v730 = vld [vmem:[%s3 + $0x138] sm:$0xff]
        %v731 = vld [vmem:[%s3 + $0x140] sm:$0xff]
        %v732 = vld [vmem:[%s3 + $0x148] sm:$0xff]
        %v733 = vld [vmem:[%s3 + $0x150] sm:$0xff]
        %v734 = vld [vmem:[%s3 + $0x158] sm:$0xff]
        %v735 = vld [vmem:[%s3 + $0x160] sm:$0xff]
        %v736 = vld [vmem:[%s3 + $0x168] sm:$0xff]
        %v737 = vld [vmem:[%s3 + $0x170] sm:$0xff]
        %v738 = vld [vmem:[%s3 + $0x178] sm:$0xff]
        %v739 = vld [vmem:[%s3 + $0x180] sm:$0xff]
        %v740 = vld [vmem:[%s3 + $0x188] sm:$0xff]
        %v741 = vld [vmem:[%s3 + $0x190] sm:$0xff]
        %v742 = vld [vmem:[%s3 + $0x198] sm:$0xff]
        %v743 = vld [vmem:[%s3 + $0x1a0] sm:$0xff]
        %v744 = vld [vmem:[%s3 + $0x1a8] sm:$0xff]
        %v745 = vld [vmem:[%s3 + $0x1b0] sm:$0xff]
        %v746 = vld [vmem:[%s3 + $0x1b8] sm:$0xff]
        %v747 = vld [vmem:[%s3 + $0x1c0] sm:$0xff]
        %v748 = vld [vmem:[%s3 + $0x1c8] sm:$0xff]
        %v749 = vld [vmem:[%s3 + $0x1d0] sm:$0xff]
        %v750 = vld [vmem:[%s3 + $0x1d8] sm:$0xff]
        %v751 = vld [vmem:[%s3 + $0x1e0] sm:$0xff]
        %v752 = vld [vmem:[%s3 + $0x1e8] sm:$0xff]
        %v753 = vld [vmem:[%s3 + $0x1f0] sm:$0xff]
        %v754 = vld [vmem:[%s3 + $0x1f8] sm:$0xff]
        %v755 = vld [vmem:[%s4] sm:$0x1]
        %v757 = vlaneseq
        %v758 = vshrl.u32 %v757, 7
        %v759 = vsub.s32 0, %v758
        %v760 = vrot.slane %v755, %v759
        %762 = vmatprep.subr.mxu0 0.0
        %763 = vmatpush1.msra.mxu0 %v706
        %764 = vmatprep.subr.mxu0 0.0
        %765 = vmatpush1.msra.mxu0 %v705
        %766 = vmatprep.subr.mxu0 0.0
        %767 = vmatpush1.msra.mxu0 %v704
        %768 = vmatprep.subr.mxu0 0.0
        %769 = vmatpush1.msra.mxu0 %v703
        %770 = vmatprep.subr.mxu0 0.0
        %771 = vmatpush1.msra.mxu0 %v702
        %772 = vmatprep.subr.mxu0 0.0
        %773 = vmatpush1.msra.mxu0 %v701
        %774 = vmatprep.subr.mxu0 0.0
        %775 = vmatpush1.msra.mxu0 %v700
        %776 = vmatprep.subr.mxu0 0.0
        %777 = vmatpush1.msra.mxu0 %v699
        %778 = vmatprep.subr.mxu0 0.0
        %779 = vmatpush1.msra.mxu0 %v698
        %780 = vmatprep.subr.mxu0 0.0
        %781 = vmatpush1.msra.mxu0 %v697
        %782 = vmatprep.subr.mxu0 0.0
        %783 = vmatpush1.msra.mxu0 %v696
        %784 = vmatprep.subr.mxu0 0.0
        %785 = vmatpush1.msra.mxu0 %v695
        %786 = vmatprep.subr.mxu0 0.0
        %787 = vmatpush1.msra.mxu0 %v694
        %788 = vmatprep.subr.mxu0 0.0
        %789 = vmatpush1.msra.mxu0 %v693
        %790 = vmatprep.subr.mxu0 0.0
        %791 = vmatpush1.msra.mxu0 %v692
        %792 = vmatprep.subr.mxu0 0.0
        %793 = vmatpush1.msra.mxu0 %v691
        %794 = vmatprep.subr.mxu0 0.0
        %795 = vmatpush2.msra.mxu0 %v722
        %796 = vmatprep.subr.mxu0 0.0
        %797 = vmatpush2.msra.mxu0 %v721
        %798 = vmatprep.subr.mxu0 0.0
        %799 = vmatpush2.msra.mxu0 %v720
        %800 = vmatprep.subr.mxu0 0.0
        %801 = vmatpush2.msra.mxu0 %v719
        %802 = vmatprep.subr.mxu0 0.0
        %803 = vmatpush2.msra.mxu0 %v718
        %804 = vmatprep.subr.mxu0 0.0
        %805 = vmatpush2.msra.mxu0 %v717
        %806 = vmatprep.subr.mxu0 0.0
        %807 = vmatpush2.msra.mxu0 %v716
        %808 = vmatprep.subr.mxu0 0.0
        %809 = vmatpush2.msra.mxu0 %v715
        %810 = vmatprep.subr.mxu0 0.0
        %811 = vmatpush2.msra.mxu0 %v714
        %812 = vmatprep.subr.mxu0 0.0
        %813 = vmatpush2.msra.mxu0 %v713
        %814 = vmatprep.subr.mxu0 0.0
        %815 = vmatpush2.msra.mxu0 %v712
        %816 = vmatprep.subr.mxu0 0.0
        %817 = vmatpush2.msra.mxu0 %v711
        %818 = vmatprep.subr.mxu0 0.0
        %819 = vmatpush2.msra.mxu0 %v710
        %820 = vmatprep.subr.mxu0 0.0
        %821 = vmatpush2.msra.mxu0 %v709
        %822 = vmatprep.subr.mxu0 0.0
        %823 = vmatpush2.msra.mxu0 %v708
        %824 = vmatprep.subr.mxu0 0.0
        %825 = vmatpush2.msra.mxu0 %v707
        %826 = vmatprep.mubr.f32.mxu0 %v684
        %827 = vmatmul.mubr.f32.gmra.mxu0 %v683
        %v828 = vpop.f32.mrf.mxu0
        %v829 = vadd.f32 %v760, %v828
        %v830 = vpop.f32.mrf.mxu0
        %831 = vmatprep.mubr.f32.mxu0 %v688
        %832 = vmatmul.mubr.f32.gmra.mxu0 %v687
        %v833 = vpop.f32.mrf.mxu0
        %v834 = vadd.f32 %v760, %v833
        %v835 = vpop.f32.mrf.mxu0
        %836 = vdwg.mxu0
        %837 = vmatprep.subr.mxu0 0.0
        %838 = vmatpush1.msra.mxu0 %v738
        %839 = vmatprep.subr.mxu0 0.0
        %840 = vmatpush1.msra.mxu0 %v737
        %841 = vmatprep.subr.mxu0 0.0
        %842 = vmatpush1.msra.mxu0 %v736
        %843 = vmatprep.subr.mxu0 0.0
        %844 = vmatpush1.msra.mxu0 %v735
        %845 = vmatprep.subr.mxu0 0.0
        %846 = vmatpush1.msra.mxu0 %v734
        %847 = vmatprep.subr.mxu0 0.0
        %848 = vmatpush1.msra.mxu0 %v733
        %849 = vmatprep.subr.mxu0 0.0
        %850 = vmatpush1.msra.mxu0 %v732
        %851 = vmatprep.subr.mxu0 0.0
        %852 = vmatpush1.msra.mxu0 %v731
        %853 = vmatprep.subr.mxu0 0.0
        %854 = vmatpush1.msra.mxu0 %v730
        %855 = vmatprep.subr.mxu0 0.0
        %856 = vmatpush1.msra.mxu0 %v729
        %857 = vmatprep.subr.mxu0 0.0
        %858 = vmatpush1.msra.mxu0 %v728
        %859 = vmatprep.subr.mxu0 0.0
        %860 = vmatpush1.msra.mxu0 %v727
        %861 = vmatprep.subr.mxu0 0.0
        %862 = vmatpush1.msra.mxu0 %v726
        %863 = vmatprep.subr.mxu0 0.0
        %864 = vmatpush1.msra.mxu0 %v725
        %865 = vmatprep.subr.mxu0 0.0
        %866 = vmatpush1.msra.mxu0 %v724
        %867 = vmatprep.subr.mxu0 0.0
        %868 = vmatpush1.msra.mxu0 %v723
        %869 = vmatprep.subr.mxu0 0.0
        %870 = vmatpush2.msra.mxu0 %v754
        %871 = vmatprep.subr.mxu0 0.0
        %872 = vmatpush2.msra.mxu0 %v753
        %873 = vmatprep.subr.mxu0 0.0
        %874 = vmatpush2.msra.mxu0 %v752
        %875 = vmatprep.subr.mxu0 0.0
        %876 = vmatpush2.msra.mxu0 %v751
        %877 = vmatprep.subr.mxu0 0.0
        %878 = vmatpush2.msra.mxu0 %v750
        %879 = vmatprep.subr.mxu0 0.0
        %880 = vmatpush2.msra.mxu0 %v749
        %881 = vmatprep.subr.mxu0 0.0
        %882 = vmatpush2.msra.mxu0 %v748
        %883 = vmatprep.subr.mxu0 0.0
        %884 = vmatpush2.msra.mxu0 %v747
        %885 = vmatprep.subr.mxu0 0.0
        %886 = vmatpush2.msra.mxu0 %v746
        %887 = vmatprep.subr.mxu0 0.0
        %888 = vmatpush2.msra.mxu0 %v745
        %889 = vmatprep.subr.mxu0 0.0
        %890 = vmatpush2.msra.mxu0 %v744
        %891 = vmatprep.subr.mxu0 0.0
        %892 = vmatpush2.msra.mxu0 %v743
        %893 = vmatprep.subr.mxu0 0.0
        %894 = vmatpush2.msra.mxu0 %v742
        %895 = vmatprep.subr.mxu0 0.0
        %896 = vmatpush2.msra.mxu0 %v741
        %897 = vmatprep.subr.mxu0 0.0
        %898 = vmatpush2.msra.mxu0 %v740
        %899 = vmatprep.subr.mxu0 0.0
        %900 = vmatpush2.msra.mxu0 %v739
        %901 = vmatprep.mubr.f32.mxu0 %v686
        %902 = vmatmul.mubr.f32.gmra.mxu0 %v685
        %v903 = vpop.f32.mrf.mxu0
        %v904 = vadd.f32 %v829, %v903
        %v905 = vpop.f32.mrf.mxu0
        %906 = vmatprep.mubr.f32.mxu0 %v690
        %907 = vmatmul.mubr.f32.gmra.mxu0 %v689
        %v908 = vpop.f32.mrf.mxu0
        %v909 = vadd.f32 %v834, %v908
        %v910 = vpop.f32.mrf.mxu0
        %911 = vdwg.mxu0
        %v912 = vmax.f32 %v904, 0.0
        %v913 = vmax.f32 %v909, 0.0
        %vm914 = vcmask 523264
        %915 = vst.msk [vmem:[#allocation3] sm:$0xff] %vm914, %v912
        %916 = vst.msk [vmem:[#allocation3 + $0x8] sm:$0xff] %vm914, %v913
        %v917 = vld [vmem:[#allocation3] sm:$0x3]
        %v918 = vpack.c.bf16 %v917, %v917
        %v919 = vld [vmem:[%s372] sm:$0xff]
        %v920 = vld [vmem:[%s372 + $0x8] sm:$0xff]
        %v921 = vld [vmem:[%s372 + $0x10] sm:$0xff]
        %v922 = vld [vmem:[%s372 + $0x18] sm:$0xff]
        %v923 = vld [vmem:[%s372 + $0x20] sm:$0xff]
        %v924 = vld [vmem:[%s372 + $0x28] sm:$0xff]
        %v925 = vld [vmem:[%s372 + $0x30] sm:$0xff]
        %v926 = vld [vmem:[%s372 + $0x38] sm:$0xff]
        %v927 = vld [vmem:[%s372 + $0x40] sm:$0xff]
        %v928 = vld [vmem:[%s372 + $0x48] sm:$0xff]
        %v929 = vld [vmem:[%s372 + $0x50] sm:$0xff]
        %v930 = vld [vmem:[%s372 + $0x58] sm:$0xff]
        %v931 = vld [vmem:[%s372 + $0x60] sm:$0xff]
        %v932 = vld [vmem:[%s372 + $0x68] sm:$0xff]
        %v933 = vld [vmem:[%s372 + $0x70] sm:$0xff]
        %v934 = vld [vmem:[%s372 + $0x78] sm:$0xff]
        %v935 = vld [vmem:[%s372 + $0x80] sm:$0xff]
        %v936 = vld [vmem:[%s372 + $0x88] sm:$0xff]
        %v937 = vld [vmem:[%s372 + $0x90] sm:$0xff]
        %v938 = vld [vmem:[%s372 + $0x98] sm:$0xff]
        %v939 = vld [vmem:[%s372 + $0xa0] sm:$0xff]
        %v940 = vld [vmem:[%s372 + $0xa8] sm:$0xff]
        %v941 = vld [vmem:[%s372 + $0xb0] sm:$0xff]
        %v942 = vld [vmem:[%s372 + $0xb8] sm:$0xff]
        %v943 = vld [vmem:[%s372 + $0xc0] sm:$0xff]
        %v944 = vld [vmem:[%s372 + $0xc8] sm:$0xff]
        %v945 = vld [vmem:[%s372 + $0xd0] sm:$0xff]
        %v946 = vld [vmem:[%s372 + $0xd8] sm:$0xff]
        %v947 = vld [vmem:[%s372 + $0xe0] sm:$0xff]
        %v948 = vld [vmem:[%s372 + $0xe8] sm:$0xff]
        %v949 = vld [vmem:[%s372 + $0xf0] sm:$0xff]
        %v950 = vld [vmem:[%s372 + $0xf8] sm:$0xff]
        %v951 = vld [vmem:[#allocation2] sm:$0xff]
        %v952 = vld [vmem:[#allocation2 + $0x8] sm:$0xff]
        %v985 = vunpack.c.l.b16 %v919
        %v986 = vunpack.c.h.b16 %v919
        %v987 = vunpack.c.l.b16 %v920
        %v988 = vunpack.c.h.b16 %v920
        %v989 = vunpack.c.l.b16 %v921
        %v990 = vunpack.c.h.b16 %v921
        %v991 = vunpack.c.l.b16 %v922
        %v992 = vunpack.c.h.b16 %v922
        %v993 = vunpack.c.l.b16 %v923
        %v994 = vunpack.c.h.b16 %v923
        %v995 = vunpack.c.l.b16 %v924
        %v996 = vunpack.c.h.b16 %v924
        %v997 = vunpack.c.l.b16 %v925
        %v998 = vunpack.c.h.b16 %v925
        %v999 = vunpack.c.l.b16 %v926
        %v1000 = vunpack.c.h.b16 %v926
        %v1001 = vunpack.c.l.b16 %v927
        %v1002 = vunpack.c.h.b16 %v927
        %v1003 = vunpack.c.l.b16 %v928
        %v1004 = vunpack.c.h.b16 %v928
        %v1005 = vunpack.c.l.b16 %v929
        %v1006 = vunpack.c.h.b16 %v929
        %v1007 = vunpack.c.l.b16 %v930
        %v1008 = vunpack.c.h.b16 %v930
        %v1009 = vunpack.c.l.b16 %v931
        %v1010 = vunpack.c.h.b16 %v931
        %v1011 = vunpack.c.l.b16 %v932
        %v1012 = vunpack.c.h.b16 %v932
        %v1013 = vunpack.c.l.b16 %v933
        %v1014 = vunpack.c.h.b16 %v933
        %v1015 = vunpack.c.l.b16 %v934
        %v1016 = vunpack.c.h.b16 %v934
        %v1017 = vunpack.c.l.b16 %v935
        %v1018 = vunpack.c.h.b16 %v935
        %v1019 = vunpack.c.l.b16 %v936
        %v1020 = vunpack.c.h.b16 %v936
        %v1021 = vunpack.c.l.b16 %v937
        %v1022 = vunpack.c.h.b16 %v937
        %v1023 = vunpack.c.l.b16 %v938
        %v1024 = vunpack.c.h.b16 %v938
        %v1025 = vunpack.c.l.b16 %v939
        %v1026 = vunpack.c.h.b16 %v939
        %v1027 = vunpack.c.l.b16 %v940
        %v1028 = vunpack.c.h.b16 %v940
        %v1029 = vunpack.c.l.b16 %v941
        %v1030 = vunpack.c.h.b16 %v941
        %v1031 = vunpack.c.l.b16 %v942
        %v1032 = vunpack.c.h.b16 %v942
        %v1033 = vunpack.c.l.b16 %v943
        %v1034 = vunpack.c.h.b16 %v943
        %v1035 = vunpack.c.l.b16 %v944
        %v1036 = vunpack.c.h.b16 %v944
        %v1037 = vunpack.c.l.b16 %v945
        %v1038 = vunpack.c.h.b16 %v945
        %v1039 = vunpack.c.l.b16 %v946
        %v1040 = vunpack.c.h.b16 %v946
        %v1041 = vunpack.c.l.b16 %v947
        %v1042 = vunpack.c.h.b16 %v947
        %v1043 = vunpack.c.l.b16 %v948
        %v1044 = vunpack.c.h.b16 %v948
        %v1045 = vunpack.c.l.b16 %v949
        %v1046 = vunpack.c.h.b16 %v949
        %v1047 = vunpack.c.l.b16 %v950
        %v1048 = vunpack.c.h.b16 %v950
        %v1049 = vpack.c.b16 %v993, %v985
        %v1050 = vpack.c.b16 %v994, %v986
        %v1051 = vpack.c.b16 %v995, %v987
        %v1052 = vpack.c.b16 %v996, %v988
        %v1053 = vpack.c.b16 %v997, %v989
        %v1054 = vpack.c.b16 %v998, %v990
        %v1055 = vpack.c.b16 %v999, %v991
        %v1056 = vpack.c.b16 %v1000, %v992
        %v1057 = vpack.c.b16 %v1009, %v1001
        %v1058 = vpack.c.b16 %v1010, %v1002
        %v1059 = vpack.c.b16 %v1011, %v1003
        %v1060 = vpack.c.b16 %v1012, %v1004
        %v1061 = vpack.c.b16 %v1013, %v1005
        %v1062 = vpack.c.b16 %v1014, %v1006
        %v1063 = vpack.c.b16 %v1015, %v1007
        %v1064 = vpack.c.b16 %v1016, %v1008
        %v1065 = vpack.c.b16 %v1025, %v1017
        %v1066 = vpack.c.b16 %v1026, %v1018
        %v1067 = vpack.c.b16 %v1027, %v1019
        %v1068 = vpack.c.b16 %v1028, %v1020
        %v1069 = vpack.c.b16 %v1029, %v1021
        %v1070 = vpack.c.b16 %v1030, %v1022
        %v1071 = vpack.c.b16 %v1031, %v1023
        %v1072 = vpack.c.b16 %v1032, %v1024
        %v1073 = vpack.c.b16 %v1041, %v1033
        %v1074 = vpack.c.b16 %v1042, %v1034
        %v1075 = vpack.c.b16 %v1043, %v1035
        %v1076 = vpack.c.b16 %v1044, %v1036
        %v1077 = vpack.c.b16 %v1045, %v1037
        %v1078 = vpack.c.b16 %v1046, %v1038
        %v1079 = vpack.c.b16 %v1047, %v1039
        %v1080 = vpack.c.b16 %v1048, %v1040
        %v1114 = vsel %vm914, %v918, 0
        %1116 = vmatprep.subr.bf16.mxu0 0
        %1117 = vmatpush1.bf16.msra.mxu0 0
        %1118 = vmatprep.subr.bf16.mxu0 0
        %1119 = vmatpush1.bf16.msra.mxu0 0
        %1120 = vmatprep.subr.bf16.mxu0 0
        %1121 = vmatpush1.bf16.msra.mxu0 0
        %1122 = vmatprep.subr.bf16.mxu0 0
        %1123 = vmatpush1.bf16.msra.mxu0 0
        %1124 = vmatprep.subr.bf16.mxu0 %v1074
        %1125 = vmatpush1.bf16.msra.mxu0 %v1073
        %1126 = vmatprep.subr.bf16.mxu0 %v1066
        %1127 = vmatpush1.bf16.msra.mxu0 %v1065
        %1128 = vmatprep.subr.bf16.mxu0 %v1058
        %1129 = vmatpush1.bf16.msra.mxu0 %v1057
        %1130 = vmatprep.subr.bf16.mxu0 %v1050
        %1131 = vmatpush1.bf16.msra.mxu0 %v1049
        %1132 = vmatprep.subr.bf16.mxu0 0
        %1133 = vmatpush2.bf16.msra.mxu0 0
        %1134 = vmatprep.subr.bf16.mxu0 0
        %1135 = vmatpush2.bf16.msra.mxu0 0
        %1136 = vmatprep.subr.bf16.mxu0 0
        %1137 = vmatpush2.bf16.msra.mxu0 0
        %1138 = vmatprep.subr.bf16.mxu0 0
        %1139 = vmatpush2.bf16.msra.mxu0 0
        %1140 = vmatprep.subr.bf16.mxu0 0
        %1141 = vmatpush2.bf16.msra.mxu0 0
        %1142 = vmatprep.subr.bf16.mxu0 0
        %1143 = vmatpush2.bf16.msra.mxu0 0
        %1144 = vmatprep.subr.bf16.mxu0 0
        %1145 = vmatpush2.bf16.msra.mxu0 0
        %1146 = vmatprep.subr.bf16.mxu0 0
        %1147 = vmatpush2.bf16.msra.mxu0 0
        %1148 = vmatprep.mubr.bf16.mxu0 0
        %1149 = vmatmul.mubr.bf16.gmra.mxu0 %v1114
        %v1150 = vpop.f32.mrf.mxu0
        %v1151 = vadd.f32 0.0, %v1150
        %v1152 = vpop.f32.mrf.mxu0
        %v1153 = vadd.f32 0.0, %v1152
        %v1154 = vpop.f32.mrf.mxu0
        %v1155 = vpop.f32.mrf.mxu0
        %1156 = vdwg.mxu0
        %1157 = vmatprep.subr.bf16.mxu0 0
        %1158 = vmatpush1.bf16.msra.mxu0 0
        %1159 = vmatprep.subr.bf16.mxu0 0
        %1160 = vmatpush1.bf16.msra.mxu0 0
        %1161 = vmatprep.subr.bf16.mxu0 0
        %1162 = vmatpush1.bf16.msra.mxu0 0
        %1163 = vmatprep.subr.bf16.mxu0 0
        %1164 = vmatpush1.bf16.msra.mxu0 0
        %1165 = vmatprep.subr.bf16.mxu0 %v1076
        %1166 = vmatpush1.bf16.msra.mxu0 %v1075
        %1167 = vmatprep.subr.bf16.mxu0 %v1068
        %1168 = vmatpush1.bf16.msra.mxu0 %v1067
        %1169 = vmatprep.subr.bf16.mxu0 %v1060
        %1170 = vmatpush1.bf16.msra.mxu0 %v1059
        %1171 = vmatprep.subr.bf16.mxu0 %v1052
        %1172 = vmatpush1.bf16.msra.mxu0 %v1051
        %1173 = vmatprep.subr.bf16.mxu0 0
        %1174 = vmatpush2.bf16.msra.mxu0 0
        %1175 = vmatprep.subr.bf16.mxu0 0
        %1176 = vmatpush2.bf16.msra.mxu0 0
        %1177 = vmatprep.subr.bf16.mxu0 0
        %1178 = vmatpush2.bf16.msra.mxu0 0
        %1179 = vmatprep.subr.bf16.mxu0 0
        %1180 = vmatpush2.bf16.msra.mxu0 0
        %1181 = vmatprep.subr.bf16.mxu0 0
        %1182 = vmatpush2.bf16.msra.mxu0 0
        %1183 = vmatprep.subr.bf16.mxu0 0
        %1184 = vmatpush2.bf16.msra.mxu0 0
        %1185 = vmatprep.subr.bf16.mxu0 0
        %1186 = vmatpush2.bf16.msra.mxu0 0
        %1187 = vmatprep.subr.bf16.mxu0 0
        %1188 = vmatpush2.bf16.msra.mxu0 0
        %1189 = vmatprep.mubr.bf16.mxu0 0
        %1190 = vmatmul.mubr.bf16.gmra.mxu0 %v1114
        %v1191 = vpop.f32.mrf.mxu0
        %v1192 = vadd.f32 0.0, %v1191
        %v1193 = vpop.f32.mrf.mxu0
        %v1194 = vadd.f32 0.0, %v1193
        %v1195 = vpop.f32.mrf.mxu0
        %v1196 = vpop.f32.mrf.mxu0
        %1197 = vdwg.mxu0
        %1198 = vmatprep.subr.bf16.mxu0 0
        %1199 = vmatpush1.bf16.msra.mxu0 0
        %1200 = vmatprep.subr.bf16.mxu0 0
        %1201 = vmatpush1.bf16.msra.mxu0 0
        %1202 = vmatprep.subr.bf16.mxu0 0
        %1203 = vmatpush1.bf16.msra.mxu0 0
        %1204 = vmatprep.subr.bf16.mxu0 0
        %1205 = vmatpush1.bf16.msra.mxu0 0
        %1206 = vmatprep.subr.bf16.mxu0 %v1078
        %1207 = vmatpush1.bf16.msra.mxu0 %v1077
        %1208 = vmatprep.subr.bf16.mxu0 %v1070
        %1209 = vmatpush1.bf16.msra.mxu0 %v1069
        %1210 = vmatprep.subr.bf16.mxu0 %v1062
        %1211 = vmatpush1.bf16.msra.mxu0 %v1061
        %1212 = vmatprep.subr.bf16.mxu0 %v1054
        %1213 = vmatpush1.bf16.msra.mxu0 %v1053
        %1214 = vmatprep.subr.bf16.mxu0 0
        %1215 = vmatpush2.bf16.msra.mxu0 0
        %1216 = vmatprep.subr.bf16.mxu0 0
        %1217 = vmatpush2.bf16.msra.mxu0 0
        %1218 = vmatprep.subr.bf16.mxu0 0
        %1219 = vmatpush2.bf16.msra.mxu0 0
        %1220 = vmatprep.subr.bf16.mxu0 0
        %1221 = vmatpush2.bf16.msra.mxu0 0
        %1222 = vmatprep.subr.bf16.mxu0 0
        %1223 = vmatpush2.bf16.msra.mxu0 0
        %1224 = vmatprep.subr.bf16.mxu0 0
        %1225 = vmatpush2.bf16.msra.mxu0 0
        %1226 = vmatprep.subr.bf16.mxu0 0
        %1227 = vmatpush2.bf16.msra.mxu0 0
        %1228 = vmatprep.subr.bf16.mxu0 0
        %1229 = vmatpush2.bf16.msra.mxu0 0
        %1230 = vmatprep.mubr.bf16.mxu0 0
        %1231 = vmatmul.mubr.bf16.gmra.mxu0 %v1114
        %v1232 = vpop.f32.mrf.mxu0
        %v1233 = vadd.f32 0.0, %v1232
        %v1234 = vpop.f32.mrf.mxu0
        %v1235 = vadd.f32 0.0, %v1234
        %v1236 = vpop.f32.mrf.mxu0
        %v1237 = vpop.f32.mrf.mxu0
        %1238 = vdwg.mxu0
        %1239 = vmatprep.subr.bf16.mxu0 0
        %1240 = vmatpush1.bf16.msra.mxu0 0
        %1241 = vmatprep.subr.bf16.mxu0 0
        %1242 = vmatpush1.bf16.msra.mxu0 0
        %1243 = vmatprep.subr.bf16.mxu0 0
        %1244 = vmatpush1.bf16.msra.mxu0 0
        %1245 = vmatprep.subr.bf16.mxu0 0
        %1246 = vmatpush1.bf16.msra.mxu0 0
        %1247 = vmatprep.subr.bf16.mxu0 %v1080
        %1248 = vmatpush1.bf16.msra.mxu0 %v1079
        %1249 = vmatprep.subr.bf16.mxu0 %v1072
        %1250 = vmatpush1.bf16.msra.mxu0 %v1071
        %1251 = vmatprep.subr.bf16.mxu0 %v1064
        %1252 = vmatpush1.bf16.msra.mxu0 %v1063
        %1253 = vmatprep.subr.bf16.mxu0 %v1056
        %1254 = vmatpush1.bf16.msra.mxu0 %v1055
        %1255 = vmatprep.subr.bf16.mxu0 0
        %1256 = vmatpush2.bf16.msra.mxu0 0
        %1257 = vmatprep.subr.bf16.mxu0 0
        %1258 = vmatpush2.bf16.msra.mxu0 0
        %1259 = vmatprep.subr.bf16.mxu0 0
        %1260 = vmatpush2.bf16.msra.mxu0 0
        %1261 = vmatprep.subr.bf16.mxu0 0
        %1262 = vmatpush2.bf16.msra.mxu0 0
        %1263 = vmatprep.subr.bf16.mxu0 0
        %1264 = vmatpush2.bf16.msra.mxu0 0
        %1265 = vmatprep.subr.bf16.mxu0 0
        %1266 = vmatpush2.bf16.msra.mxu0 0
        %1267 = vmatprep.subr.bf16.mxu0 0
        %1268 = vmatpush2.bf16.msra.mxu0 0
        %1269 = vmatprep.subr.bf16.mxu0 0
        %1270 = vmatpush2.bf16.msra.mxu0 0
        %1271 = vmatprep.mubr.bf16.mxu0 0
        %1272 = vmatmul.mubr.bf16.gmra.mxu0 %v1114
        %v1273 = vpop.f32.mrf.mxu0
        %v1274 = vadd.f32 0.0, %v1273
        %v1275 = vpop.f32.mrf.mxu0
        %v1276 = vadd.f32 0.0, %v1275
        %v1277 = vpop.f32.mrf.mxu0
        %v1278 = vpop.f32.mrf.mxu0
        %1279 = vdwg.mxu0
        %v1288 = vcombine.low %v1151, %v1153
        %v1289 = vcombine.low %v1192, %v1194
        %v1291 = vunpack.c.l.s4 1983009808
        %v1292 = vunpack.c.0.s8 %v1291
        %v1293 = vlaneseq
        %v1294 = vshrl.u32 %v1293, 7
        %v1295 = vsub.s32 %v1292, %v1294
        %v1296 = vrot.slane %v1288, %v1295
        %v1298 = vunpack.c.l.s4 1983009808
        %v1299 = vunpack.c.0.s8 %v1298
        %v1300 = vlaneseq
        %v1301 = vshrl.u32 %v1300, 7
        %v1302 = vsub.s32 %v1299, %v1301
        %v1303 = vrot.slane %v1289, %v1302
        %v1304 = vcombine.low %v1296, %v1303
        %v1305 = vcombine.low %v1233, %v1235
        %v1306 = vcombine.low %v1274, %v1276
        %v1308 = vunpack.c.l.s4 1983009808
        %v1309 = vunpack.c.0.s8 %v1308
        %v1310 = vlaneseq
        %v1311 = vshrl.u32 %v1310, 7
        %v1312 = vsub.s32 %v1309, %v1311
        %v1313 = vrot.slane %v1305, %v1312
        %v1315 = vunpack.c.l.s4 1983009808
        %v1316 = vunpack.c.0.s8 %v1315
        %v1317 = vlaneseq
        %v1318 = vshrl.u32 %v1317, 7
        %v1319 = vsub.s32 %v1316, %v1318
        %v1320 = vrot.slane %v1306, %v1319
        %v1321 = vcombine.low %v1313, %v1320
        %v1324 = vadd.f32 %v951, %v1304
        %v1325 = vadd.f32 %v952, %v1321
        %1326 = vst [vmem:[#allocation2] sm:$0xff] %v1324
        %1327 = vst [vmem:[#allocation2 + $0x8] sm:$0xff] %v1325
        %v1328 = vld [vmem:[#allocation3 + $0x2] sm:$0x3]
        %v1329 = vpack.c.bf16 %v1328, %v1328
        %v1330 = vld [vmem:[%s372 + $0x100] sm:$0xff]
        %v1331 = vld [vmem:[%s372 + $0x108] sm:$0xff]
        %v1332 = vld [vmem:[%s372 + $0x110] sm:$0xff]
        %v1333 = vld [vmem:[%s372 + $0x118] sm:$0xff]
        %v1334 = vld [vmem:[%s372 + $0x120] sm:$0xff]
        %v1335 = vld [vmem:[%s372 + $0x128] sm:$0xff]
        %v1336 = vld [vmem:[%s372 + $0x130] sm:$0xff]
        %v1337 = vld [vmem:[%s372 + $0x138] sm:$0xff]
        %v1338 = vld [vmem:[%s372 + $0x140] sm:$0xff]
        %v1339 = vld [vmem:[%s372 + $0x148] sm:$0xff]
        %v1340 = vld [vmem:[%s372 + $0x150] sm:$0xff]
        %v1341 = vld [vmem:[%s372 + $0x158] sm:$0xff]
        %v1342 = vld [vmem:[%s372 + $0x160] sm:$0xff]
        %v1343 = vld [vmem:[%s372 + $0x168] sm:$0xff]
        %v1344 = vld [vmem:[%s372 + $0x170] sm:$0xff]
        %v1345 = vld [vmem:[%s372 + $0x178] sm:$0xff]
        %v1346 = vld [vmem:[%s372 + $0x180] sm:$0xff]
        %v1347 = vld [vmem:[%s372 + $0x188] sm:$0xff]
        %v1348 = vld [vmem:[%s372 + $0x190] sm:$0xff]
        %v1349 = vld [vmem:[%s372 + $0x198] sm:$0xff]
        %v1350 = vld [vmem:[%s372 + $0x1a0] sm:$0xff]
        %v1351 = vld [vmem:[%s372 + $0x1a8] sm:$0xff]
        %v1352 = vld [vmem:[%s372 + $0x1b0] sm:$0xff]
        %v1353 = vld [vmem:[%s372 + $0x1b8] sm:$0xff]
        %v1354 = vld [vmem:[%s372 + $0x1c0] sm:$0xff]
        %v1355 = vld [vmem:[%s372 + $0x1c8] sm:$0xff]
        %v1356 = vld [vmem:[%s372 + $0x1d0] sm:$0xff]
        %v1357 = vld [vmem:[%s372 + $0x1d8] sm:$0xff]
        %v1358 = vld [vmem:[%s372 + $0x1e0] sm:$0xff]
        %v1359 = vld [vmem:[%s372 + $0x1e8] sm:$0xff]
        %v1360 = vld [vmem:[%s372 + $0x1f0] sm:$0xff]
        %v1361 = vld [vmem:[%s372 + $0x1f8] sm:$0xff]
        %v1362 = vld [vmem:[#allocation2] sm:$0xff]
        %v1363 = vld [vmem:[#allocation2 + $0x8] sm:$0xff]
        %v1396 = vunpack.c.l.b16 %v1330
        %v1397 = vunpack.c.h.b16 %v1330
        %v1398 = vunpack.c.l.b16 %v1331
        %v1399 = vunpack.c.h.b16 %v1331
        %v1400 = vunpack.c.l.b16 %v1332
        %v1401 = vunpack.c.h.b16 %v1332
        %v1402 = vunpack.c.l.b16 %v1333
        %v1403 = vunpack.c.h.b16 %v1333
        %v1404 = vunpack.c.l.b16 %v1334
        %v1405 = vunpack.c.h.b16 %v1334
        %v1406 = vunpack.c.l.b16 %v1335
        %v1407 = vunpack.c.h.b16 %v1335
        %v1408 = vunpack.c.l.b16 %v1336
        %v1409 = vunpack.c.h.b16 %v1336
        %v1410 = vunpack.c.l.b16 %v1337
        %v1411 = vunpack.c.h.b16 %v1337
        %v1412 = vunpack.c.l.b16 %v1338
        %v1413 = vunpack.c.h.b16 %v1338
        %v1414 = vunpack.c.l.b16 %v1339
        %v1415 = vunpack.c.h.b16 %v1339
        %v1416 = vunpack.c.l.b16 %v1340
        %v1417 = vunpack.c.h.b16 %v1340
        %v1418 = vunpack.c.l.b16 %v1341
        %v1419 = vunpack.c.h.b16 %v1341
        %v1420 = vunpack.c.l.b16 %v1342
        %v1421 = vunpack.c.h.b16 %v1342
        %v1422 = vunpack.c.l.b16 %v1343
        %v1423 = vunpack.c.h.b16 %v1343
        %v1424 = vunpack.c.l.b16 %v1344
        %v1425 = vunpack.c.h.b16 %v1344
        %v1426 = vunpack.c.l.b16 %v1345
        %v1427 = vunpack.c.h.b16 %v1345
        %v1428 = vunpack.c.l.b16 %v1346
        %v1429 = vunpack.c.h.b16 %v1346
        %v1430 = vunpack.c.l.b16 %v1347
        %v1431 = vunpack.c.h.b16 %v1347
        %v1432 = vunpack.c.l.b16 %v1348
        %v1433 = vunpack.c.h.b16 %v1348
        %v1434 = vunpack.c.l.b16 %v1349
        %v1435 = vunpack.c.h.b16 %v1349
        %v1436 = vunpack.c.l.b16 %v1350
        %v1437 = vunpack.c.h.b16 %v1350
        %v1438 = vunpack.c.l.b16 %v1351
        %v1439 = vunpack.c.h.b16 %v1351
        %v1440 = vunpack.c.l.b16 %v1352
        %v1441 = vunpack.c.h.b16 %v1352
        %v1442 = vunpack.c.l.b16 %v1353
        %v1443 = vunpack.c.h.b16 %v1353
        %v1444 = vunpack.c.l.b16 %v1354
        %v1445 = vunpack.c.h.b16 %v1354
        %v1446 = vunpack.c.l.b16 %v1355
        %v1447 = vunpack.c.h.b16 %v1355
        %v1448 = vunpack.c.l.b16 %v1356
        %v1449 = vunpack.c.h.b16 %v1356
        %v1450 = vunpack.c.l.b16 %v1357
        %v1451 = vunpack.c.h.b16 %v1357
        %v1452 = vunpack.c.l.b16 %v1358
        %v1453 = vunpack.c.h.b16 %v1358
        %v1454 = vunpack.c.l.b16 %v1359
        %v1455 = vunpack.c.h.b16 %v1359
        %v1456 = vunpack.c.l.b16 %v1360
        %v1457 = vunpack.c.h.b16 %v1360
        %v1458 = vunpack.c.l.b16 %v1361
        %v1459 = vunpack.c.h.b16 %v1361
        %v1460 = vpack.c.b16 %v1404, %v1396
        %v1461 = vpack.c.b16 %v1405, %v1397
        %v1462 = vpack.c.b16 %v1406, %v1398
        %v1463 = vpack.c.b16 %v1407, %v1399
        %v1464 = vpack.c.b16 %v1408, %v1400
        %v1465 = vpack.c.b16 %v1409, %v1401
        %v1466 = vpack.c.b16 %v1410, %v1402
        %v1467 = vpack.c.b16 %v1411, %v1403
        %v1468 = vpack.c.b16 %v1420, %v1412
        %v1469 = vpack.c.b16 %v1421, %v1413
        %v1470 = vpack.c.b16 %v1422, %v1414
        %v1471 = vpack.c.b16 %v1423, %v1415
        %v1472 = vpack.c.b16 %v1424, %v1416
        %v1473 = vpack.c.b16 %v1425, %v1417
        %v1474 = vpack.c.b16 %v1426, %v1418
        %v1475 = vpack.c.b16 %v1427, %v1419
        %v1476 = vpack.c.b16 %v1436, %v1428
        %v1477 = vpack.c.b16 %v1437, %v1429
        %v1478 = vpack.c.b16 %v1438, %v1430
        %v1479 = vpack.c.b16 %v1439, %v1431
        %v1480 = vpack.c.b16 %v1440, %v1432
        %v1481 = vpack.c.b16 %v1441, %v1433
        %v1482 = vpack.c.b16 %v1442, %v1434
        %v1483 = vpack.c.b16 %v1443, %v1435
        %v1484 = vpack.c.b16 %v1452, %v1444
        %v1485 = vpack.c.b16 %v1453, %v1445
        %v1486 = vpack.c.b16 %v1454, %v1446
        %v1487 = vpack.c.b16 %v1455, %v1447
        %v1488 = vpack.c.b16 %v1456, %v1448
        %v1489 = vpack.c.b16 %v1457, %v1449
        %v1490 = vpack.c.b16 %v1458, %v1450
        %v1491 = vpack.c.b16 %v1459, %v1451
        %v1525 = vsel %vm914, %v1329, 0
        %1527 = vmatprep.subr.bf16.mxu0 0
        %1528 = vmatpush1.bf16.msra.mxu0 0
        %1529 = vmatprep.subr.bf16.mxu0 0
        %1530 = vmatpush1.bf16.msra.mxu0 0
        %1531 = vmatprep.subr.bf16.mxu0 0
        %1532 = vmatpush1.bf16.msra.mxu0 0
        %1533 = vmatprep.subr.bf16.mxu0 0
        %1534 = vmatpush1.bf16.msra.mxu0 0
        %1535 = vmatprep.subr.bf16.mxu0 %v1485
        %1536 = vmatpush1.bf16.msra.mxu0 %v1484
        %1537 = vmatprep.subr.bf16.mxu0 %v1477
        %1538 = vmatpush1.bf16.msra.mxu0 %v1476
        %1539 = vmatprep.subr.bf16.mxu0 %v1469
        %1540 = vmatpush1.bf16.msra.mxu0 %v1468
        %1541 = vmatprep.subr.bf16.mxu0 %v1461
        %1542 = vmatpush1.bf16.msra.mxu0 %v1460
        %1543 = vmatprep.subr.bf16.mxu0 0
        %1544 = vmatpush2.bf16.msra.mxu0 0
        %1545 = vmatprep.subr.bf16.mxu0 0
        %1546 = vmatpush2.bf16.msra.mxu0 0
        %1547 = vmatprep.subr.bf16.mxu0 0
        %1548 = vmatpush2.bf16.msra.mxu0 0
        %1549 = vmatprep.subr.bf16.mxu0 0
        %1550 = vmatpush2.bf16.msra.mxu0 0
        %1551 = vmatprep.subr.bf16.mxu0 0
        %1552 = vmatpush2.bf16.msra.mxu0 0
        %1553 = vmatprep.subr.bf16.mxu0 0
        %1554 = vmatpush2.bf16.msra.mxu0 0
        %1555 = vmatprep.subr.bf16.mxu0 0
        %1556 = vmatpush2.bf16.msra.mxu0 0
        %1557 = vmatprep.subr.bf16.mxu0 0
        %1558 = vmatpush2.bf16.msra.mxu0 0
        %1559 = vmatprep.mubr.bf16.mxu0 0
        %1560 = vmatmul.mubr.bf16.gmra.mxu0 %v1525
        %v1561 = vpop.f32.mrf.mxu0
        %v1562 = vadd.f32 0.0, %v1561
        %v1563 = vpop.f32.mrf.mxu0
        %v1564 = vadd.f32 0.0, %v1563
        %v1565 = vpop.f32.mrf.mxu0
        %v1566 = vpop.f32.mrf.mxu0
        %1567 = vdwg.mxu0
        %1568 = vmatprep.subr.bf16.mxu0 0
        %1569 = vmatpush1.bf16.msra.mxu0 0
        %1570 = vmatprep.subr.bf16.mxu0 0
        %1571 = vmatpush1.bf16.msra.mxu0 0
        %1572 = vmatprep.subr.bf16.mxu0 0
        %1573 = vmatpush1.bf16.msra.mxu0 0
        %1574 = vmatprep.subr.bf16.mxu0 0
        %1575 = vmatpush1.bf16.msra.mxu0 0
        %1576 = vmatprep.subr.bf16.mxu0 %v1487
        %1577 = vmatpush1.bf16.msra.mxu0 %v1486
        %1578 = vmatprep.subr.bf16.mxu0 %v1479
        %1579 = vmatpush1.bf16.msra.mxu0 %v1478
        %1580 = vmatprep.subr.bf16.mxu0 %v1471
        %1581 = vmatpush1.bf16.msra.mxu0 %v1470
        %1582 = vmatprep.subr.bf16.mxu0 %v1463
        %1583 = vmatpush1.bf16.msra.mxu0 %v1462
        %1584 = vmatprep.subr.bf16.mxu0 0
        %1585 = vmatpush2.bf16.msra.mxu0 0
        %1586 = vmatprep.subr.bf16.mxu0 0
        %1587 = vmatpush2.bf16.msra.mxu0 0
        %1588 = vmatprep.subr.bf16.mxu0 0
        %1589 = vmatpush2.bf16.msra.mxu0 0
        %1590 = vmatprep.subr.bf16.mxu0 0
        %1591 = vmatpush2.bf16.msra.mxu0 0
        %1592 = vmatprep.subr.bf16.mxu0 0
        %1593 = vmatpush2.bf16.msra.mxu0 0
        %1594 = vmatprep.subr.bf16.mxu0 0
        %1595 = vmatpush2.bf16.msra.mxu0 0
        %1596 = vmatprep.subr.bf16.mxu0 0
        %1597 = vmatpush2.bf16.msra.mxu0 0
        %1598 = vmatprep.subr.bf16.mxu0 0
        %1599 = vmatpush2.bf16.msra.mxu0 0
        %1600 = vmatprep.mubr.bf16.mxu0 0
        %1601 = vmatmul.mubr.bf16.gmra.mxu0 %v1525
        %v1602 = vpop.f32.mrf.mxu0
        %v1603 = vadd.f32 0.0, %v1602
        %v1604 = vpop.f32.mrf.mxu0
        %v1605 = vadd.f32 0.0, %v1604
        %v1606 = vpop.f32.mrf.mxu0
        %v1607 = vpop.f32.mrf.mxu0
        %1608 = vdwg.mxu0
        %1609 = vmatprep.subr.bf16.mxu0 0
        %1610 = vmatpush1.bf16.msra.mxu0 0
        %1611 = vmatprep.subr.bf16.mxu0 0
        %1612 = vmatpush1.bf16.msra.mxu0 0
        %1613 = vmatprep.subr.bf16.mxu0 0
        %1614 = vmatpush1.bf16.msra.mxu0 0
        %1615 = vmatprep.subr.bf16.mxu0 0
        %1616 = vmatpush1.bf16.msra.mxu0 0
        %1617 = vmatprep.subr.bf16.mxu0 %v1489
        %1618 = vmatpush1.bf16.msra.mxu0 %v1488
        %1619 = vmatprep.subr.bf16.mxu0 %v1481
        %1620 = vmatpush1.bf16.msra.mxu0 %v1480
        %1621 = vmatprep.subr.bf16.mxu0 %v1473
        %1622 = vmatpush1.bf16.msra.mxu0 %v1472
        %1623 = vmatprep.subr.bf16.mxu0 %v1465
        %1624 = vmatpush1.bf16.msra.mxu0 %v1464
        %1625 = vmatprep.subr.bf16.mxu0 0
        %1626 = vmatpush2.bf16.msra.mxu0 0
        %1627 = vmatprep.subr.bf16.mxu0 0
        %1628 = vmatpush2.bf16.msra.mxu0 0
        %1629 = vmatprep.subr.bf16.mxu0 0
        %1630 = vmatpush2.bf16.msra.mxu0 0
        %1631 = vmatprep.subr.bf16.mxu0 0
        %1632 = vmatpush2.bf16.msra.mxu0 0
        %1633 = vmatprep.subr.bf16.mxu0 0
        %1634 = vmatpush2.bf16.msra.mxu0 0
        %1635 = vmatprep.subr.bf16.mxu0 0
        %1636 = vmatpush2.bf16.msra.mxu0 0
        %1637 = vmatprep.subr.bf16.mxu0 0
        %1638 = vmatpush2.bf16.msra.mxu0 0
        %1639 = vmatprep.subr.bf16.mxu0 0
        %1640 = vmatpush2.bf16.msra.mxu0 0
        %1641 = vmatprep.mubr.bf16.mxu0 0
        %1642 = vmatmul.mubr.bf16.gmra.mxu0 %v1525
        %v1643 = vpop.f32.mrf.mxu0
        %v1644 = vadd.f32 0.0, %v1643
        %v1645 = vpop.f32.mrf.mxu0
        %v1646 = vadd.f32 0.0, %v1645
        %v1647 = vpop.f32.mrf.mxu0
        %v1648 = vpop.f32.mrf.mxu0
        %1649 = vdwg.mxu0
        %1650 = vmatprep.subr.bf16.mxu0 0
        %1651 = vmatpush1.bf16.msra.mxu0 0
        %1652 = vmatprep.subr.bf16.mxu0 0
        %1653 = vmatpush1.bf16.msra.mxu0 0
        %1654 = vmatprep.subr.bf16.mxu0 0
        %1655 = vmatpush1.bf16.msra.mxu0 0
        %1656 = vmatprep.subr.bf16.mxu0 0
        %1657 = vmatpush1.bf16.msra.mxu0 0
        %1658 = vmatprep.subr.bf16.mxu0 %v1491
        %1659 = vmatpush1.bf16.msra.mxu0 %v1490
        %1660 = vmatprep.subr.bf16.mxu0 %v1483
        %1661 = vmatpush1.bf16.msra.mxu0 %v1482
        %1662 = vmatprep.subr.bf16.mxu0 %v1475
        %1663 = vmatpush1.bf16.msra.mxu0 %v1474
        %1664 = vmatprep.subr.bf16.mxu0 %v1467
        %1665 = vmatpush1.bf16.msra.mxu0 %v1466
        %1666 = vmatprep.subr.bf16.mxu0 0
        %1667 = vmatpush2.bf16.msra.mxu0 0
        %1668 = vmatprep.subr.bf16.mxu0 0
        %1669 = vmatpush2.bf16.msra.mxu0 0
        %1670 = vmatprep.subr.bf16.mxu0 0
        %1671 = vmatpush2.bf16.msra.mxu0 0
        %1672 = vmatprep.subr.bf16.mxu0 0
        %1673 = vmatpush2.bf16.msra.mxu0 0
        %1674 = vmatprep.subr.bf16.mxu0 0
        %1675 = vmatpush2.bf16.msra.mxu0 0
        %1676 = vmatprep.subr.bf16.mxu0 0
        %1677 = vmatpush2.bf16.msra.mxu0 0
        %1678 = vmatprep.subr.bf16.mxu0 0
        %1679 = vmatpush2.bf16.msra.mxu0 0
        %1680 = vmatprep.subr.bf16.mxu0 0
        %1681 = vmatpush2.bf16.msra.mxu0 0
        %1682 = vmatprep.mubr.bf16.mxu0 0
        %1683 = vmatmul.mubr.bf16.gmra.mxu0 %v1525
        %v1684 = vpop.f32.mrf.mxu0
        %v1685 = vadd.f32 0.0, %v1684
        %v1686 = vpop.f32.mrf.mxu0
        %v1687 = vadd.f32 0.0, %v1686
        %v1688 = vpop.f32.mrf.mxu0
        %v1689 = vpop.f32.mrf.mxu0
        %1690 = vdwg.mxu0
        %v1699 = vcombine.low %v1562, %v1564
        %v1700 = vcombine.low %v1603, %v1605
        %v1702 = vunpack.c.l.s4 1983009808
        %v1703 = vunpack.c.0.s8 %v1702
        %v1704 = vlaneseq
        %v1705 = vshrl.u32 %v1704, 7
        %v1706 = vsub.s32 %v1703, %v1705
        %v1707 = vrot.slane %v1699, %v1706
        %v1709 = vunpack.c.l.s4 1983009808
        %v1710 = vunpack.c.0.s8 %v1709
        %v1711 = vlaneseq
        %v1712 = vshrl.u32 %v1711, 7
        %v1713 = vsub.s32 %v1710, %v1712
        %v1714 = vrot.slane %v1700, %v1713
        %v1715 = vcombine.low %v1707, %v1714
        %v1716 = vcombine.low %v1644, %v1646
        %v1717 = vcombine.low %v1685, %v1687
        %v1719 = vunpack.c.l.s4 1983009808
        %v1720 = vunpack.c.0.s8 %v1719
        %v1721 = vlaneseq
        %v1722 = vshrl.u32 %v1721, 7
        %v1723 = vsub.s32 %v1720, %v1722
        %v1724 = vrot.slane %v1716, %v1723
        %v1726 = vunpack.c.l.s4 1983009808
        %v1727 = vunpack.c.0.s8 %v1726
        %v1728 = vlaneseq
        %v1729 = vshrl.u32 %v1728, 7
        %v1730 = vsub.s32 %v1727, %v1729
        %v1731 = vrot.slane %v1717, %v1730
        %v1732 = vcombine.low %v1724, %v1731
        %v1735 = vadd.f32 %v1362, %v1715
        %v1736 = vadd.f32 %v1363, %v1732
        %1737 = vst [vmem:[#allocation2] sm:$0xff] %v1735
        %1738 = vst [vmem:[#allocation2 + $0x8] sm:$0xff] %v1736
        %v1739 = vld [vmem:[#allocation3 + $0x4] sm:$0x3]
        %v1740 = vpack.c.bf16 %v1739, %v1739
        %v1741 = vld [vmem:[%s372 + $0x200] sm:$0xff]
        %v1742 = vld [vmem:[%s372 + $0x208] sm:$0xff]
        %v1743 = vld [vmem:[%s372 + $0x210] sm:$0xff]
        %v1744 = vld [vmem:[%s372 + $0x218] sm:$0xff]
        %v1745 = vld [vmem:[%s372 + $0x220] sm:$0xff]
        %v1746 = vld [vmem:[%s372 + $0x228] sm:$0xff]
        %v1747 = vld [vmem:[%s372 + $0x230] sm:$0xff]
        %v1748 = vld [vmem:[%s372 + $0x238] sm:$0xff]
        %v1749 = vld [vmem:[%s372 + $0x240] sm:$0xff]
        %v1750 = vld [vmem:[%s372 + $0x248] sm:$0xff]
        %v1751 = vld [vmem:[%s372 + $0x250] sm:$0xff]
        %v1752 = vld [vmem:[%s372 + $0x258] sm:$0xff]
        %v1753 = vld [vmem:[%s372 + $0x260] sm:$0xff]
        %v1754 = vld [vmem:[%s372 + $0x268] sm:$0xff]
        %v1755 = vld [vmem:[%s372 + $0x270] sm:$0xff]
        %v1756 = vld [vmem:[%s372 + $0x278] sm:$0xff]
        %v1757 = vld [vmem:[%s372 + $0x280] sm:$0xff]
        %v1758 = vld [vmem:[%s372 + $0x288] sm:$0xff]
        %v1759 = vld [vmem:[%s372 + $0x290] sm:$0xff]
        %v1760 = vld [vmem:[%s372 + $0x298] sm:$0xff]
        %v1761 = vld [vmem:[%s372 + $0x2a0] sm:$0xff]
        %v1762 = vld [vmem:[%s372 + $0x2a8] sm:$0xff]
        %v1763 = vld [vmem:[%s372 + $0x2b0] sm:$0xff]
        %v1764 = vld [vmem:[%s372 + $0x2b8] sm:$0xff]
        %v1765 = vld [vmem:[%s372 + $0x2c0] sm:$0xff]
        %v1766 = vld [vmem:[%s372 + $0x2c8] sm:$0xff]
        %v1767 = vld [vmem:[%s372 + $0x2d0] sm:$0xff]
        %v1768 = vld [vmem:[%s372 + $0x2d8] sm:$0xff]
        %v1769 = vld [vmem:[%s372 + $0x2e0] sm:$0xff]
        %v1770 = vld [vmem:[%s372 + $0x2e8] sm:$0xff]
        %v1771 = vld [vmem:[%s372 + $0x2f0] sm:$0xff]
        %v1772 = vld [vmem:[%s372 + $0x2f8] sm:$0xff]
        %v1773 = vld [vmem:[#allocation2] sm:$0xff]
        %v1774 = vld [vmem:[#allocation2 + $0x8] sm:$0xff]
        %v1807 = vunpack.c.l.b16 %v1741
        %v1808 = vunpack.c.h.b16 %v1741
        %v1809 = vunpack.c.l.b16 %v1742
        %v1810 = vunpack.c.h.b16 %v1742
        %v1811 = vunpack.c.l.b16 %v1743
        %v1812 = vunpack.c.h.b16 %v1743
        %v1813 = vunpack.c.l.b16 %v1744
        %v1814 = vunpack.c.h.b16 %v1744
        %v1815 = vunpack.c.l.b16 %v1745
        %v1816 = vunpack.c.h.b16 %v1745
        %v1817 = vunpack.c.l.b16 %v1746
        %v1818 = vunpack.c.h.b16 %v1746
        %v1819 = vunpack.c.l.b16 %v1747
        %v1820 = vunpack.c.h.b16 %v1747
        %v1821 = vunpack.c.l.b16 %v1748
        %v1822 = vunpack.c.h.b16 %v1748
        %v1823 = vunpack.c.l.b16 %v1749
        %v1824 = vunpack.c.h.b16 %v1749
        %v1825 = vunpack.c.l.b16 %v1750
        %v1826 = vunpack.c.h.b16 %v1750
        %v1827 = vunpack.c.l.b16 %v1751
        %v1828 = vunpack.c.h.b16 %v1751
        %v1829 = vunpack.c.l.b16 %v1752
        %v1830 = vunpack.c.h.b16 %v1752
        %v1831 = vunpack.c.l.b16 %v1753
        %v1832 = vunpack.c.h.b16 %v1753
        %v1833 = vunpack.c.l.b16 %v1754
        %v1834 = vunpack.c.h.b16 %v1754
        %v1835 = vunpack.c.l.b16 %v1755
        %v1836 = vunpack.c.h.b16 %v1755
        %v1837 = vunpack.c.l.b16 %v1756
        %v1838 = vunpack.c.h.b16 %v1756
        %v1839 = vunpack.c.l.b16 %v1757
        %v1840 = vunpack.c.h.b16 %v1757
        %v1841 = vunpack.c.l.b16 %v1758
        %v1842 = vunpack.c.h.b16 %v1758
        %v1843 = vunpack.c.l.b16 %v1759
        %v1844 = vunpack.c.h.b16 %v1759
        %v1845 = vunpack.c.l.b16 %v1760
        %v1846 = vunpack.c.h.b16 %v1760
        %v1847 = vunpack.c.l.b16 %v1761
        %v1848 = vunpack.c.h.b16 %v1761
        %v1849 = vunpack.c.l.b16 %v1762
        %v1850 = vunpack.c.h.b16 %v1762
        %v1851 = vunpack.c.l.b16 %v1763
        %v1852 = vunpack.c.h.b16 %v1763
        %v1853 = vunpack.c.l.b16 %v1764
        %v1854 = vunpack.c.h.b16 %v1764
        %v1855 = vunpack.c.l.b16 %v1765
        %v1856 = vunpack.c.h.b16 %v1765
        %v1857 = vunpack.c.l.b16 %v1766
        %v1858 = vunpack.c.h.b16 %v1766
        %v1859 = vunpack.c.l.b16 %v1767
        %v1860 = vunpack.c.h.b16 %v1767
        %v1861 = vunpack.c.l.b16 %v1768
        %v1862 = vunpack.c.h.b16 %v1768
        %v1863 = vunpack.c.l.b16 %v1769
        %v1864 = vunpack.c.h.b16 %v1769
        %v1865 = vunpack.c.l.b16 %v1770
        %v1866 = vunpack.c.h.b16 %v1770
        %v1867 = vunpack.c.l.b16 %v1771
        %v1868 = vunpack.c.h.b16 %v1771
        %v1869 = vunpack.c.l.b16 %v1772
        %v1870 = vunpack.c.h.b16 %v1772
        %v1871 = vpack.c.b16 %v1815, %v1807
        %v1872 = vpack.c.b16 %v1816, %v1808
        %v1873 = vpack.c.b16 %v1817, %v1809
        %v1874 = vpack.c.b16 %v1818, %v1810
        %v1875 = vpack.c.b16 %v1819, %v1811
        %v1876 = vpack.c.b16 %v1820, %v1812
        %v1877 = vpack.c.b16 %v1821, %v1813
        %v1878 = vpack.c.b16 %v1822, %v1814
        %v1879 = vpack.c.b16 %v1831, %v1823
        %v1880 = vpack.c.b16 %v1832, %v1824
        %v1881 = vpack.c.b16 %v1833, %v1825
        %v1882 = vpack.c.b16 %v1834, %v1826
        %v1883 = vpack.c.b16 %v1835, %v1827
        %v1884 = vpack.c.b16 %v1836, %v1828
        %v1885 = vpack.c.b16 %v1837, %v1829
        %v1886 = vpack.c.b16 %v1838, %v1830
        %v1887 = vpack.c.b16 %v1847, %v1839
        %v1888 = vpack.c.b16 %v1848, %v1840
        %v1889 = vpack.c.b16 %v1849, %v1841
        %v1890 = vpack.c.b16 %v1850, %v1842
        %v1891 = vpack.c.b16 %v1851, %v1843
        %v1892 = vpack.c.b16 %v1852, %v1844
        %v1893 = vpack.c.b16 %v1853, %v1845
        %v1894 = vpack.c.b16 %v1854, %v1846
        %v1895 = vpack.c.b16 %v1863, %v1855
        %v1896 = vpack.c.b16 %v1864, %v1856
        %v1897 = vpack.c.b16 %v1865, %v1857
        %v1898 = vpack.c.b16 %v1866, %v1858
        %v1899 = vpack.c.b16 %v1867, %v1859
        %v1900 = vpack.c.b16 %v1868, %v1860
        %v1901 = vpack.c.b16 %v1869, %v1861
        %v1902 = vpack.c.b16 %v1870, %v1862
        %v1936 = vsel %vm914, %v1740, 0
        %1938 = vmatprep.subr.bf16.mxu0 0
        %1939 = vmatpush1.bf16.msra.mxu0 0
        %1940 = vmatprep.subr.bf16.mxu0 0
        %1941 = vmatpush1.bf16.msra.mxu0 0
        %1942 = vmatprep.subr.bf16.mxu0 0
        %1943 = vmatpush1.bf16.msra.mxu0 0
        %1944 = vmatprep.subr.bf16.mxu0 0
        %1945 = vmatpush1.bf16.msra.mxu0 0
        %1946 = vmatprep.subr.bf16.mxu0 %v1896
        %1947 = vmatpush1.bf16.msra.mxu0 %v1895
        %1948 = vmatprep.subr.bf16.mxu0 %v1888
        %1949 = vmatpush1.bf16.msra.mxu0 %v1887
        %1950 = vmatprep.subr.bf16.mxu0 %v1880
        %1951 = vmatpush1.bf16.msra.mxu0 %v1879
        %1952 = vmatprep.subr.bf16.mxu0 %v1872
        %1953 = vmatpush1.bf16.msra.mxu0 %v1871
        %1954 = vmatprep.subr.bf16.mxu0 0
        %1955 = vmatpush2.bf16.msra.mxu0 0
        %1956 = vmatprep.subr.bf16.mxu0 0
        %1957 = vmatpush2.bf16.msra.mxu0 0
        %1958 = vmatprep.subr.bf16.mxu0 0
        %1959 = vmatpush2.bf16.msra.mxu0 0
        %1960 = vmatprep.subr.bf16.mxu0 0
        %1961 = vmatpush2.bf16.msra.mxu0 0
        %1962 = vmatprep.subr.bf16.mxu0 0
        %1963 = vmatpush2.bf16.msra.mxu0 0
        %1964 = vmatprep.subr.bf16.mxu0 0
        %1965 = vmatpush2.bf16.msra.mxu0 0
        %1966 = vmatprep.subr.bf16.mxu0 0
        %1967 = vmatpush2.bf16.msra.mxu0 0
        %1968 = vmatprep.subr.bf16.mxu0 0
        %1969 = vmatpush2.bf16.msra.mxu0 0
        %1970 = vmatprep.mubr.bf16.mxu0 0
        %1971 = vmatmul.mubr.bf16.gmra.mxu0 %v1936
        %v1972 = vpop.f32.mrf.mxu0
        %v1973 = vadd.f32 0.0, %v1972
        %v1974 = vpop.f32.mrf.mxu0
        %v1975 = vadd.f32 0.0, %v1974
        %v1976 = vpop.f32.mrf.mxu0
        %v1977 = vpop.f32.mrf.mxu0
        %1978 = vdwg.mxu0
        %1979 = vmatprep.subr.bf16.mxu0 0
        %1980 = vmatpush1.bf16.msra.mxu0 0
        %1981 = vmatprep.subr.bf16.mxu0 0
        %1982 = vmatpush1.bf16.msra.mxu0 0
        %1983 = vmatprep.subr.bf16.mxu0 0
        %1984 = vmatpush1.bf16.msra.mxu0 0
        %1985 = vmatprep.subr.bf16.mxu0 0
        %1986 = vmatpush1.bf16.msra.mxu0 0
        %1987 = vmatprep.subr.bf16.mxu0 %v1898
        %1988 = vmatpush1.bf16.msra.mxu0 %v1897
        %1989 = vmatprep.subr.bf16.mxu0 %v1890
        %1990 = vmatpush1.bf16.msra.mxu0 %v1889
        %1991 = vmatprep.subr.bf16.mxu0 %v1882
        %1992 = vmatpush1.bf16.msra.mxu0 %v1881
        %1993 = vmatprep.subr.bf16.mxu0 %v1874
        %1994 = vmatpush1.bf16.msra.mxu0 %v1873
        %1995 = vmatprep.subr.bf16.mxu0 0
        %1996 = vmatpush2.bf16.msra.mxu0 0
        %1997 = vmatprep.subr.bf16.mxu0 0
        %1998 = vmatpush2.bf16.msra.mxu0 0
        %1999 = vmatprep.subr.bf16.mxu0 0
        %2000 = vmatpush2.bf16.msra.mxu0 0
        %2001 = vmatprep.subr.bf16.mxu0 0
        %2002 = vmatpush2.bf16.msra.mxu0 0
        %2003 = vmatprep.subr.bf16.mxu0 0
        %2004 = vmatpush2.bf16.msra.mxu0 0
        %2005 = vmatprep.subr.bf16.mxu0 0
        %2006 = vmatpush2.bf16.msra.mxu0 0
        %2007 = vmatprep.subr.bf16.mxu0 0
        %2008 = vmatpush2.bf16.msra.mxu0 0
        %2009 = vmatprep.subr.bf16.mxu0 0
        %2010 = vmatpush2.bf16.msra.mxu0 0
        %2011 = vmatprep.mubr.bf16.mxu0 0
        %2012 = vmatmul.mubr.bf16.gmra.mxu0 %v1936
        %v2013 = vpop.f32.mrf.mxu0
        %v2014 = vadd.f32 0.0, %v2013
        %v2015 = vpop.f32.mrf.mxu0
        %v2016 = vadd.f32 0.0, %v2015
        %v2017 = vpop.f32.mrf.mxu0
        %v2018 = vpop.f32.mrf.mxu0
        %2019 = vdwg.mxu0
        %2020 = vmatprep.subr.bf16.mxu0 0
        %2021 = vmatpush1.bf16.msra.mxu0 0
        %2022 = vmatprep.subr.bf16.mxu0 0
        %2023 = vmatpush1.bf16.msra.mxu0 0
        %2024 = vmatprep.subr.bf16.mxu0 0
        %2025 = vmatpush1.bf16.msra.mxu0 0
        %2026 = vmatprep.subr.bf16.mxu0 0
        %2027 = vmatpush1.bf16.msra.mxu0 0
        %2028 = vmatprep.subr.bf16.mxu0 %v1900
        %2029 = vmatpush1.bf16.msra.mxu0 %v1899
        %2030 = vmatprep.subr.bf16.mxu0 %v1892
        %2031 = vmatpush1.bf16.msra.mxu0 %v1891
        %2032 = vmatprep.subr.bf16.mxu0 %v1884
        %2033 = vmatpush1.bf16.msra.mxu0 %v1883
        %2034 = vmatprep.subr.bf16.mxu0 %v1876
        %2035 = vmatpush1.bf16.msra.mxu0 %v1875
        %2036 = vmatprep.subr.bf16.mxu0 0
        %2037 = vmatpush2.bf16.msra.mxu0 0
        %2038 = vmatprep.subr.bf16.mxu0 0
        %2039 = vmatpush2.bf16.msra.mxu0 0
        %2040 = vmatprep.subr.bf16.mxu0 0
        %2041 = vmatpush2.bf16.msra.mxu0 0
        %2042 = vmatprep.subr.bf16.mxu0 0
        %2043 = vmatpush2.bf16.msra.mxu0 0
        %2044 = vmatprep.subr.bf16.mxu0 0
        %2045 = vmatpush2.bf16.msra.mxu0 0
        %2046 = vmatprep.subr.bf16.mxu0 0
        %2047 = vmatpush2.bf16.msra.mxu0 0
        %2048 = vmatprep.subr.bf16.mxu0 0
        %2049 = vmatpush2.bf16.msra.mxu0 0
        %2050 = vmatprep.subr.bf16.mxu0 0
        %2051 = vmatpush2.bf16.msra.mxu0 0
        %2052 = vmatprep.mubr.bf16.mxu0 0
        %2053 = vmatmul.mubr.bf16.gmra.mxu0 %v1936
        %v2054 = vpop.f32.mrf.mxu0
        %v2055 = vadd.f32 0.0, %v2054
        %v2056 = vpop.f32.mrf.mxu0
        %v2057 = vadd.f32 0.0, %v2056
        %v2058 = vpop.f32.mrf.mxu0
        %v2059 = vpop.f32.mrf.mxu0
        %2060 = vdwg.mxu0
        %2061 = vmatprep.subr.bf16.mxu0 0
        %2062 = vmatpush1.bf16.msra.mxu0 0
        %2063 = vmatprep.subr.bf16.mxu0 0
        %2064 = vmatpush1.bf16.msra.mxu0 0
        %2065 = vmatprep.subr.bf16.mxu0 0
        %2066 = vmatpush1.bf16.msra.mxu0 0
        %2067 = vmatprep.subr.bf16.mxu0 0
        %2068 = vmatpush1.bf16.msra.mxu0 0
        %2069 = vmatprep.subr.bf16.mxu0 %v1902
        %2070 = vmatpush1.bf16.msra.mxu0 %v1901
        %2071 = vmatprep.subr.bf16.mxu0 %v1894
        %2072 = vmatpush1.bf16.msra.mxu0 %v1893
        %2073 = vmatprep.subr.bf16.mxu0 %v1886
        %2074 = vmatpush1.bf16.msra.mxu0 %v1885
        %2075 = vmatprep.subr.bf16.mxu0 %v1878
        %2076 = vmatpush1.bf16.msra.mxu0 %v1877
        %2077 = vmatprep.subr.bf16.mxu0 0
        %2078 = vmatpush2.bf16.msra.mxu0 0
        %2079 = vmatprep.subr.bf16.mxu0 0
        %2080 = vmatpush2.bf16.msra.mxu0 0
        %2081 = vmatprep.subr.bf16.mxu0 0
        %2082 = vmatpush2.bf16.msra.mxu0 0
        %2083 = vmatprep.subr.bf16.mxu0 0
        %2084 = vmatpush2.bf16.msra.mxu0 0
        %2085 = vmatprep.subr.bf16.mxu0 0
        %2086 = vmatpush2.bf16.msra.mxu0 0
        %2087 = vmatprep.subr.bf16.mxu0 0
        %2088 = vmatpush2.bf16.msra.mxu0 0
        %2089 = vmatprep.subr.bf16.mxu0 0
        %2090 = vmatpush2.bf16.msra.mxu0 0
        %2091 = vmatprep.subr.bf16.mxu0 0
        %2092 = vmatpush2.bf16.msra.mxu0 0
        %2093 = vmatprep.mubr.bf16.mxu0 0
        %2094 = vmatmul.mubr.bf16.gmra.mxu0 %v1936
        %v2095 = vpop.f32.mrf.mxu0
        %v2096 = vadd.f32 0.0, %v2095
        %v2097 = vpop.f32.mrf.mxu0
        %v2098 = vadd.f32 0.0, %v2097
        %v2099 = vpop.f32.mrf.mxu0
        %v2100 = vpop.f32.mrf.mxu0
        %2101 = vdwg.mxu0
        %v2110 = vcombine.low %v1973, %v1975
        %v2111 = vcombine.low %v2014, %v2016
        %v2113 = vunpack.c.l.s4 1983009808
        %v2114 = vunpack.c.0.s8 %v2113
        %v2115 = vlaneseq
        %v2116 = vshrl.u32 %v2115, 7
        %v2117 = vsub.s32 %v2114, %v2116
        %v2118 = vrot.slane %v2110, %v2117
        %v2120 = vunpack.c.l.s4 1983009808
        %v2121 = vunpack.c.0.s8 %v2120
        %v2122 = vlaneseq
        %v2123 = vshrl.u32 %v2122, 7
        %v2124 = vsub.s32 %v2121, %v2123
        %v2125 = vrot.slane %v2111, %v2124
        %v2126 = vcombine.low %v2118, %v2125
        %v2127 = vcombine.low %v2055, %v2057
        %v2128 = vcombine.low %v2096, %v2098
        %v2130 = vunpack.c.l.s4 1983009808
        %v2131 = vunpack.c.0.s8 %v2130
        %v2132 = vlaneseq
        %v2133 = vshrl.u32 %v2132, 7
        %v2134 = vsub.s32 %v2131, %v2133
        %v2135 = vrot.slane %v2127, %v2134
        %v2137 = vunpack.c.l.s4 1983009808
        %v2138 = vunpack.c.0.s8 %v2137
        %v2139 = vlaneseq
        %v2140 = vshrl.u32 %v2139, 7
        %v2141 = vsub.s32 %v2138, %v2140
        %v2142 = vrot.slane %v2128, %v2141
        %v2143 = vcombine.low %v2135, %v2142
        %v2146 = vadd.f32 %v1773, %v2126
        %v2147 = vadd.f32 %v1774, %v2143
        %2148 = vst [vmem:[#allocation2] sm:$0xff] %v2146
        %2149 = vst [vmem:[#allocation2 + $0x8] sm:$0xff] %v2147
        %v2150 = vld [vmem:[#allocation3 + $0x6] sm:$0x3]
        %v2151 = vpack.c.bf16 %v2150, %v2150
        %v2152 = vld [vmem:[%s372 + $0x300] sm:$0xff]
        %v2153 = vld [vmem:[%s372 + $0x308] sm:$0xff]
        %v2154 = vld [vmem:[%s372 + $0x310] sm:$0xff]
        %v2155 = vld [vmem:[%s372 + $0x318] sm:$0xff]
        %v2156 = vld [vmem:[%s372 + $0x320] sm:$0xff]
        %v2157 = vld [vmem:[%s372 + $0x328] sm:$0xff]
        %v2158 = vld [vmem:[%s372 + $0x330] sm:$0xff]
        %v2159 = vld [vmem:[%s372 + $0x338] sm:$0xff]
        %v2160 = vld [vmem:[%s372 + $0x340] sm:$0xff]
        %v2161 = vld [vmem:[%s372 + $0x348] sm:$0xff]
        %v2162 = vld [vmem:[%s372 + $0x350] sm:$0xff]
        %v2163 = vld [vmem:[%s372 + $0x358] sm:$0xff]
        %v2164 = vld [vmem:[%s372 + $0x360] sm:$0xff]
        %v2165 = vld [vmem:[%s372 + $0x368] sm:$0xff]
        %v2166 = vld [vmem:[%s372 + $0x370] sm:$0xff]
        %v2167 = vld [vmem:[%s372 + $0x378] sm:$0xff]
        %v2168 = vld [vmem:[%s372 + $0x380] sm:$0xff]
        %v2169 = vld [vmem:[%s372 + $0x388] sm:$0xff]
        %v2170 = vld [vmem:[%s372 + $0x390] sm:$0xff]
        %v2171 = vld [vmem:[%s372 + $0x398] sm:$0xff]
        %v2172 = vld [vmem:[%s372 + $0x3a0] sm:$0xff]
        %v2173 = vld [vmem:[%s372 + $0x3a8] sm:$0xff]
        %v2174 = vld [vmem:[%s372 + $0x3b0] sm:$0xff]
        %v2175 = vld [vmem:[%s372 + $0x3b8] sm:$0xff]
        %v2176 = vld [vmem:[%s372 + $0x3c0] sm:$0xff]
        %v2177 = vld [vmem:[%s372 + $0x3c8] sm:$0xff]
        %v2178 = vld [vmem:[%s372 + $0x3d0] sm:$0xff]
        %v2179 = vld [vmem:[%s372 + $0x3d8] sm:$0xff]
        %v2180 = vld [vmem:[%s372 + $0x3e0] sm:$0xff]
        %v2181 = vld [vmem:[%s372 + $0x3e8] sm:$0xff]
        %v2182 = vld [vmem:[%s372 + $0x3f0] sm:$0xff]
        %v2183 = vld [vmem:[%s372 + $0x3f8] sm:$0xff]
        %v2184 = vld [vmem:[#allocation2] sm:$0xff]
        %v2185 = vld [vmem:[#allocation2 + $0x8] sm:$0xff]
        %v2218 = vunpack.c.l.b16 %v2152
        %v2219 = vunpack.c.h.b16 %v2152
        %v2220 = vunpack.c.l.b16 %v2153
        %v2221 = vunpack.c.h.b16 %v2153
        %v2222 = vunpack.c.l.b16 %v2154
        %v2223 = vunpack.c.h.b16 %v2154
        %v2224 = vunpack.c.l.b16 %v2155
        %v2225 = vunpack.c.h.b16 %v2155
        %v2226 = vunpack.c.l.b16 %v2156
        %v2227 = vunpack.c.h.b16 %v2156
        %v2228 = vunpack.c.l.b16 %v2157
        %v2229 = vunpack.c.h.b16 %v2157
        %v2230 = vunpack.c.l.b16 %v2158
        %v2231 = vunpack.c.h.b16 %v2158
        %v2232 = vunpack.c.l.b16 %v2159
        %v2233 = vunpack.c.h.b16 %v2159
        %v2234 = vunpack.c.l.b16 %v2160
        %v2235 = vunpack.c.h.b16 %v2160
        %v2236 = vunpack.c.l.b16 %v2161
        %v2237 = vunpack.c.h.b16 %v2161
        %v2238 = vunpack.c.l.b16 %v2162
        %v2239 = vunpack.c.h.b16 %v2162
        %v2240 = vunpack.c.l.b16 %v2163
        %v2241 = vunpack.c.h.b16 %v2163
        %v2242 = vunpack.c.l.b16 %v2164
        %v2243 = vunpack.c.h.b16 %v2164
        %v2244 = vunpack.c.l.b16 %v2165
        %v2245 = vunpack.c.h.b16 %v2165
        %v2246 = vunpack.c.l.b16 %v2166
        %v2247 = vunpack.c.h.b16 %v2166
        %v2248 = vunpack.c.l.b16 %v2167
        %v2249 = vunpack.c.h.b16 %v2167
        %v2250 = vunpack.c.l.b16 %v2168
        %v2251 = vunpack.c.h.b16 %v2168
        %v2252 = vunpack.c.l.b16 %v2169
        %v2253 = vunpack.c.h.b16 %v2169
        %v2254 = vunpack.c.l.b16 %v2170
        %v2255 = vunpack.c.h.b16 %v2170
        %v2256 = vunpack.c.l.b16 %v2171
        %v2257 = vunpack.c.h.b16 %v2171
        %v2258 = vunpack.c.l.b16 %v2172
        %v2259 = vunpack.c.h.b16 %v2172
        %v2260 = vunpack.c.l.b16 %v2173
        %v2261 = vunpack.c.h.b16 %v2173
        %v2262 = vunpack.c.l.b16 %v2174
        %v2263 = vunpack.c.h.b16 %v2174
        %v2264 = vunpack.c.l.b16 %v2175
        %v2265 = vunpack.c.h.b16 %v2175
        %v2266 = vunpack.c.l.b16 %v2176
        %v2267 = vunpack.c.h.b16 %v2176
        %v2268 = vunpack.c.l.b16 %v2177
        %v2269 = vunpack.c.h.b16 %v2177
        %v2270 = vunpack.c.l.b16 %v2178
        %v2271 = vunpack.c.h.b16 %v2178
        %v2272 = vunpack.c.l.b16 %v2179
        %v2273 = vunpack.c.h.b16 %v2179
        %v2274 = vunpack.c.l.b16 %v2180
        %v2275 = vunpack.c.h.b16 %v2180
        %v2276 = vunpack.c.l.b16 %v2181
        %v2277 = vunpack.c.h.b16 %v2181
        %v2278 = vunpack.c.l.b16 %v2182
        %v2279 = vunpack.c.h.b16 %v2182
        %v2280 = vunpack.c.l.b16 %v2183
        %v2281 = vunpack.c.h.b16 %v2183
        %v2282 = vpack.c.b16 %v2226, %v2218
        %v2283 = vpack.c.b16 %v2227, %v2219
        %v2284 = vpack.c.b16 %v2228, %v2220
        %v2285 = vpack.c.b16 %v2229, %v2221
        %v2286 = vpack.c.b16 %v2230, %v2222
        %v2287 = vpack.c.b16 %v2231, %v2223
        %v2288 = vpack.c.b16 %v2232, %v2224
        %v2289 = vpack.c.b16 %v2233, %v2225
        %v2290 = vpack.c.b16 %v2242, %v2234
        %v2291 = vpack.c.b16 %v2243, %v2235
        %v2292 = vpack.c.b16 %v2244, %v2236
        %v2293 = vpack.c.b16 %v2245, %v2237
        %v2294 = vpack.c.b16 %v2246, %v2238
        %v2295 = vpack.c.b16 %v2247, %v2239
        %v2296 = vpack.c.b16 %v2248, %v2240
        %v2297 = vpack.c.b16 %v2249, %v2241
        %v2298 = vpack.c.b16 %v2258, %v2250
        %v2299 = vpack.c.b16 %v2259, %v2251
        %v2300 = vpack.c.b16 %v2260, %v2252
        %v2301 = vpack.c.b16 %v2261, %v2253
        %v2302 = vpack.c.b16 %v2262, %v2254
        %v2303 = vpack.c.b16 %v2263, %v2255
        %v2304 = vpack.c.b16 %v2264, %v2256
        %v2305 = vpack.c.b16 %v2265, %v2257
        %v2306 = vpack.c.b16 %v2274, %v2266
        %v2307 = vpack.c.b16 %v2275, %v2267
        %v2308 = vpack.c.b16 %v2276, %v2268
        %v2309 = vpack.c.b16 %v2277, %v2269
        %v2310 = vpack.c.b16 %v2278, %v2270
        %v2311 = vpack.c.b16 %v2279, %v2271
        %v2312 = vpack.c.b16 %v2280, %v2272
        %v2313 = vpack.c.b16 %v2281, %v2273
        %v2347 = vsel %vm914, %v2151, 0
        %2349 = vmatprep.subr.bf16.mxu0 0
        %2350 = vmatpush1.bf16.msra.mxu0 0
        %2351 = vmatprep.subr.bf16.mxu0 0
        %2352 = vmatpush1.bf16.msra.mxu0 0
        %2353 = vmatprep.subr.bf16.mxu0 0
        %2354 = vmatpush1.bf16.msra.mxu0 0
        %2355 = vmatprep.subr.bf16.mxu0 0
        %2356 = vmatpush1.bf16.msra.mxu0 0
        %2357 = vmatprep.subr.bf16.mxu0 %v2307
        %2358 = vmatpush1.bf16.msra.mxu0 %v2306
        %2359 = vmatprep.subr.bf16.mxu0 %v2299
        %2360 = vmatpush1.bf16.msra.mxu0 %v2298
        %2361 = vmatprep.subr.bf16.mxu0 %v2291
        %2362 = vmatpush1.bf16.msra.mxu0 %v2290
        %2363 = vmatprep.subr.bf16.mxu0 %v2283
        %2364 = vmatpush1.bf16.msra.mxu0 %v2282
        %2365 = vmatprep.subr.bf16.mxu0 0
        %2366 = vmatpush2.bf16.msra.mxu0 0
        %2367 = vmatprep.subr.bf16.mxu0 0
        %2368 = vmatpush2.bf16.msra.mxu0 0
        %2369 = vmatprep.subr.bf16.mxu0 0
        %2370 = vmatpush2.bf16.msra.mxu0 0
        %2371 = vmatprep.subr.bf16.mxu0 0
        %2372 = vmatpush2.bf16.msra.mxu0 0
        %2373 = vmatprep.subr.bf16.mxu0 0
        %2374 = vmatpush2.bf16.msra.mxu0 0
        %2375 = vmatprep.subr.bf16.mxu0 0
        %2376 = vmatpush2.bf16.msra.mxu0 0
        %2377 = vmatprep.subr.bf16.mxu0 0
        %2378 = vmatpush2.bf16.msra.mxu0 0
        %2379 = vmatprep.subr.bf16.mxu0 0
        %2380 = vmatpush2.bf16.msra.mxu0 0
        %2381 = vmatprep.mubr.bf16.mxu0 0
        %2382 = vmatmul.mubr.bf16.gmra.mxu0 %v2347
        %v2383 = vpop.f32.mrf.mxu0
        %v2384 = vadd.f32 0.0, %v2383
        %v2385 = vpop.f32.mrf.mxu0
        %v2386 = vadd.f32 0.0, %v2385
        %v2387 = vpop.f32.mrf.mxu0
        %v2388 = vpop.f32.mrf.mxu0
        %2389 = vdwg.mxu0
        %2390 = vmatprep.subr.bf16.mxu0 0
        %2391 = vmatpush1.bf16.msra.mxu0 0
        %2392 = vmatprep.subr.bf16.mxu0 0
        %2393 = vmatpush1.bf16.msra.mxu0 0
        %2394 = vmatprep.subr.bf16.mxu0 0
        %2395 = vmatpush1.bf16.msra.mxu0 0
        %2396 = vmatprep.subr.bf16.mxu0 0
        %2397 = vmatpush1.bf16.msra.mxu0 0
        %2398 = vmatprep.subr.bf16.mxu0 %v2309
        %2399 = vmatpush1.bf16.msra.mxu0 %v2308
        %2400 = vmatprep.subr.bf16.mxu0 %v2301
        %2401 = vmatpush1.bf16.msra.mxu0 %v2300
        %2402 = vmatprep.subr.bf16.mxu0 %v2293
        %2403 = vmatpush1.bf16.msra.mxu0 %v2292
        %2404 = vmatprep.subr.bf16.mxu0 %v2285
        %2405 = vmatpush1.bf16.msra.mxu0 %v2284
        %2406 = vmatprep.subr.bf16.mxu0 0
        %2407 = vmatpush2.bf16.msra.mxu0 0
        %2408 = vmatprep.subr.bf16.mxu0 0
        %2409 = vmatpush2.bf16.msra.mxu0 0
        %2410 = vmatprep.subr.bf16.mxu0 0
        %2411 = vmatpush2.bf16.msra.mxu0 0
        %2412 = vmatprep.subr.bf16.mxu0 0
        %2413 = vmatpush2.bf16.msra.mxu0 0
        %2414 = vmatprep.subr.bf16.mxu0 0
        %2415 = vmatpush2.bf16.msra.mxu0 0
        %2416 = vmatprep.subr.bf16.mxu0 0
        %2417 = vmatpush2.bf16.msra.mxu0 0
        %2418 = vmatprep.subr.bf16.mxu0 0
        %2419 = vmatpush2.bf16.msra.mxu0 0
        %2420 = vmatprep.subr.bf16.mxu0 0
        %2421 = vmatpush2.bf16.msra.mxu0 0
        %2422 = vmatprep.mubr.bf16.mxu0 0
        %2423 = vmatmul.mubr.bf16.gmra.mxu0 %v2347
        %v2424 = vpop.f32.mrf.mxu0
        %v2425 = vadd.f32 0.0, %v2424
        %v2426 = vpop.f32.mrf.mxu0
        %v2427 = vadd.f32 0.0, %v2426
        %v2428 = vpop.f32.mrf.mxu0
        %v2429 = vpop.f32.mrf.mxu0
        %2430 = vdwg.mxu0
        %2431 = vmatprep.subr.bf16.mxu0 0
        %2432 = vmatpush1.bf16.msra.mxu0 0
        %2433 = vmatprep.subr.bf16.mxu0 0
        %2434 = vmatpush1.bf16.msra.mxu0 0
        %2435 = vmatprep.subr.bf16.mxu0 0
        %2436 = vmatpush1.bf16.msra.mxu0 0
        %2437 = vmatprep.subr.bf16.mxu0 0
        %2438 = vmatpush1.bf16.msra.mxu0 0
        %2439 = vmatprep.subr.bf16.mxu0 %v2311
        %2440 = vmatpush1.bf16.msra.mxu0 %v2310
        %2441 = vmatprep.subr.bf16.mxu0 %v2303
        %2442 = vmatpush1.bf16.msra.mxu0 %v2302
        %2443 = vmatprep.subr.bf16.mxu0 %v2295
        %2444 = vmatpush1.bf16.msra.mxu0 %v2294
        %2445 = vmatprep.subr.bf16.mxu0 %v2287
        %2446 = vmatpush1.bf16.msra.mxu0 %v2286
        %2447 = vmatprep.subr.bf16.mxu0 0
        %2448 = vmatpush2.bf16.msra.mxu0 0
        %2449 = vmatprep.subr.bf16.mxu0 0
        %2450 = vmatpush2.bf16.msra.mxu0 0
        %2451 = vmatprep.subr.bf16.mxu0 0
        %2452 = vmatpush2.bf16.msra.mxu0 0
        %2453 = vmatprep.subr.bf16.mxu0 0
        %2454 = vmatpush2.bf16.msra.mxu0 0
        %2455 = vmatprep.subr.bf16.mxu0 0
        %2456 = vmatpush2.bf16.msra.mxu0 0
        %2457 = vmatprep.subr.bf16.mxu0 0
        %2458 = vmatpush2.bf16.msra.mxu0 0
        %2459 = vmatprep.subr.bf16.mxu0 0
        %2460 = vmatpush2.bf16.msra.mxu0 0
        %2461 = vmatprep.subr.bf16.mxu0 0
        %2462 = vmatpush2.bf16.msra.mxu0 0
        %2463 = vmatprep.mubr.bf16.mxu0 0
        %2464 = vmatmul.mubr.bf16.gmra.mxu0 %v2347
        %v2465 = vpop.f32.mrf.mxu0
        %v2466 = vadd.f32 0.0, %v2465
        %v2467 = vpop.f32.mrf.mxu0
        %v2468 = vadd.f32 0.0, %v2467
        %v2469 = vpop.f32.mrf.mxu0
        %v2470 = vpop.f32.mrf.mxu0
        %2471 = vdwg.mxu0
        %2472 = vmatprep.subr.bf16.mxu0 0
        %2473 = vmatpush1.bf16.msra.mxu0 0
        %2474 = vmatprep.subr.bf16.mxu0 0
        %2475 = vmatpush1.bf16.msra.mxu0 0
        %2476 = vmatprep.subr.bf16.mxu0 0
        %2477 = vmatpush1.bf16.msra.mxu0 0
        %2478 = vmatprep.subr.bf16.mxu0 0
        %2479 = vmatpush1.bf16.msra.mxu0 0
        %2480 = vmatprep.subr.bf16.mxu0 %v2313
        %2481 = vmatpush1.bf16.msra.mxu0 %v2312
        %2482 = vmatprep.subr.bf16.mxu0 %v2305
        %2483 = vmatpush1.bf16.msra.mxu0 %v2304
        %2484 = vmatprep.subr.bf16.mxu0 %v2297
        %2485 = vmatpush1.bf16.msra.mxu0 %v2296
        %2486 = vmatprep.subr.bf16.mxu0 %v2289
        %2487 = vmatpush1.bf16.msra.mxu0 %v2288
        %2488 = vmatprep.subr.bf16.mxu0 0
        %2489 = vmatpush2.bf16.msra.mxu0 0
        %2490 = vmatprep.subr.bf16.mxu0 0
        %2491 = vmatpush2.bf16.msra.mxu0 0
        %2492 = vmatprep.subr.bf16.mxu0 0
        %2493 = vmatpush2.bf16.msra.mxu0 0
        %2494 = vmatprep.subr.bf16.mxu0 0
        %2495 = vmatpush2.bf16.msra.mxu0 0
        %2496 = vmatprep.subr.bf16.mxu0 0
        %2497 = vmatpush2.bf16.msra.mxu0 0
        %2498 = vmatprep.subr.bf16.mxu0 0
        %2499 = vmatpush2.bf16.msra.mxu0 0
        %2500 = vmatprep.subr.bf16.mxu0 0
        %2501 = vmatpush2.bf16.msra.mxu0 0
        %2502 = vmatprep.subr.bf16.mxu0 0
        %2503 = vmatpush2.bf16.msra.mxu0 0
        %2504 = vmatprep.mubr.bf16.mxu0 0
        %2505 = vmatmul.mubr.bf16.gmra.mxu0 %v2347
        %v2506 = vpop.f32.mrf.mxu0
        %v2507 = vadd.f32 0.0, %v2506
        %v2508 = vpop.f32.mrf.mxu0
        %v2509 = vadd.f32 0.0, %v2508
        %v2510 = vpop.f32.mrf.mxu0
        %v2511 = vpop.f32.mrf.mxu0
        %2512 = vdwg.mxu0
        %v2521 = vcombine.low %v2384, %v2386
        %v2522 = vcombine.low %v2425, %v2427
        %v2524 = vunpack.c.l.s4 1983009808
        %v2525 = vunpack.c.0.s8 %v2524
        %v2526 = vlaneseq
        %v2527 = vshrl.u32 %v2526, 7
        %v2528 = vsub.s32 %v2525, %v2527
        %v2529 = vrot.slane %v2521, %v2528
        %v2531 = vunpack.c.l.s4 1983009808
        %v2532 = vunpack.c.0.s8 %v2531
        %v2533 = vlaneseq
        %v2534 = vshrl.u32 %v2533, 7
        %v2535 = vsub.s32 %v2532, %v2534
        %v2536 = vrot.slane %v2522, %v2535
        %v2537 = vcombine.low %v2529, %v2536
        %v2538 = vcombine.low %v2466, %v2468
        %v2539 = vcombine.low %v2507, %v2509
        %v2541 = vunpack.c.l.s4 1983009808
        %v2542 = vunpack.c.0.s8 %v2541
        %v2543 = vlaneseq
        %v2544 = vshrl.u32 %v2543, 7
        %v2545 = vsub.s32 %v2542, %v2544
        %v2546 = vrot.slane %v2538, %v2545
        %v2548 = vunpack.c.l.s4 1983009808
        %v2549 = vunpack.c.0.s8 %v2548
        %v2550 = vlaneseq
        %v2551 = vshrl.u32 %v2550, 7
        %v2552 = vsub.s32 %v2549, %v2551
        %v2553 = vrot.slane %v2539, %v2552
        %v2554 = vcombine.low %v2546, %v2553
        %v2557 = vadd.f32 %v2184, %v2537
        %v2558 = vadd.f32 %v2185, %v2554
        %2559 = vst [vmem:[#allocation2] sm:$0xff] %v2557
        %2560 = vst [vmem:[#allocation2 + $0x8] sm:$0xff] %v2558
        %v2561 = vld [vmem:[#allocation3 + $0x8] sm:$0x3]
        %v2562 = vpack.c.bf16 %v2561, %v2561
        %v2563 = vld [vmem:[%s372 + $0x400] sm:$0xff]
        %v2564 = vld [vmem:[%s372 + $0x408] sm:$0xff]
        %v2565 = vld [vmem:[%s372 + $0x410] sm:$0xff]
        %v2566 = vld [vmem:[%s372 + $0x418] sm:$0xff]
        %v2567 = vld [vmem:[%s372 + $0x420] sm:$0xff]
        %v2568 = vld [vmem:[%s372 + $0x428] sm:$0xff]
        %v2569 = vld [vmem:[%s372 + $0x430] sm:$0xff]
        %v2570 = vld [vmem:[%s372 + $0x438] sm:$0xff]
        %v2571 = vld [vmem:[%s372 + $0x440] sm:$0xff]
        %v2572 = vld [vmem:[%s372 + $0x448] sm:$0xff]
        %v2573 = vld [vmem:[%s372 + $0x450] sm:$0xff]
        %v2574 = vld [vmem:[%s372 + $0x458] sm:$0xff]
        %v2575 = vld [vmem:[%s372 + $0x460] sm:$0xff]
        %v2576 = vld [vmem:[%s372 + $0x468] sm:$0xff]
        %v2577 = vld [vmem:[%s372 + $0x470] sm:$0xff]
        %v2578 = vld [vmem:[%s372 + $0x478] sm:$0xff]
        %v2579 = vld [vmem:[%s372 + $0x480] sm:$0xff]
        %v2580 = vld [vmem:[%s372 + $0x488] sm:$0xff]
        %v2581 = vld [vmem:[%s372 + $0x490] sm:$0xff]
        %v2582 = vld [vmem:[%s372 + $0x498] sm:$0xff]
        %v2583 = vld [vmem:[%s372 + $0x4a0] sm:$0xff]
        %v2584 = vld [vmem:[%s372 + $0x4a8] sm:$0xff]
        %v2585 = vld [vmem:[%s372 + $0x4b0] sm:$0xff]
        %v2586 = vld [vmem:[%s372 + $0x4b8] sm:$0xff]
        %v2587 = vld [vmem:[%s372 + $0x4c0] sm:$0xff]
        %v2588 = vld [vmem:[%s372 + $0x4c8] sm:$0xff]
        %v2589 = vld [vmem:[%s372 + $0x4d0] sm:$0xff]
        %v2590 = vld [vmem:[%s372 + $0x4d8] sm:$0xff]
        %v2591 = vld [vmem:[%s372 + $0x4e0] sm:$0xff]
        %v2592 = vld [vmem:[%s372 + $0x4e8] sm:$0xff]
        %v2593 = vld [vmem:[%s372 + $0x4f0] sm:$0xff]
        %v2594 = vld [vmem:[%s372 + $0x4f8] sm:$0xff]
        %v2595 = vld [vmem:[#allocation2] sm:$0xff]
        %v2596 = vld [vmem:[#allocation2 + $0x8] sm:$0xff]
        %v2629 = vunpack.c.l.b16 %v2563
        %v2630 = vunpack.c.h.b16 %v2563
        %v2631 = vunpack.c.l.b16 %v2564
        %v2632 = vunpack.c.h.b16 %v2564
        %v2633 = vunpack.c.l.b16 %v2565
        %v2634 = vunpack.c.h.b16 %v2565
        %v2635 = vunpack.c.l.b16 %v2566
        %v2636 = vunpack.c.h.b16 %v2566
        %v2637 = vunpack.c.l.b16 %v2567
        %v2638 = vunpack.c.h.b16 %v2567
        %v2639 = vunpack.c.l.b16 %v2568
        %v2640 = vunpack.c.h.b16 %v2568
        %v2641 = vunpack.c.l.b16 %v2569
        %v2642 = vunpack.c.h.b16 %v2569
        %v2643 = vunpack.c.l.b16 %v2570
        %v2644 = vunpack.c.h.b16 %v2570
        %v2645 = vunpack.c.l.b16 %v2571
        %v2646 = vunpack.c.h.b16 %v2571
        %v2647 = vunpack.c.l.b16 %v2572
        %v2648 = vunpack.c.h.b16 %v2572
        %v2649 = vunpack.c.l.b16 %v2573
        %v2650 = vunpack.c.h.b16 %v2573
        %v2651 = vunpack.c.l.b16 %v2574
        %v2652 = vunpack.c.h.b16 %v2574
        %v2653 = vunpack.c.l.b16 %v2575
        %v2654 = vunpack.c.h.b16 %v2575
        %v2655 = vunpack.c.l.b16 %v2576
        %v2656 = vunpack.c.h.b16 %v2576
        %v2657 = vunpack.c.l.b16 %v2577
        %v2658 = vunpack.c.h.b16 %v2577
        %v2659 = vunpack.c.l.b16 %v2578
        %v2660 = vunpack.c.h.b16 %v2578
        %v2661 = vunpack.c.l.b16 %v2579
        %v2662 = vunpack.c.h.b16 %v2579
        %v2663 = vunpack.c.l.b16 %v2580
        %v2664 = vunpack.c.h.b16 %v2580
        %v2665 = vunpack.c.l.b16 %v2581
        %v2666 = vunpack.c.h.b16 %v2581
        %v2667 = vunpack.c.l.b16 %v2582
        %v2668 = vunpack.c.h.b16 %v2582
        %v2669 = vunpack.c.l.b16 %v2583
        %v2670 = vunpack.c.h.b16 %v2583
        %v2671 = vunpack.c.l.b16 %v2584
        %v2672 = vunpack.c.h.b16 %v2584
        %v2673 = vunpack.c.l.b16 %v2585
        %v2674 = vunpack.c.h.b16 %v2585
        %v2675 = vunpack.c.l.b16 %v2586
        %v2676 = vunpack.c.h.b16 %v2586
        %v2677 = vunpack.c.l.b16 %v2587
        %v2678 = vunpack.c.h.b16 %v2587
        %v2679 = vunpack.c.l.b16 %v2588
        %v2680 = vunpack.c.h.b16 %v2588
        %v2681 = vunpack.c.l.b16 %v2589
        %v2682 = vunpack.c.h.b16 %v2589
        %v2683 = vunpack.c.l.b16 %v2590
        %v2684 = vunpack.c.h.b16 %v2590
        %v2685 = vunpack.c.l.b16 %v2591
        %v2686 = vunpack.c.h.b16 %v2591
        %v2687 = vunpack.c.l.b16 %v2592
        %v2688 = vunpack.c.h.b16 %v2592
        %v2689 = vunpack.c.l.b16 %v2593
        %v2690 = vunpack.c.h.b16 %v2593
        %v2691 = vunpack.c.l.b16 %v2594
        %v2692 = vunpack.c.h.b16 %v2594
        %v2693 = vpack.c.b16 %v2637, %v2629
        %v2694 = vpack.c.b16 %v2638, %v2630
        %v2695 = vpack.c.b16 %v2639, %v2631
        %v2696 = vpack.c.b16 %v2640, %v2632
        %v2697 = vpack.c.b16 %v2641, %v2633
        %v2698 = vpack.c.b16 %v2642, %v2634
        %v2699 = vpack.c.b16 %v2643, %v2635
        %v2700 = vpack.c.b16 %v2644, %v2636
        %v2701 = vpack.c.b16 %v2653, %v2645
        %v2702 = vpack.c.b16 %v2654, %v2646
        %v2703 = vpack.c.b16 %v2655, %v2647
        %v2704 = vpack.c.b16 %v2656, %v2648
        %v2705 = vpack.c.b16 %v2657, %v2649
        %v2706 = vpack.c.b16 %v2658, %v2650
        %v2707 = vpack.c.b16 %v2659, %v2651
        %v2708 = vpack.c.b16 %v2660, %v2652
        %v2709 = vpack.c.b16 %v2669, %v2661
        %v2710 = vpack.c.b16 %v2670, %v2662
        %v2711 = vpack.c.b16 %v2671, %v2663
        %v2712 = vpack.c.b16 %v2672, %v2664
        %v2713 = vpack.c.b16 %v2673, %v2665
        %v2714 = vpack.c.b16 %v2674, %v2666
        %v2715 = vpack.c.b16 %v2675, %v2667
        %v2716 = vpack.c.b16 %v2676, %v2668
        %v2717 = vpack.c.b16 %v2685, %v2677
        %v2718 = vpack.c.b16 %v2686, %v2678
        %v2719 = vpack.c.b16 %v2687, %v2679
        %v2720 = vpack.c.b16 %v2688, %v2680
        %v2721 = vpack.c.b16 %v2689, %v2681
        %v2722 = vpack.c.b16 %v2690, %v2682
        %v2723 = vpack.c.b16 %v2691, %v2683
        %v2724 = vpack.c.b16 %v2692, %v2684
        %v2758 = vsel %vm914, %v2562, 0
        %2760 = vmatprep.subr.bf16.mxu0 0
        %2761 = vmatpush1.bf16.msra.mxu0 0
        %2762 = vmatprep.subr.bf16.mxu0 0
        %2763 = vmatpush1.bf16.msra.mxu0 0
        %2764 = vmatprep.subr.bf16.mxu0 0
        %2765 = vmatpush1.bf16.msra.mxu0 0
        %2766 = vmatprep.subr.bf16.mxu0 0
        %2767 = vmatpush1.bf16.msra.mxu0 0
        %2768 = vmatprep.subr.bf16.mxu0 %v2718
        %2769 = vmatpush1.bf16.msra.mxu0 %v2717
        %2770 = vmatprep.subr.bf16.mxu0 %v2710
        %2771 = vmatpush1.bf16.msra.mxu0 %v2709
        %2772 = vmatprep.subr.bf16.mxu0 %v2702
        %2773 = vmatpush1.bf16.msra.mxu0 %v2701
        %2774 = vmatprep.subr.bf16.mxu0 %v2694
        %2775 = vmatpush1.bf16.msra.mxu0 %v2693
        %2776 = vmatprep.subr.bf16.mxu0 0
        %2777 = vmatpush2.bf16.msra.mxu0 0
        %2778 = vmatprep.subr.bf16.mxu0 0
        %2779 = vmatpush2.bf16.msra.mxu0 0
        %2780 = vmatprep.subr.bf16.mxu0 0
        %2781 = vmatpush2.bf16.msra.mxu0 0
        %2782 = vmatprep.subr.bf16.mxu0 0
        %2783 = vmatpush2.bf16.msra.mxu0 0
        %2784 = vmatprep.subr.bf16.mxu0 0
        %2785 = vmatpush2.bf16.msra.mxu0 0
        %2786 = vmatprep.subr.bf16.mxu0 0
        %2787 = vmatpush2.bf16.msra.mxu0 0
        %2788 = vmatprep.subr.bf16.mxu0 0
        %2789 = vmatpush2.bf16.msra.mxu0 0
        %2790 = vmatprep.subr.bf16.mxu0 0
        %2791 = vmatpush2.bf16.msra.mxu0 0
        %2792 = vmatprep.mubr.bf16.mxu0 0
        %2793 = vmatmul.mubr.bf16.gmra.mxu0 %v2758
        %v2794 = vpop.f32.mrf.mxu0
        %v2795 = vadd.f32 0.0, %v2794
        %v2796 = vpop.f32.mrf.mxu0
        %v2797 = vadd.f32 0.0, %v2796
        %v2798 = vpop.f32.mrf.mxu0
        %v2799 = vpop.f32.mrf.mxu0
        %2800 = vdwg.mxu0
        %2801 = vmatprep.subr.bf16.mxu0 0
        %2802 = vmatpush1.bf16.msra.mxu0 0
        %2803 = vmatprep.subr.bf16.mxu0 0
        %2804 = vmatpush1.bf16.msra.mxu0 0
        %2805 = vmatprep.subr.bf16.mxu0 0
        %2806 = vmatpush1.bf16.msra.mxu0 0
        %2807 = vmatprep.subr.bf16.mxu0 0
        %2808 = vmatpush1.bf16.msra.mxu0 0
        %2809 = vmatprep.subr.bf16.mxu0 %v2720
        %2810 = vmatpush1.bf16.msra.mxu0 %v2719
        %2811 = vmatprep.subr.bf16.mxu0 %v2712
        %2812 = vmatpush1.bf16.msra.mxu0 %v2711
        %2813 = vmatprep.subr.bf16.mxu0 %v2704
        %2814 = vmatpush1.bf16.msra.mxu0 %v2703
        %2815 = vmatprep.subr.bf16.mxu0 %v2696
        %2816 = vmatpush1.bf16.msra.mxu0 %v2695
        %2817 = vmatprep.subr.bf16.mxu0 0
        %2818 = vmatpush2.bf16.msra.mxu0 0
        %2819 = vmatprep.subr.bf16.mxu0 0
        %2820 = vmatpush2.bf16.msra.mxu0 0
        %2821 = vmatprep.subr.bf16.mxu0 0
        %2822 = vmatpush2.bf16.msra.mxu0 0
        %2823 = vmatprep.subr.bf16.mxu0 0
        %2824 = vmatpush2.bf16.msra.mxu0 0
        %2825 = vmatprep.subr.bf16.mxu0 0
        %2826 = vmatpush2.bf16.msra.mxu0 0
        %2827 = vmatprep.subr.bf16.mxu0 0
        %2828 = vmatpush2.bf16.msra.mxu0 0
        %2829 = vmatprep.subr.bf16.mxu0 0
        %2830 = vmatpush2.bf16.msra.mxu0 0
        %2831 = vmatprep.subr.bf16.mxu0 0
        %2832 = vmatpush2.bf16.msra.mxu0 0
        %2833 = vmatprep.mubr.bf16.mxu0 0
        %2834 = vmatmul.mubr.bf16.gmra.mxu0 %v2758
        %v2835 = vpop.f32.mrf.mxu0
        %v2836 = vadd.f32 0.0, %v2835
        %v2837 = vpop.f32.mrf.mxu0
        %v2838 = vadd.f32 0.0, %v2837
        %v2839 = vpop.f32.mrf.mxu0
        %v2840 = vpop.f32.mrf.mxu0
        %2841 = vdwg.mxu0
        %2842 = vmatprep.subr.bf16.mxu0 0
        %2843 = vmatpush1.bf16.msra.mxu0 0
        %2844 = vmatprep.subr.bf16.mxu0 0
        %2845 = vmatpush1.bf16.msra.mxu0 0
        %2846 = vmatprep.subr.bf16.mxu0 0
        %2847 = vmatpush1.bf16.msra.mxu0 0
        %2848 = vmatprep.subr.bf16.mxu0 0
        %2849 = vmatpush1.bf16.msra.mxu0 0
        %2850 = vmatprep.subr.bf16.mxu0 %v2722
        %2851 = vmatpush1.bf16.msra.mxu0 %v2721
        %2852 = vmatprep.subr.bf16.mxu0 %v2714
        %2853 = vmatpush1.bf16.msra.mxu0 %v2713
        %2854 = vmatprep.subr.bf16.mxu0 %v2706
        %2855 = vmatpush1.bf16.msra.mxu0 %v2705
        %2856 = vmatprep.subr.bf16.mxu0 %v2698
        %2857 = vmatpush1.bf16.msra.mxu0 %v2697
        %2858 = vmatprep.subr.bf16.mxu0 0
        %2859 = vmatpush2.bf16.msra.mxu0 0
        %2860 = vmatprep.subr.bf16.mxu0 0
        %2861 = vmatpush2.bf16.msra.mxu0 0
        %2862 = vmatprep.subr.bf16.mxu0 0
        %2863 = vmatpush2.bf16.msra.mxu0 0
        %2864 = vmatprep.subr.bf16.mxu0 0
        %2865 = vmatpush2.bf16.msra.mxu0 0
        %2866 = vmatprep.subr.bf16.mxu0 0
        %2867 = vmatpush2.bf16.msra.mxu0 0
        %2868 = vmatprep.subr.bf16.mxu0 0
        %2869 = vmatpush2.bf16.msra.mxu0 0
        %2870 = vmatprep.subr.bf16.mxu0 0
        %2871 = vmatpush2.bf16.msra.mxu0 0
        %2872 = vmatprep.subr.bf16.mxu0 0
        %2873 = vmatpush2.bf16.msra.mxu0 0
        %2874 = vmatprep.mubr.bf16.mxu0 0
        %2875 = vmatmul.mubr.bf16.gmra.mxu0 %v2758
        %v2876 = vpop.f32.mrf.mxu0
        %v2877 = vadd.f32 0.0, %v2876
        %v2878 = vpop.f32.mrf.mxu0
        %v2879 = vadd.f32 0.0, %v2878
        %v2880 = vpop.f32.mrf.mxu0
        %v2881 = vpop.f32.mrf.mxu0
        %2882 = vdwg.mxu0
        %2883 = vmatprep.subr.bf16.mxu0 0
        %2884 = vmatpush1.bf16.msra.mxu0 0
        %2885 = vmatprep.subr.bf16.mxu0 0
        %2886 = vmatpush1.bf16.msra.mxu0 0
        %2887 = vmatprep.subr.bf16.mxu0 0
        %2888 = vmatpush1.bf16.msra.mxu0 0
        %2889 = vmatprep.subr.bf16.mxu0 0
        %2890 = vmatpush1.bf16.msra.mxu0 0
        %2891 = vmatprep.subr.bf16.mxu0 %v2724
        %2892 = vmatpush1.bf16.msra.mxu0 %v2723
        %2893 = vmatprep.subr.bf16.mxu0 %v2716
        %2894 = vmatpush1.bf16.msra.mxu0 %v2715
        %2895 = vmatprep.subr.bf16.mxu0 %v2708
        %2896 = vmatpush1.bf16.msra.mxu0 %v2707
        %2897 = vmatprep.subr.bf16.mxu0 %v2700
        %2898 = vmatpush1.bf16.msra.mxu0 %v2699
        %2899 = vmatprep.subr.bf16.mxu0 0
        %2900 = vmatpush2.bf16.msra.mxu0 0
        %2901 = vmatprep.subr.bf16.mxu0 0
        %2902 = vmatpush2.bf16.msra.mxu0 0
        %2903 = vmatprep.subr.bf16.mxu0 0
        %2904 = vmatpush2.bf16.msra.mxu0 0
        %2905 = vmatprep.subr.bf16.mxu0 0
        %2906 = vmatpush2.bf16.msra.mxu0 0
        %2907 = vmatprep.subr.bf16.mxu0 0
        %2908 = vmatpush2.bf16.msra.mxu0 0
        %2909 = vmatprep.subr.bf16.mxu0 0
        %2910 = vmatpush2.bf16.msra.mxu0 0
        %2911 = vmatprep.subr.bf16.mxu0 0
        %2912 = vmatpush2.bf16.msra.mxu0 0
        %2913 = vmatprep.subr.bf16.mxu0 0
        %2914 = vmatpush2.bf16.msra.mxu0 0
        %2915 = vmatprep.mubr.bf16.mxu0 0
        %2916 = vmatmul.mubr.bf16.gmra.mxu0 %v2758
        %v2917 = vpop.f32.mrf.mxu0
        %v2918 = vadd.f32 0.0, %v2917
        %v2919 = vpop.f32.mrf.mxu0
        %v2920 = vadd.f32 0.0, %v2919
        %v2921 = vpop.f32.mrf.mxu0
        %v2922 = vpop.f32.mrf.mxu0
        %2923 = vdwg.mxu0
        %v2932 = vcombine.low %v2795, %v2797
        %v2933 = vcombine.low %v2836, %v2838
        %v2935 = vunpack.c.l.s4 1983009808
        %v2936 = vunpack.c.0.s8 %v2935
        %v2937 = vlaneseq
        %v2938 = vshrl.u32 %v2937, 7
        %v2939 = vsub.s32 %v2936, %v2938
        %v2940 = vrot.slane %v2932, %v2939
        %v2942 = vunpack.c.l.s4 1983009808
        %v2943 = vunpack.c.0.s8 %v2942
        %v2944 = vlaneseq
        %v2945 = vshrl.u32 %v2944, 7
        %v2946 = vsub.s32 %v2943, %v2945
        %v2947 = vrot.slane %v2933, %v2946
        %v2948 = vcombine.low %v2940, %v2947
        %v2949 = vcombine.low %v2877, %v2879
        %v2950 = vcombine.low %v2918, %v2920
        %v2952 = vunpack.c.l.s4 1983009808
        %v2953 = vunpack.c.0.s8 %v2952
        %v2954 = vlaneseq
        %v2955 = vshrl.u32 %v2954, 7
        %v2956 = vsub.s32 %v2953, %v2955
        %v2957 = vrot.slane %v2949, %v2956
        %v2959 = vunpack.c.l.s4 1983009808
        %v2960 = vunpack.c.0.s8 %v2959
        %v2961 = vlaneseq
        %v2962 = vshrl.u32 %v2961, 7
        %v2963 = vsub.s32 %v2960, %v2962
        %v2964 = vrot.slane %v2950, %v2963
        %v2965 = vcombine.low %v2957, %v2964
        %v2968 = vadd.f32 %v2595, %v2948
        %v2969 = vadd.f32 %v2596, %v2965
        %2970 = vst [vmem:[#allocation2] sm:$0xff] %v2968
        %2971 = vst [vmem:[#allocation2 + $0x8] sm:$0xff] %v2969
        %v2972 = vld [vmem:[#allocation3 + $0xa] sm:$0x3]
        %v2973 = vpack.c.bf16 %v2972, %v2972
        %v2974 = vld [vmem:[%s372 + $0x500] sm:$0xff]
        %v2975 = vld [vmem:[%s372 + $0x508] sm:$0xff]
        %v2976 = vld [vmem:[%s372 + $0x510] sm:$0xff]
        %v2977 = vld [vmem:[%s372 + $0x518] sm:$0xff]
        %v2978 = vld [vmem:[%s372 + $0x520] sm:$0xff]
        %v2979 = vld [vmem:[%s372 + $0x528] sm:$0xff]
        %v2980 = vld [vmem:[%s372 + $0x530] sm:$0xff]
        %v2981 = vld [vmem:[%s372 + $0x538] sm:$0xff]
        %v2982 = vld [vmem:[%s372 + $0x540] sm:$0xff]
        %v2983 = vld [vmem:[%s372 + $0x548] sm:$0xff]
        %v2984 = vld [vmem:[%s372 + $0x550] sm:$0xff]
        %v2985 = vld [vmem:[%s372 + $0x558] sm:$0xff]
        %v2986 = vld [vmem:[%s372 + $0x560] sm:$0xff]
        %v2987 = vld [vmem:[%s372 + $0x568] sm:$0xff]
        %v2988 = vld [vmem:[%s372 + $0x570] sm:$0xff]
        %v2989 = vld [vmem:[%s372 + $0x578] sm:$0xff]
        %v2990 = vld [vmem:[%s372 + $0x580] sm:$0xff]
        %v2991 = vld [vmem:[%s372 + $0x588] sm:$0xff]
        %v2992 = vld [vmem:[%s372 + $0x590] sm:$0xff]
        %v2993 = vld [vmem:[%s372 + $0x598] sm:$0xff]
        %v2994 = vld [vmem:[%s372 + $0x5a0] sm:$0xff]
        %v2995 = vld [vmem:[%s372 + $0x5a8] sm:$0xff]
        %v2996 = vld [vmem:[%s372 + $0x5b0] sm:$0xff]
        %v2997 = vld [vmem:[%s372 + $0x5b8] sm:$0xff]
        %v2998 = vld [vmem:[%s372 + $0x5c0] sm:$0xff]
        %v2999 = vld [vmem:[%s372 + $0x5c8] sm:$0xff]
        %v3000 = vld [vmem:[%s372 + $0x5d0] sm:$0xff]
        %v3001 = vld [vmem:[%s372 + $0x5d8] sm:$0xff]
        %v3002 = vld [vmem:[%s372 + $0x5e0] sm:$0xff]
        %v3003 = vld [vmem:[%s372 + $0x5e8] sm:$0xff]
        %v3004 = vld [vmem:[%s372 + $0x5f0] sm:$0xff]
        %v3005 = vld [vmem:[%s372 + $0x5f8] sm:$0xff]
        %v3006 = vld [vmem:[#allocation2] sm:$0xff]
        %v3007 = vld [vmem:[#allocation2 + $0x8] sm:$0xff]
        %v3040 = vunpack.c.l.b16 %v2974
        %v3041 = vunpack.c.h.b16 %v2974
        %v3042 = vunpack.c.l.b16 %v2975
        %v3043 = vunpack.c.h.b16 %v2975
        %v3044 = vunpack.c.l.b16 %v2976
        %v3045 = vunpack.c.h.b16 %v2976
        %v3046 = vunpack.c.l.b16 %v2977
        %v3047 = vunpack.c.h.b16 %v2977
        %v3048 = vunpack.c.l.b16 %v2978
        %v3049 = vunpack.c.h.b16 %v2978
        %v3050 = vunpack.c.l.b16 %v2979
        %v3051 = vunpack.c.h.b16 %v2979
        %v3052 = vunpack.c.l.b16 %v2980
        %v3053 = vunpack.c.h.b16 %v2980
        %v3054 = vunpack.c.l.b16 %v2981
        %v3055 = vunpack.c.h.b16 %v2981
        %v3056 = vunpack.c.l.b16 %v2982
        %v3057 = vunpack.c.h.b16 %v2982
        %v3058 = vunpack.c.l.b16 %v2983
        %v3059 = vunpack.c.h.b16 %v2983
        %v3060 = vunpack.c.l.b16 %v2984
        %v3061 = vunpack.c.h.b16 %v2984
        %v3062 = vunpack.c.l.b16 %v2985
        %v3063 = vunpack.c.h.b16 %v2985
        %v3064 = vunpack.c.l.b16 %v2986
        %v3065 = vunpack.c.h.b16 %v2986
        %v3066 = vunpack.c.l.b16 %v2987
        %v3067 = vunpack.c.h.b16 %v2987
        %v3068 = vunpack.c.l.b16 %v2988
        %v3069 = vunpack.c.h.b16 %v2988
        %v3070 = vunpack.c.l.b16 %v2989
        %v3071 = vunpack.c.h.b16 %v2989
        %v3072 = vunpack.c.l.b16 %v2990
        %v3073 = vunpack.c.h.b16 %v2990
        %v3074 = vunpack.c.l.b16 %v2991
        %v3075 = vunpack.c.h.b16 %v2991
        %v3076 = vunpack.c.l.b16 %v2992
        %v3077 = vunpack.c.h.b16 %v2992
        %v3078 = vunpack.c.l.b16 %v2993
        %v3079 = vunpack.c.h.b16 %v2993
        %v3080 = vunpack.c.l.b16 %v2994
        %v3081 = vunpack.c.h.b16 %v2994
        %v3082 = vunpack.c.l.b16 %v2995
        %v3083 = vunpack.c.h.b16 %v2995
        %v3084 = vunpack.c.l.b16 %v2996
        %v3085 = vunpack.c.h.b16 %v2996
        %v3086 = vunpack.c.l.b16 %v2997
        %v3087 = vunpack.c.h.b16 %v2997
        %v3088 = vunpack.c.l.b16 %v2998
        %v3089 = vunpack.c.h.b16 %v2998
        %v3090 = vunpack.c.l.b16 %v2999
        %v3091 = vunpack.c.h.b16 %v2999
        %v3092 = vunpack.c.l.b16 %v3000
        %v3093 = vunpack.c.h.b16 %v3000
        %v3094 = vunpack.c.l.b16 %v3001
        %v3095 = vunpack.c.h.b16 %v3001
        %v3096 = vunpack.c.l.b16 %v3002
        %v3097 = vunpack.c.h.b16 %v3002
        %v3098 = vunpack.c.l.b16 %v3003
        %v3099 = vunpack.c.h.b16 %v3003
        %v3100 = vunpack.c.l.b16 %v3004
        %v3101 = vunpack.c.h.b16 %v3004
        %v3102 = vunpack.c.l.b16 %v3005
        %v3103 = vunpack.c.h.b16 %v3005
        %v3104 = vpack.c.b16 %v3048, %v3040
        %v3105 = vpack.c.b16 %v3049, %v3041
        %v3106 = vpack.c.b16 %v3050, %v3042
        %v3107 = vpack.c.b16 %v3051, %v3043
        %v3108 = vpack.c.b16 %v3052, %v3044
        %v3109 = vpack.c.b16 %v3053, %v3045
        %v3110 = vpack.c.b16 %v3054, %v3046
        %v3111 = vpack.c.b16 %v3055, %v3047
        %v3112 = vpack.c.b16 %v3064, %v3056
        %v3113 = vpack.c.b16 %v3065, %v3057
        %v3114 = vpack.c.b16 %v3066, %v3058
        %v3115 = vpack.c.b16 %v3067, %v3059
        %v3116 = vpack.c.b16 %v3068, %v3060
        %v3117 = vpack.c.b16 %v3069, %v3061
        %v3118 = vpack.c.b16 %v3070, %v3062
        %v3119 = vpack.c.b16 %v3071, %v3063
        %v3120 = vpack.c.b16 %v3080, %v3072
        %v3121 = vpack.c.b16 %v3081, %v3073
        %v3122 = vpack.c.b16 %v3082, %v3074
        %v3123 = vpack.c.b16 %v3083, %v3075
        %v3124 = vpack.c.b16 %v3084, %v3076
        %v3125 = vpack.c.b16 %v3085, %v3077
        %v3126 = vpack.c.b16 %v3086, %v3078
        %v3127 = vpack.c.b16 %v3087, %v3079
        %v3128 = vpack.c.b16 %v3096, %v3088
        %v3129 = vpack.c.b16 %v3097, %v3089
        %v3130 = vpack.c.b16 %v3098, %v3090
        %v3131 = vpack.c.b16 %v3099, %v3091
        %v3132 = vpack.c.b16 %v3100, %v3092
        %v3133 = vpack.c.b16 %v3101, %v3093
        %v3134 = vpack.c.b16 %v3102, %v3094
        %v3135 = vpack.c.b16 %v3103, %v3095
        %v3169 = vsel %vm914, %v2973, 0
        %3171 = vmatprep.subr.bf16.mxu0 0
        %3172 = vmatpush1.bf16.msra.mxu0 0
        %3173 = vmatprep.subr.bf16.mxu0 0
        %3174 = vmatpush1.bf16.msra.mxu0 0
        %3175 = vmatprep.subr.bf16.mxu0 0
        %3176 = vmatpush1.bf16.msra.mxu0 0
        %3177 = vmatprep.subr.bf16.mxu0 0
        %3178 = vmatpush1.bf16.msra.mxu0 0
        %3179 = vmatprep.subr.bf16.mxu0 %v3129
        %3180 = vmatpush1.bf16.msra.mxu0 %v3128
        %3181 = vmatprep.subr.bf16.mxu0 %v3121
        %3182 = vmatpush1.bf16.msra.mxu0 %v3120
        %3183 = vmatprep.subr.bf16.mxu0 %v3113
        %3184 = vmatpush1.bf16.msra.mxu0 %v3112
        %3185 = vmatprep.subr.bf16.mxu0 %v3105
        %3186 = vmatpush1.bf16.msra.mxu0 %v3104
        %3187 = vmatprep.subr.bf16.mxu0 0
        %3188 = vmatpush2.bf16.msra.mxu0 0
        %3189 = vmatprep.subr.bf16.mxu0 0
        %3190 = vmatpush2.bf16.msra.mxu0 0
        %3191 = vmatprep.subr.bf16.mxu0 0
        %3192 = vmatpush2.bf16.msra.mxu0 0
        %3193 = vmatprep.subr.bf16.mxu0 0
        %3194 = vmatpush2.bf16.msra.mxu0 0
        %3195 = vmatprep.subr.bf16.mxu0 0
        %3196 = vmatpush2.bf16.msra.mxu0 0
        %3197 = vmatprep.subr.bf16.mxu0 0
        %3198 = vmatpush2.bf16.msra.mxu0 0
        %3199 = vmatprep.subr.bf16.mxu0 0
        %3200 = vmatpush2.bf16.msra.mxu0 0
        %3201 = vmatprep.subr.bf16.mxu0 0
        %3202 = vmatpush2.bf16.msra.mxu0 0
        %3203 = vmatprep.mubr.bf16.mxu0 0
        %3204 = vmatmul.mubr.bf16.gmra.mxu0 %v3169
        %v3205 = vpop.f32.mrf.mxu0
        %v3206 = vadd.f32 0.0, %v3205
        %v3207 = vpop.f32.mrf.mxu0
        %v3208 = vadd.f32 0.0, %v3207
        %v3209 = vpop.f32.mrf.mxu0
        %v3210 = vpop.f32.mrf.mxu0
        %3211 = vdwg.mxu0
        %3212 = vmatprep.subr.bf16.mxu0 0
        %3213 = vmatpush1.bf16.msra.mxu0 0
        %3214 = vmatprep.subr.bf16.mxu0 0
        %3215 = vmatpush1.bf16.msra.mxu0 0
        %3216 = vmatprep.subr.bf16.mxu0 0
        %3217 = vmatpush1.bf16.msra.mxu0 0
        %3218 = vmatprep.subr.bf16.mxu0 0
        %3219 = vmatpush1.bf16.msra.mxu0 0
        %3220 = vmatprep.subr.bf16.mxu0 %v3131
        %3221 = vmatpush1.bf16.msra.mxu0 %v3130
        %3222 = vmatprep.subr.bf16.mxu0 %v3123
        %3223 = vmatpush1.bf16.msra.mxu0 %v3122
        %3224 = vmatprep.subr.bf16.mxu0 %v3115
        %3225 = vmatpush1.bf16.msra.mxu0 %v3114
        %3226 = vmatprep.subr.bf16.mxu0 %v3107
        %3227 = vmatpush1.bf16.msra.mxu0 %v3106
        %3228 = vmatprep.subr.bf16.mxu0 0
        %3229 = vmatpush2.bf16.msra.mxu0 0
        %3230 = vmatprep.subr.bf16.mxu0 0
        %3231 = vmatpush2.bf16.msra.mxu0 0
        %3232 = vmatprep.subr.bf16.mxu0 0
        %3233 = vmatpush2.bf16.msra.mxu0 0
        %3234 = vmatprep.subr.bf16.mxu0 0
        %3235 = vmatpush2.bf16.msra.mxu0 0
        %3236 = vmatprep.subr.bf16.mxu0 0
        %3237 = vmatpush2.bf16.msra.mxu0 0
        %3238 = vmatprep.subr.bf16.mxu0 0
        %3239 = vmatpush2.bf16.msra.mxu0 0
        %3240 = vmatprep.subr.bf16.mxu0 0
        %3241 = vmatpush2.bf16.msra.mxu0 0
        %3242 = vmatprep.subr.bf16.mxu0 0
        %3243 = vmatpush2.bf16.msra.mxu0 0
        %3244 = vmatprep.mubr.bf16.mxu0 0
        %3245 = vmatmul.mubr.bf16.gmra.mxu0 %v3169
        %v3246 = vpop.f32.mrf.mxu0
        %v3247 = vadd.f32 0.0, %v3246
        %v3248 = vpop.f32.mrf.mxu0
        %v3249 = vadd.f32 0.0, %v3248
        %v3250 = vpop.f32.mrf.mxu0
        %v3251 = vpop.f32.mrf.mxu0
        %3252 = vdwg.mxu0
        %3253 = vmatprep.subr.bf16.mxu0 0
        %3254 = vmatpush1.bf16.msra.mxu0 0
        %3255 = vmatprep.subr.bf16.mxu0 0
        %3256 = vmatpush1.bf16.msra.mxu0 0
        %3257 = vmatprep.subr.bf16.mxu0 0
        %3258 = vmatpush1.bf16.msra.mxu0 0
        %3259 = vmatprep.subr.bf16.mxu0 0
        %3260 = vmatpush1.bf16.msra.mxu0 0
        %3261 = vmatprep.subr.bf16.mxu0 %v3133
        %3262 = vmatpush1.bf16.msra.mxu0 %v3132
        %3263 = vmatprep.subr.bf16.mxu0 %v3125
        %3264 = vmatpush1.bf16.msra.mxu0 %v3124
        %3265 = vmatprep.subr.bf16.mxu0 %v3117
        %3266 = vmatpush1.bf16.msra.mxu0 %v3116
        %3267 = vmatprep.subr.bf16.mxu0 %v3109
        %3268 = vmatpush1.bf16.msra.mxu0 %v3108
        %3269 = vmatprep.subr.bf16.mxu0 0
        %3270 = vmatpush2.bf16.msra.mxu0 0
        %3271 = vmatprep.subr.bf16.mxu0 0
        %3272 = vmatpush2.bf16.msra.mxu0 0
        %3273 = vmatprep.subr.bf16.mxu0 0
        %3274 = vmatpush2.bf16.msra.mxu0 0
        %3275 = vmatprep.subr.bf16.mxu0 0
        %3276 = vmatpush2.bf16.msra.mxu0 0
        %3277 = vmatprep.subr.bf16.mxu0 0
        %3278 = vmatpush2.bf16.msra.mxu0 0
        %3279 = vmatprep.subr.bf16.mxu0 0
        %3280 = vmatpush2.bf16.msra.mxu0 0
        %3281 = vmatprep.subr.bf16.mxu0 0
        %3282 = vmatpush2.bf16.msra.mxu0 0
        %3283 = vmatprep.subr.bf16.mxu0 0
        %3284 = vmatpush2.bf16.msra.mxu0 0
        %3285 = vmatprep.mubr.bf16.mxu0 0
        %3286 = vmatmul.mubr.bf16.gmra.mxu0 %v3169
        %v3287 = vpop.f32.mrf.mxu0
        %v3288 = vadd.f32 0.0, %v3287
        %v3289 = vpop.f32.mrf.mxu0
        %v3290 = vadd.f32 0.0, %v3289
        %v3291 = vpop.f32.mrf.mxu0
        %v3292 = vpop.f32.mrf.mxu0
        %3293 = vdwg.mxu0
        %3294 = vmatprep.subr.bf16.mxu0 0
        %3295 = vmatpush1.bf16.msra.mxu0 0
        %3296 = vmatprep.subr.bf16.mxu0 0
        %3297 = vmatpush1.bf16.msra.mxu0 0
        %3298 = vmatprep.subr.bf16.mxu0 0
        %3299 = vmatpush1.bf16.msra.mxu0 0
        %3300 = vmatprep.subr.bf16.mxu0 0
        %3301 = vmatpush1.bf16.msra.mxu0 0
        %3302 = vmatprep.subr.bf16.mxu0 %v3135
        %3303 = vmatpush1.bf16.msra.mxu0 %v3134
        %3304 = vmatprep.subr.bf16.mxu0 %v3127
        %3305 = vmatpush1.bf16.msra.mxu0 %v3126
        %3306 = vmatprep.subr.bf16.mxu0 %v3119
        %3307 = vmatpush1.bf16.msra.mxu0 %v3118
        %3308 = vmatprep.subr.bf16.mxu0 %v3111
        %3309 = vmatpush1.bf16.msra.mxu0 %v3110
        %3310 = vmatprep.subr.bf16.mxu0 0
        %3311 = vmatpush2.bf16.msra.mxu0 0
        %3312 = vmatprep.subr.bf16.mxu0 0
        %3313 = vmatpush2.bf16.msra.mxu0 0
        %3314 = vmatprep.subr.bf16.mxu0 0
        %3315 = vmatpush2.bf16.msra.mxu0 0
        %3316 = vmatprep.subr.bf16.mxu0 0
        %3317 = vmatpush2.bf16.msra.mxu0 0
        %3318 = vmatprep.subr.bf16.mxu0 0
        %3319 = vmatpush2.bf16.msra.mxu0 0
        %3320 = vmatprep.subr.bf16.mxu0 0
        %3321 = vmatpush2.bf16.msra.mxu0 0
        %3322 = vmatprep.subr.bf16.mxu0 0
        %3323 = vmatpush2.bf16.msra.mxu0 0
        %3324 = vmatprep.subr.bf16.mxu0 0
        %3325 = vmatpush2.bf16.msra.mxu0 0
        %3326 = vmatprep.mubr.bf16.mxu0 0
        %3327 = vmatmul.mubr.bf16.gmra.mxu0 %v3169
        %v3328 = vpop.f32.mrf.mxu0
        %v3329 = vadd.f32 0.0, %v3328
        %v3330 = vpop.f32.mrf.mxu0
        %v3331 = vadd.f32 0.0, %v3330
        %v3332 = vpop.f32.mrf.mxu0
        %v3333 = vpop.f32.mrf.mxu0
        %3334 = vdwg.mxu0
        %v3343 = vcombine.low %v3206, %v3208
        %v3344 = vcombine.low %v3247, %v3249
        %v3346 = vunpack.c.l.s4 1983009808
        %v3347 = vunpack.c.0.s8 %v3346
        %v3348 = vlaneseq
        %v3349 = vshrl.u32 %v3348, 7
        %v3350 = vsub.s32 %v3347, %v3349
        %v3351 = vrot.slane %v3343, %v3350
        %v3353 = vunpack.c.l.s4 1983009808
        %v3354 = vunpack.c.0.s8 %v3353
        %v3355 = vlaneseq
        %v3356 = vshrl.u32 %v3355, 7
        %v3357 = vsub.s32 %v3354, %v3356
        %v3358 = vrot.slane %v3344, %v3357
        %v3359 = vcombine.low %v3351, %v3358
        %v3360 = vcombine.low %v3288, %v3290
        %v3361 = vcombine.low %v3329, %v3331
        %v3363 = vunpack.c.l.s4 1983009808
        %v3364 = vunpack.c.0.s8 %v3363
        %v3365 = vlaneseq
        %v3366 = vshrl.u32 %v3365, 7
        %v3367 = vsub.s32 %v3364, %v3366
        %v3368 = vrot.slane %v3360, %v3367
        %v3370 = vunpack.c.l.s4 1983009808
        %v3371 = vunpack.c.0.s8 %v3370
        %v3372 = vlaneseq
        %v3373 = vshrl.u32 %v3372, 7
        %v3374 = vsub.s32 %v3371, %v3373
        %v3375 = vrot.slane %v3361, %v3374
        %v3376 = vcombine.low %v3368, %v3375
        %v3379 = vadd.f32 %v3006, %v3359
        %v3380 = vadd.f32 %v3007, %v3376
        %3381 = vst [vmem:[#allocation2] sm:$0xff] %v3379
        %3382 = vst [vmem:[#allocation2 + $0x8] sm:$0xff] %v3380
        %v3383 = vld [vmem:[#allocation3 + $0xc] sm:$0x3]
        %v3384 = vpack.c.bf16 %v3383, %v3383
        %v3385 = vld [vmem:[%s372 + $0x600] sm:$0xff]
        %v3386 = vld [vmem:[%s372 + $0x608] sm:$0xff]
        %v3387 = vld [vmem:[%s372 + $0x610] sm:$0xff]
        %v3388 = vld [vmem:[%s372 + $0x618] sm:$0xff]
        %v3389 = vld [vmem:[%s372 + $0x620] sm:$0xff]
        %v3390 = vld [vmem:[%s372 + $0x628] sm:$0xff]
        %v3391 = vld [vmem:[%s372 + $0x630] sm:$0xff]
        %v3392 = vld [vmem:[%s372 + $0x638] sm:$0xff]
        %v3393 = vld [vmem:[%s372 + $0x640] sm:$0xff]
        %v3394 = vld [vmem:[%s372 + $0x648] sm:$0xff]
        %v3395 = vld [vmem:[%s372 + $0x650] sm:$0xff]
        %v3396 = vld [vmem:[%s372 + $0x658] sm:$0xff]
        %v3397 = vld [vmem:[%s372 + $0x660] sm:$0xff]
        %v3398 = vld [vmem:[%s372 + $0x668] sm:$0xff]
        %v3399 = vld [vmem:[%s372 + $0x670] sm:$0xff]
        %v3400 = vld [vmem:[%s372 + $0x678] sm:$0xff]
        %v3401 = vld [vmem:[%s372 + $0x680] sm:$0xff]
        %v3402 = vld [vmem:[%s372 + $0x688] sm:$0xff]
        %v3403 = vld [vmem:[%s372 + $0x690] sm:$0xff]
        %v3404 = vld [vmem:[%s372 + $0x698] sm:$0xff]
        %v3405 = vld [vmem:[%s372 + $0x6a0] sm:$0xff]
        %v3406 = vld [vmem:[%s372 + $0x6a8] sm:$0xff]
        %v3407 = vld [vmem:[%s372 + $0x6b0] sm:$0xff]
        %v3408 = vld [vmem:[%s372 + $0x6b8] sm:$0xff]
        %v3409 = vld [vmem:[%s372 + $0x6c0] sm:$0xff]
        %v3410 = vld [vmem:[%s372 + $0x6c8] sm:$0xff]
        %v3411 = vld [vmem:[%s372 + $0x6d0] sm:$0xff]
        %v3412 = vld [vmem:[%s372 + $0x6d8] sm:$0xff]
        %v3413 = vld [vmem:[%s372 + $0x6e0] sm:$0xff]
        %v3414 = vld [vmem:[%s372 + $0x6e8] sm:$0xff]
        %v3415 = vld [vmem:[%s372 + $0x6f0] sm:$0xff]
        %v3416 = vld [vmem:[%s372 + $0x6f8] sm:$0xff]
        %v3417 = vld [vmem:[#allocation2] sm:$0xff]
        %v3418 = vld [vmem:[#allocation2 + $0x8] sm:$0xff]
        %v3451 = vunpack.c.l.b16 %v3385
        %v3452 = vunpack.c.h.b16 %v3385
        %v3453 = vunpack.c.l.b16 %v3386
        %v3454 = vunpack.c.h.b16 %v3386
        %v3455 = vunpack.c.l.b16 %v3387
        %v3456 = vunpack.c.h.b16 %v3387
        %v3457 = vunpack.c.l.b16 %v3388
        %v3458 = vunpack.c.h.b16 %v3388
        %v3459 = vunpack.c.l.b16 %v3389
        %v3460 = vunpack.c.h.b16 %v3389
        %v3461 = vunpack.c.l.b16 %v3390
        %v3462 = vunpack.c.h.b16 %v3390
        %v3463 = vunpack.c.l.b16 %v3391
        %v3464 = vunpack.c.h.b16 %v3391
        %v3465 = vunpack.c.l.b16 %v3392
        %v3466 = vunpack.c.h.b16 %v3392
        %v3467 = vunpack.c.l.b16 %v3393
        %v3468 = vunpack.c.h.b16 %v3393
        %v3469 = vunpack.c.l.b16 %v3394
        %v3470 = vunpack.c.h.b16 %v3394
        %v3471 = vunpack.c.l.b16 %v3395
        %v3472 = vunpack.c.h.b16 %v3395
        %v3473 = vunpack.c.l.b16 %v3396
        %v3474 = vunpack.c.h.b16 %v3396
        %v3475 = vunpack.c.l.b16 %v3397
        %v3476 = vunpack.c.h.b16 %v3397
        %v3477 = vunpack.c.l.b16 %v3398
        %v3478 = vunpack.c.h.b16 %v3398
        %v3479 = vunpack.c.l.b16 %v3399
        %v3480 = vunpack.c.h.b16 %v3399
        %v3481 = vunpack.c.l.b16 %v3400
        %v3482 = vunpack.c.h.b16 %v3400
        %v3483 = vunpack.c.l.b16 %v3401
        %v3484 = vunpack.c.h.b16 %v3401
        %v3485 = vunpack.c.l.b16 %v3402
        %v3486 = vunpack.c.h.b16 %v3402
        %v3487 = vunpack.c.l.b16 %v3403
        %v3488 = vunpack.c.h.b16 %v3403
        %v3489 = vunpack.c.l.b16 %v3404
        %v3490 = vunpack.c.h.b16 %v3404
        %v3491 = vunpack.c.l.b16 %v3405
        %v3492 = vunpack.c.h.b16 %v3405
        %v3493 = vunpack.c.l.b16 %v3406
        %v3494 = vunpack.c.h.b16 %v3406
        %v3495 = vunpack.c.l.b16 %v3407
        %v3496 = vunpack.c.h.b16 %v3407
        %v3497 = vunpack.c.l.b16 %v3408
        %v3498 = vunpack.c.h.b16 %v3408
        %v3499 = vunpack.c.l.b16 %v3409
        %v3500 = vunpack.c.h.b16 %v3409
        %v3501 = vunpack.c.l.b16 %v3410
        %v3502 = vunpack.c.h.b16 %v3410
        %v3503 = vunpack.c.l.b16 %v3411
        %v3504 = vunpack.c.h.b16 %v3411
        %v3505 = vunpack.c.l.b16 %v3412
        %v3506 = vunpack.c.h.b16 %v3412
        %v3507 = vunpack.c.l.b16 %v3413
        %v3508 = vunpack.c.h.b16 %v3413
        %v3509 = vunpack.c.l.b16 %v3414
        %v3510 = vunpack.c.h.b16 %v3414
        %v3511 = vunpack.c.l.b16 %v3415
        %v3512 = vunpack.c.h.b16 %v3415
        %v3513 = vunpack.c.l.b16 %v3416
        %v3514 = vunpack.c.h.b16 %v3416
        %v3515 = vpack.c.b16 %v3459, %v3451
        %v3516 = vpack.c.b16 %v3460, %v3452
        %v3517 = vpack.c.b16 %v3461, %v3453
        %v3518 = vpack.c.b16 %v3462, %v3454
        %v3519 = vpack.c.b16 %v3463, %v3455
        %v3520 = vpack.c.b16 %v3464, %v3456
        %v3521 = vpack.c.b16 %v3465, %v3457
        %v3522 = vpack.c.b16 %v3466, %v3458
        %v3523 = vpack.c.b16 %v3475, %v3467
        %v3524 = vpack.c.b16 %v3476, %v3468
        %v3525 = vpack.c.b16 %v3477, %v3469
        %v3526 = vpack.c.b16 %v3478, %v3470
        %v3527 = vpack.c.b16 %v3479, %v3471
        %v3528 = vpack.c.b16 %v3480, %v3472
        %v3529 = vpack.c.b16 %v3481, %v3473
        %v3530 = vpack.c.b16 %v3482, %v3474
        %v3531 = vpack.c.b16 %v3491, %v3483
        %v3532 = vpack.c.b16 %v3492, %v3484
        %v3533 = vpack.c.b16 %v3493, %v3485
        %v3534 = vpack.c.b16 %v3494, %v3486
        %v3535 = vpack.c.b16 %v3495, %v3487
        %v3536 = vpack.c.b16 %v3496, %v3488
        %v3537 = vpack.c.b16 %v3497, %v3489
        %v3538 = vpack.c.b16 %v3498, %v3490
        %v3539 = vpack.c.b16 %v3507, %v3499
        %v3540 = vpack.c.b16 %v3508, %v3500
        %v3541 = vpack.c.b16 %v3509, %v3501
        %v3542 = vpack.c.b16 %v3510, %v3502
        %v3543 = vpack.c.b16 %v3511, %v3503
        %v3544 = vpack.c.b16 %v3512, %v3504
        %v3545 = vpack.c.b16 %v3513, %v3505
        %v3546 = vpack.c.b16 %v3514, %v3506
        %v3580 = vsel %vm914, %v3384, 0
        %3582 = vmatprep.subr.bf16.mxu0 0
        %3583 = vmatpush1.bf16.msra.mxu0 0
        %3584 = vmatprep.subr.bf16.mxu0 0
        %3585 = vmatpush1.bf16.msra.mxu0 0
        %3586 = vmatprep.subr.bf16.mxu0 0
        %3587 = vmatpush1.bf16.msra.mxu0 0
        %3588 = vmatprep.subr.bf16.mxu0 0
        %3589 = vmatpush1.bf16.msra.mxu0 0
        %3590 = vmatprep.subr.bf16.mxu0 %v3540
        %3591 = vmatpush1.bf16.msra.mxu0 %v3539
        %3592 = vmatprep.subr.bf16.mxu0 %v3532
        %3593 = vmatpush1.bf16.msra.mxu0 %v3531
        %3594 = vmatprep.subr.bf16.mxu0 %v3524
        %3595 = vmatpush1.bf16.msra.mxu0 %v3523
        %3596 = vmatprep.subr.bf16.mxu0 %v3516
        %3597 = vmatpush1.bf16.msra.mxu0 %v3515
        %3598 = vmatprep.subr.bf16.mxu0 0
        %3599 = vmatpush2.bf16.msra.mxu0 0
        %3600 = vmatprep.subr.bf16.mxu0 0
        %3601 = vmatpush2.bf16.msra.mxu0 0
        %3602 = vmatprep.subr.bf16.mxu0 0
        %3603 = vmatpush2.bf16.msra.mxu0 0
        %3604 = vmatprep.subr.bf16.mxu0 0
        %3605 = vmatpush2.bf16.msra.mxu0 0
        %3606 = vmatprep.subr.bf16.mxu0 0
        %3607 = vmatpush2.bf16.msra.mxu0 0
        %3608 = vmatprep.subr.bf16.mxu0 0
        %3609 = vmatpush2.bf16.msra.mxu0 0
        %3610 = vmatprep.subr.bf16.mxu0 0
        %3611 = vmatpush2.bf16.msra.mxu0 0
        %3612 = vmatprep.subr.bf16.mxu0 0
        %3613 = vmatpush2.bf16.msra.mxu0 0
        %3614 = vmatprep.mubr.bf16.mxu0 0
        %3615 = vmatmul.mubr.bf16.gmra.mxu0 %v3580
        %v3616 = vpop.f32.mrf.mxu0
        %v3617 = vadd.f32 0.0, %v3616
        %v3618 = vpop.f32.mrf.mxu0
        %v3619 = vadd.f32 0.0, %v3618
        %v3620 = vpop.f32.mrf.mxu0
        %v3621 = vpop.f32.mrf.mxu0
        %3622 = vdwg.mxu0
        %3623 = vmatprep.subr.bf16.mxu0 0
        %3624 = vmatpush1.bf16.msra.mxu0 0
        %3625 = vmatprep.subr.bf16.mxu0 0
        %3626 = vmatpush1.bf16.msra.mxu0 0
        %3627 = vmatprep.subr.bf16.mxu0 0
        %3628 = vmatpush1.bf16.msra.mxu0 0
        %3629 = vmatprep.subr.bf16.mxu0 0
        %3630 = vmatpush1.bf16.msra.mxu0 0
        %3631 = vmatprep.subr.bf16.mxu0 %v3542
        %3632 = vmatpush1.bf16.msra.mxu0 %v3541
        %3633 = vmatprep.subr.bf16.mxu0 %v3534
        %3634 = vmatpush1.bf16.msra.mxu0 %v3533
        %3635 = vmatprep.subr.bf16.mxu0 %v3526
        %3636 = vmatpush1.bf16.msra.mxu0 %v3525
        %3637 = vmatprep.subr.bf16.mxu0 %v3518
        %3638 = vmatpush1.bf16.msra.mxu0 %v3517
        %3639 = vmatprep.subr.bf16.mxu0 0
        %3640 = vmatpush2.bf16.msra.mxu0 0
        %3641 = vmatprep.subr.bf16.mxu0 0
        %3642 = vmatpush2.bf16.msra.mxu0 0
        %3643 = vmatprep.subr.bf16.mxu0 0
        %3644 = vmatpush2.bf16.msra.mxu0 0
        %3645 = vmatprep.subr.bf16.mxu0 0
        %3646 = vmatpush2.bf16.msra.mxu0 0
        %3647 = vmatprep.subr.bf16.mxu0 0
        %3648 = vmatpush2.bf16.msra.mxu0 0
        %3649 = vmatprep.subr.bf16.mxu0 0
        %3650 = vmatpush2.bf16.msra.mxu0 0
        %3651 = vmatprep.subr.bf16.mxu0 0
        %3652 = vmatpush2.bf16.msra.mxu0 0
        %3653 = vmatprep.subr.bf16.mxu0 0
        %3654 = vmatpush2.bf16.msra.mxu0 0
        %3655 = vmatprep.mubr.bf16.mxu0 0
        %3656 = vmatmul.mubr.bf16.gmra.mxu0 %v3580
        %v3657 = vpop.f32.mrf.mxu0
        %v3658 = vadd.f32 0.0, %v3657
        %v3659 = vpop.f32.mrf.mxu0
        %v3660 = vadd.f32 0.0, %v3659
        %v3661 = vpop.f32.mrf.mxu0
        %v3662 = vpop.f32.mrf.mxu0
        %3663 = vdwg.mxu0
        %3664 = vmatprep.subr.bf16.mxu0 0
        %3665 = vmatpush1.bf16.msra.mxu0 0
        %3666 = vmatprep.subr.bf16.mxu0 0
        %3667 = vmatpush1.bf16.msra.mxu0 0
        %3668 = vmatprep.subr.bf16.mxu0 0
        %3669 = vmatpush1.bf16.msra.mxu0 0
        %3670 = vmatprep.subr.bf16.mxu0 0
        %3671 = vmatpush1.bf16.msra.mxu0 0
        %3672 = vmatprep.subr.bf16.mxu0 %v3544
        %3673 = vmatpush1.bf16.msra.mxu0 %v3543
        %3674 = vmatprep.subr.bf16.mxu0 %v3536
        %3675 = vmatpush1.bf16.msra.mxu0 %v3535
        %3676 = vmatprep.subr.bf16.mxu0 %v3528
        %3677 = vmatpush1.bf16.msra.mxu0 %v3527
        %3678 = vmatprep.subr.bf16.mxu0 %v3520
        %3679 = vmatpush1.bf16.msra.mxu0 %v3519
        %3680 = vmatprep.subr.bf16.mxu0 0
        %3681 = vmatpush2.bf16.msra.mxu0 0
        %3682 = vmatprep.subr.bf16.mxu0 0
        %3683 = vmatpush2.bf16.msra.mxu0 0
        %3684 = vmatprep.subr.bf16.mxu0 0
        %3685 = vmatpush2.bf16.msra.mxu0 0
        %3686 = vmatprep.subr.bf16.mxu0 0
        %3687 = vmatpush2.bf16.msra.mxu0 0
        %3688 = vmatprep.subr.bf16.mxu0 0
        %3689 = vmatpush2.bf16.msra.mxu0 0
        %3690 = vmatprep.subr.bf16.mxu0 0
        %3691 = vmatpush2.bf16.msra.mxu0 0
        %3692 = vmatprep.subr.bf16.mxu0 0
        %3693 = vmatpush2.bf16.msra.mxu0 0
        %3694 = vmatprep.subr.bf16.mxu0 0
        %3695 = vmatpush2.bf16.msra.mxu0 0
        %3696 = vmatprep.mubr.bf16.mxu0 0
        %3697 = vmatmul.mubr.bf16.gmra.mxu0 %v3580
        %v3698 = vpop.f32.mrf.mxu0
        %v3699 = vadd.f32 0.0, %v3698
        %v3700 = vpop.f32.mrf.mxu0
        %v3701 = vadd.f32 0.0, %v3700
        %v3702 = vpop.f32.mrf.mxu0
        %v3703 = vpop.f32.mrf.mxu0
        %3704 = vdwg.mxu0
        %3705 = vmatprep.subr.bf16.mxu0 0
        %3706 = vmatpush1.bf16.msra.mxu0 0
        %3707 = vmatprep.subr.bf16.mxu0 0
        %3708 = vmatpush1.bf16.msra.mxu0 0
        %3709 = vmatprep.subr.bf16.mxu0 0
        %3710 = vmatpush1.bf16.msra.mxu0 0
        %3711 = vmatprep.subr.bf16.mxu0 0
        %3712 = vmatpush1.bf16.msra.mxu0 0
        %3713 = vmatprep.subr.bf16.mxu0 %v3546
        %3714 = vmatpush1.bf16.msra.mxu0 %v3545
        %3715 = vmatprep.subr.bf16.mxu0 %v3538
        %3716 = vmatpush1.bf16.msra.mxu0 %v3537
        %3717 = vmatprep.subr.bf16.mxu0 %v3530
        %3718 = vmatpush1.bf16.msra.mxu0 %v3529
        %3719 = vmatprep.subr.bf16.mxu0 %v3522
        %3720 = vmatpush1.bf16.msra.mxu0 %v3521
        %3721 = vmatprep.subr.bf16.mxu0 0
        %3722 = vmatpush2.bf16.msra.mxu0 0
        %3723 = vmatprep.subr.bf16.mxu0 0
        %3724 = vmatpush2.bf16.msra.mxu0 0
        %3725 = vmatprep.subr.bf16.mxu0 0
        %3726 = vmatpush2.bf16.msra.mxu0 0
        %3727 = vmatprep.subr.bf16.mxu0 0
        %3728 = vmatpush2.bf16.msra.mxu0 0
        %3729 = vmatprep.subr.bf16.mxu0 0
        %3730 = vmatpush2.bf16.msra.mxu0 0
        %3731 = vmatprep.subr.bf16.mxu0 0
        %3732 = vmatpush2.bf16.msra.mxu0 0
        %3733 = vmatprep.subr.bf16.mxu0 0
        %3734 = vmatpush2.bf16.msra.mxu0 0
        %3735 = vmatprep.subr.bf16.mxu0 0
        %3736 = vmatpush2.bf16.msra.mxu0 0
        %3737 = vmatprep.mubr.bf16.mxu0 0
        %3738 = vmatmul.mubr.bf16.gmra.mxu0 %v3580
        %v3739 = vpop.f32.mrf.mxu0
        %v3740 = vadd.f32 0.0, %v3739
        %v3741 = vpop.f32.mrf.mxu0
        %v3742 = vadd.f32 0.0, %v3741
        %v3743 = vpop.f32.mrf.mxu0
        %v3744 = vpop.f32.mrf.mxu0
        %3745 = vdwg.mxu0
        %v3754 = vcombine.low %v3617, %v3619
        %v3755 = vcombine.low %v3658, %v3660
        %v3757 = vunpack.c.l.s4 1983009808
        %v3758 = vunpack.c.0.s8 %v3757
        %v3759 = vlaneseq
        %v3760 = vshrl.u32 %v3759, 7
        %v3761 = vsub.s32 %v3758, %v3760
        %v3762 = vrot.slane %v3754, %v3761
        %v3764 = vunpack.c.l.s4 1983009808
        %v3765 = vunpack.c.0.s8 %v3764
        %v3766 = vlaneseq
        %v3767 = vshrl.u32 %v3766, 7
        %v3768 = vsub.s32 %v3765, %v3767
        %v3769 = vrot.slane %v3755, %v3768
        %v3770 = vcombine.low %v3762, %v3769
        %v3771 = vcombine.low %v3699, %v3701
        %v3772 = vcombine.low %v3740, %v3742
        %v3774 = vunpack.c.l.s4 1983009808
        %v3775 = vunpack.c.0.s8 %v3774
        %v3776 = vlaneseq
        %v3777 = vshrl.u32 %v3776, 7
        %v3778 = vsub.s32 %v3775, %v3777
        %v3779 = vrot.slane %v3771, %v3778
        %v3781 = vunpack.c.l.s4 1983009808
        %v3782 = vunpack.c.0.s8 %v3781
        %v3783 = vlaneseq
        %v3784 = vshrl.u32 %v3783, 7
        %v3785 = vsub.s32 %v3782, %v3784
        %v3786 = vrot.slane %v3772, %v3785
        %v3787 = vcombine.low %v3779, %v3786
        %v3790 = vadd.f32 %v3417, %v3770
        %v3791 = vadd.f32 %v3418, %v3787
        %3792 = vst [vmem:[#allocation2] sm:$0xff] %v3790
        %3793 = vst [vmem:[#allocation2 + $0x8] sm:$0xff] %v3791
        %v3794 = vld [vmem:[#allocation3 + $0xe] sm:$0x3]
        %v3795 = vpack.c.bf16 %v3794, %v3794
        %v3796 = vld [vmem:[%s372 + $0x700] sm:$0xff]
        %v3797 = vld [vmem:[%s372 + $0x708] sm:$0xff]
        %v3798 = vld [vmem:[%s372 + $0x710] sm:$0xff]
        %v3799 = vld [vmem:[%s372 + $0x718] sm:$0xff]
        %v3800 = vld [vmem:[%s372 + $0x720] sm:$0xff]
        %v3801 = vld [vmem:[%s372 + $0x728] sm:$0xff]
        %v3802 = vld [vmem:[%s372 + $0x730] sm:$0xff]
        %v3803 = vld [vmem:[%s372 + $0x738] sm:$0xff]
        %v3804 = vld [vmem:[%s372 + $0x740] sm:$0xff]
        %v3805 = vld [vmem:[%s372 + $0x748] sm:$0xff]
        %v3806 = vld [vmem:[%s372 + $0x750] sm:$0xff]
        %v3807 = vld [vmem:[%s372 + $0x758] sm:$0xff]
        %v3808 = vld [vmem:[%s372 + $0x760] sm:$0xff]
        %v3809 = vld [vmem:[%s372 + $0x768] sm:$0xff]
        %v3810 = vld [vmem:[%s372 + $0x770] sm:$0xff]
        %v3811 = vld [vmem:[%s372 + $0x778] sm:$0xff]
        %v3812 = vld [vmem:[%s372 + $0x780] sm:$0xff]
        %v3813 = vld [vmem:[%s372 + $0x788] sm:$0xff]
        %v3814 = vld [vmem:[%s372 + $0x790] sm:$0xff]
        %v3815 = vld [vmem:[%s372 + $0x798] sm:$0xff]
        %v3816 = vld [vmem:[%s372 + $0x7a0] sm:$0xff]
        %v3817 = vld [vmem:[%s372 + $0x7a8] sm:$0xff]
        %v3818 = vld [vmem:[%s372 + $0x7b0] sm:$0xff]
        %v3819 = vld [vmem:[%s372 + $0x7b8] sm:$0xff]
        %v3820 = vld [vmem:[%s372 + $0x7c0] sm:$0xff]
        %v3821 = vld [vmem:[%s372 + $0x7c8] sm:$0xff]
        %v3822 = vld [vmem:[%s372 + $0x7d0] sm:$0xff]
        %v3823 = vld [vmem:[%s372 + $0x7d8] sm:$0xff]
        %v3824 = vld [vmem:[%s372 + $0x7e0] sm:$0xff]
        %v3825 = vld [vmem:[%s372 + $0x7e8] sm:$0xff]
        %v3826 = vld [vmem:[%s372 + $0x7f0] sm:$0xff]
        %v3827 = vld [vmem:[%s372 + $0x7f8] sm:$0xff]
        %v3828 = vld [vmem:[#allocation2] sm:$0xff]
        %v3829 = vld [vmem:[#allocation2 + $0x8] sm:$0xff]
        %v3862 = vunpack.c.l.b16 %v3796
        %v3863 = vunpack.c.h.b16 %v3796
        %v3864 = vunpack.c.l.b16 %v3797
        %v3865 = vunpack.c.h.b16 %v3797
        %v3866 = vunpack.c.l.b16 %v3798
        %v3867 = vunpack.c.h.b16 %v3798
        %v3868 = vunpack.c.l.b16 %v3799
        %v3869 = vunpack.c.h.b16 %v3799
        %v3870 = vunpack.c.l.b16 %v3800
        %v3871 = vunpack.c.h.b16 %v3800
        %v3872 = vunpack.c.l.b16 %v3801
        %v3873 = vunpack.c.h.b16 %v3801
        %v3874 = vunpack.c.l.b16 %v3802
        %v3875 = vunpack.c.h.b16 %v3802
        %v3876 = vunpack.c.l.b16 %v3803
        %v3877 = vunpack.c.h.b16 %v3803
        %v3878 = vunpack.c.l.b16 %v3804
        %v3879 = vunpack.c.h.b16 %v3804
        %v3880 = vunpack.c.l.b16 %v3805
        %v3881 = vunpack.c.h.b16 %v3805
        %v3882 = vunpack.c.l.b16 %v3806
        %v3883 = vunpack.c.h.b16 %v3806
        %v3884 = vunpack.c.l.b16 %v3807
        %v3885 = vunpack.c.h.b16 %v3807
        %v3886 = vunpack.c.l.b16 %v3808
        %v3887 = vunpack.c.h.b16 %v3808
        %v3888 = vunpack.c.l.b16 %v3809
        %v3889 = vunpack.c.h.b16 %v3809
        %v3890 = vunpack.c.l.b16 %v3810
        %v3891 = vunpack.c.h.b16 %v3810
        %v3892 = vunpack.c.l.b16 %v3811
        %v3893 = vunpack.c.h.b16 %v3811
        %v3894 = vunpack.c.l.b16 %v3812
        %v3895 = vunpack.c.h.b16 %v3812
        %v3896 = vunpack.c.l.b16 %v3813
        %v3897 = vunpack.c.h.b16 %v3813
        %v3898 = vunpack.c.l.b16 %v3814
        %v3899 = vunpack.c.h.b16 %v3814
        %v3900 = vunpack.c.l.b16 %v3815
        %v3901 = vunpack.c.h.b16 %v3815
        %v3902 = vunpack.c.l.b16 %v3816
        %v3903 = vunpack.c.h.b16 %v3816
        %v3904 = vunpack.c.l.b16 %v3817
        %v3905 = vunpack.c.h.b16 %v3817
        %v3906 = vunpack.c.l.b16 %v3818
        %v3907 = vunpack.c.h.b16 %v3818
        %v3908 = vunpack.c.l.b16 %v3819
        %v3909 = vunpack.c.h.b16 %v3819
        %v3910 = vunpack.c.l.b16 %v3820
        %v3911 = vunpack.c.h.b16 %v3820
        %v3912 = vunpack.c.l.b16 %v3821
        %v3913 = vunpack.c.h.b16 %v3821
        %v3914 = vunpack.c.l.b16 %v3822
        %v3915 = vunpack.c.h.b16 %v3822
        %v3916 = vunpack.c.l.b16 %v3823
        %v3917 = vunpack.c.h.b16 %v3823
        %v3918 = vunpack.c.l.b16 %v3824
        %v3919 = vunpack.c.h.b16 %v3824
        %v3920 = vunpack.c.l.b16 %v3825
        %v3921 = vunpack.c.h.b16 %v3825
        %v3922 = vunpack.c.l.b16 %v3826
        %v3923 = vunpack.c.h.b16 %v3826
        %v3924 = vunpack.c.l.b16 %v3827
        %v3925 = vunpack.c.h.b16 %v3827
        %v3926 = vpack.c.b16 %v3870, %v3862
        %v3927 = vpack.c.b16 %v3871, %v3863
        %v3928 = vpack.c.b16 %v3872, %v3864
        %v3929 = vpack.c.b16 %v3873, %v3865
        %v3930 = vpack.c.b16 %v3874, %v3866
        %v3931 = vpack.c.b16 %v3875, %v3867
        %v3932 = vpack.c.b16 %v3876, %v3868
        %v3933 = vpack.c.b16 %v3877, %v3869
        %v3934 = vpack.c.b16 %v3886, %v3878
        %v3935 = vpack.c.b16 %v3887, %v3879
        %v3936 = vpack.c.b16 %v3888, %v3880
        %v3937 = vpack.c.b16 %v3889, %v3881
        %v3938 = vpack.c.b16 %v3890, %v3882
        %v3939 = vpack.c.b16 %v3891, %v3883
        %v3940 = vpack.c.b16 %v3892, %v3884
        %v3941 = vpack.c.b16 %v3893, %v3885
        %v3942 = vpack.c.b16 %v3902, %v3894
        %v3943 = vpack.c.b16 %v3903, %v3895
        %v3944 = vpack.c.b16 %v3904, %v3896
        %v3945 = vpack.c.b16 %v3905, %v3897
        %v3946 = vpack.c.b16 %v3906, %v3898
        %v3947 = vpack.c.b16 %v3907, %v3899
        %v3948 = vpack.c.b16 %v3908, %v3900
        %v3949 = vpack.c.b16 %v3909, %v3901
        %v3950 = vpack.c.b16 %v3918, %v3910
        %v3951 = vpack.c.b16 %v3919, %v3911
        %v3952 = vpack.c.b16 %v3920, %v3912
        %v3953 = vpack.c.b16 %v3921, %v3913
        %v3954 = vpack.c.b16 %v3922, %v3914
        %v3955 = vpack.c.b16 %v3923, %v3915
        %v3956 = vpack.c.b16 %v3924, %v3916
        %v3957 = vpack.c.b16 %v3925, %v3917
        %v3991 = vsel %vm914, %v3795, 0
        %3993 = vmatprep.subr.bf16.mxu0 0
        %3994 = vmatpush1.bf16.msra.mxu0 0
        %3995 = vmatprep.subr.bf16.mxu0 0
        %3996 = vmatpush1.bf16.msra.mxu0 0
        %3997 = vmatprep.subr.bf16.mxu0 0
        %3998 = vmatpush1.bf16.msra.mxu0 0
        %3999 = vmatprep.subr.bf16.mxu0 0
        %4000 = vmatpush1.bf16.msra.mxu0 0
        %4001 = vmatprep.subr.bf16.mxu0 %v3951
        %4002 = vmatpush1.bf16.msra.mxu0 %v3950
        %4003 = vmatprep.subr.bf16.mxu0 %v3943
        %4004 = vmatpush1.bf16.msra.mxu0 %v3942
        %4005 = vmatprep.subr.bf16.mxu0 %v3935
        %4006 = vmatpush1.bf16.msra.mxu0 %v3934
        %4007 = vmatprep.subr.bf16.mxu0 %v3927
        %4008 = vmatpush1.bf16.msra.mxu0 %v3926
        %4009 = vmatprep.subr.bf16.mxu0 0
        %4010 = vmatpush2.bf16.msra.mxu0 0
        %4011 = vmatprep.subr.bf16.mxu0 0
        %4012 = vmatpush2.bf16.msra.mxu0 0
        %4013 = vmatprep.subr.bf16.mxu0 0
        %4014 = vmatpush2.bf16.msra.mxu0 0
        %4015 = vmatprep.subr.bf16.mxu0 0
        %4016 = vmatpush2.bf16.msra.mxu0 0
        %4017 = vmatprep.subr.bf16.mxu0 0
        %4018 = vmatpush2.bf16.msra.mxu0 0
        %4019 = vmatprep.subr.bf16.mxu0 0
        %4020 = vmatpush2.bf16.msra.mxu0 0
        %4021 = vmatprep.subr.bf16.mxu0 0
        %4022 = vmatpush2.bf16.msra.mxu0 0
        %4023 = vmatprep.subr.bf16.mxu0 0
        %4024 = vmatpush2.bf16.msra.mxu0 0
        %4025 = vmatprep.mubr.bf16.mxu0 0
        %4026 = vmatmul.mubr.bf16.gmra.mxu0 %v3991
        %v4027 = vpop.f32.mrf.mxu0
        %v4028 = vadd.f32 0.0, %v4027
        %v4029 = vpop.f32.mrf.mxu0
        %v4030 = vadd.f32 0.0, %v4029
        %v4031 = vpop.f32.mrf.mxu0
        %v4032 = vpop.f32.mrf.mxu0
        %4033 = vdwg.mxu0
        %4034 = vmatprep.subr.bf16.mxu0 0
        %4035 = vmatpush1.bf16.msra.mxu0 0
        %4036 = vmatprep.subr.bf16.mxu0 0
        %4037 = vmatpush1.bf16.msra.mxu0 0
        %4038 = vmatprep.subr.bf16.mxu0 0
        %4039 = vmatpush1.bf16.msra.mxu0 0
        %4040 = vmatprep.subr.bf16.mxu0 0
        %4041 = vmatpush1.bf16.msra.mxu0 0
        %4042 = vmatprep.subr.bf16.mxu0 %v3953
        %4043 = vmatpush1.bf16.msra.mxu0 %v3952
        %4044 = vmatprep.subr.bf16.mxu0 %v3945
        %4045 = vmatpush1.bf16.msra.mxu0 %v3944
        %4046 = vmatprep.subr.bf16.mxu0 %v3937
        %4047 = vmatpush1.bf16.msra.mxu0 %v3936
        %4048 = vmatprep.subr.bf16.mxu0 %v3929
        %4049 = vmatpush1.bf16.msra.mxu0 %v3928
        %4050 = vmatprep.subr.bf16.mxu0 0
        %4051 = vmatpush2.bf16.msra.mxu0 0
        %4052 = vmatprep.subr.bf16.mxu0 0
        %4053 = vmatpush2.bf16.msra.mxu0 0
        %4054 = vmatprep.subr.bf16.mxu0 0
        %4055 = vmatpush2.bf16.msra.mxu0 0
        %4056 = vmatprep.subr.bf16.mxu0 0
        %4057 = vmatpush2.bf16.msra.mxu0 0
        %4058 = vmatprep.subr.bf16.mxu0 0
        %4059 = vmatpush2.bf16.msra.mxu0 0
        %4060 = vmatprep.subr.bf16.mxu0 0
        %4061 = vmatpush2.bf16.msra.mxu0 0
        %4062 = vmatprep.subr.bf16.mxu0 0
        %4063 = vmatpush2.bf16.msra.mxu0 0
        %4064 = vmatprep.subr.bf16.mxu0 0
        %4065 = vmatpush2.bf16.msra.mxu0 0
        %4066 = vmatprep.mubr.bf16.mxu0 0
        %4067 = vmatmul.mubr.bf16.gmra.mxu0 %v3991
        %v4068 = vpop.f32.mrf.mxu0
        %v4069 = vadd.f32 0.0, %v4068
        %v4070 = vpop.f32.mrf.mxu0
        %v4071 = vadd.f32 0.0, %v4070
        %v4072 = vpop.f32.mrf.mxu0
        %v4073 = vpop.f32.mrf.mxu0
        %4074 = vdwg.mxu0
        %4075 = vmatprep.subr.bf16.mxu0 0
        %4076 = vmatpush1.bf16.msra.mxu0 0
        %4077 = vmatprep.subr.bf16.mxu0 0
        %4078 = vmatpush1.bf16.msra.mxu0 0
        %4079 = vmatprep.subr.bf16.mxu0 0
        %4080 = vmatpush1.bf16.msra.mxu0 0
        %4081 = vmatprep.subr.bf16.mxu0 0
        %4082 = vmatpush1.bf16.msra.mxu0 0
        %4083 = vmatprep.subr.bf16.mxu0 %v3955
        %4084 = vmatpush1.bf16.msra.mxu0 %v3954
        %4085 = vmatprep.subr.bf16.mxu0 %v3947
        %4086 = vmatpush1.bf16.msra.mxu0 %v3946
        %4087 = vmatprep.subr.bf16.mxu0 %v3939
        %4088 = vmatpush1.bf16.msra.mxu0 %v3938
        %4089 = vmatprep.subr.bf16.mxu0 %v3931
        %4090 = vmatpush1.bf16.msra.mxu0 %v3930
        %4091 = vmatprep.subr.bf16.mxu0 0
        %4092 = vmatpush2.bf16.msra.mxu0 0
        %4093 = vmatprep.subr.bf16.mxu0 0
        %4094 = vmatpush2.bf16.msra.mxu0 0
        %4095 = vmatprep.subr.bf16.mxu0 0
        %4096 = vmatpush2.bf16.msra.mxu0 0
        %4097 = vmatprep.subr.bf16.mxu0 0
        %4098 = vmatpush2.bf16.msra.mxu0 0
        %4099 = vmatprep.subr.bf16.mxu0 0
        %4100 = vmatpush2.bf16.msra.mxu0 0
        %4101 = vmatprep.subr.bf16.mxu0 0
        %4102 = vmatpush2.bf16.msra.mxu0 0
        %4103 = vmatprep.subr.bf16.mxu0 0
        %4104 = vmatpush2.bf16.msra.mxu0 0
        %4105 = vmatprep.subr.bf16.mxu0 0
        %4106 = vmatpush2.bf16.msra.mxu0 0
        %4107 = vmatprep.mubr.bf16.mxu0 0
        %4108 = vmatmul.mubr.bf16.gmra.mxu0 %v3991
        %v4109 = vpop.f32.mrf.mxu0
        %v4110 = vadd.f32 0.0, %v4109
        %v4111 = vpop.f32.mrf.mxu0
        %v4112 = vadd.f32 0.0, %v4111
        %v4113 = vpop.f32.mrf.mxu0
        %v4114 = vpop.f32.mrf.mxu0
        %4115 = vdwg.mxu0
        %4116 = vmatprep.subr.bf16.mxu0 0
        %4117 = vmatpush1.bf16.msra.mxu0 0
        %4118 = vmatprep.subr.bf16.mxu0 0
        %4119 = vmatpush1.bf16.msra.mxu0 0
        %4120 = vmatprep.subr.bf16.mxu0 0
        %4121 = vmatpush1.bf16.msra.mxu0 0
        %4122 = vmatprep.subr.bf16.mxu0 0
        %4123 = vmatpush1.bf16.msra.mxu0 0
        %4124 = vmatprep.subr.bf16.mxu0 %v3957
        %4125 = vmatpush1.bf16.msra.mxu0 %v3956
        %4126 = vmatprep.subr.bf16.mxu0 %v3949
        %4127 = vmatpush1.bf16.msra.mxu0 %v3948
        %4128 = vmatprep.subr.bf16.mxu0 %v3941
        %4129 = vmatpush1.bf16.msra.mxu0 %v3940
        %4130 = vmatprep.subr.bf16.mxu0 %v3933
        %4131 = vmatpush1.bf16.msra.mxu0 %v3932
        %4132 = vmatprep.subr.bf16.mxu0 0
        %4133 = vmatpush2.bf16.msra.mxu0 0
        %4134 = vmatprep.subr.bf16.mxu0 0
        %4135 = vmatpush2.bf16.msra.mxu0 0
        %4136 = vmatprep.subr.bf16.mxu0 0
        %4137 = vmatpush2.bf16.msra.mxu0 0
        %4138 = vmatprep.subr.bf16.mxu0 0
        %4139 = vmatpush2.bf16.msra.mxu0 0
        %4140 = vmatprep.subr.bf16.mxu0 0
        %4141 = vmatpush2.bf16.msra.mxu0 0
        %4142 = vmatprep.subr.bf16.mxu0 0
        %4143 = vmatpush2.bf16.msra.mxu0 0
        %4144 = vmatprep.subr.bf16.mxu0 0
        %4145 = vmatpush2.bf16.msra.mxu0 0
        %4146 = vmatprep.subr.bf16.mxu0 0
        %4147 = vmatpush2.bf16.msra.mxu0 0
        %4148 = vmatprep.mubr.bf16.mxu0 0
        %4149 = vmatmul.mubr.bf16.gmra.mxu0 %v3991
        %v4150 = vpop.f32.mrf.mxu0
        %v4151 = vadd.f32 0.0, %v4150
        %v4152 = vpop.f32.mrf.mxu0
        %v4153 = vadd.f32 0.0, %v4152
        %v4154 = vpop.f32.mrf.mxu0
        %v4155 = vpop.f32.mrf.mxu0
        %4156 = vdwg.mxu0
        %v4165 = vcombine.low %v4028, %v4030
        %v4166 = vcombine.low %v4069, %v4071
        %v4168 = vunpack.c.l.s4 1983009808
        %v4169 = vunpack.c.0.s8 %v4168
        %v4170 = vlaneseq
        %v4171 = vshrl.u32 %v4170, 7
        %v4172 = vsub.s32 %v4169, %v4171
        %v4173 = vrot.slane %v4165, %v4172
        %v4175 = vunpack.c.l.s4 1983009808
        %v4176 = vunpack.c.0.s8 %v4175
        %v4177 = vlaneseq
        %v4178 = vshrl.u32 %v4177, 7
        %v4179 = vsub.s32 %v4176, %v4178
        %v4180 = vrot.slane %v4166, %v4179
        %v4181 = vcombine.low %v4173, %v4180
        %v4182 = vcombine.low %v4110, %v4112
        %v4183 = vcombine.low %v4151, %v4153
        %v4185 = vunpack.c.l.s4 1983009808
        %v4186 = vunpack.c.0.s8 %v4185
        %v4187 = vlaneseq
        %v4188 = vshrl.u32 %v4187, 7
        %v4189 = vsub.s32 %v4186, %v4188
        %v4190 = vrot.slane %v4182, %v4189
        %v4192 = vunpack.c.l.s4 1983009808
        %v4193 = vunpack.c.0.s8 %v4192
        %v4194 = vlaneseq
        %v4195 = vshrl.u32 %v4194, 7
        %v4196 = vsub.s32 %v4193, %v4195
        %v4197 = vrot.slane %v4183, %v4196
        %v4198 = vcombine.low %v4190, %v4197
        %v4201 = vadd.f32 %v3828, %v4181
        %v4202 = vadd.f32 %v3829, %v4198
        %4203 = vst [vmem:[#allocation2] sm:$0xff] %v4201
        %4204 = vst [vmem:[#allocation2 + $0x8] sm:$0xff] %v4202
        %p4205 = scmp.eq.s32.totalorder %s21, 6
        // Predicated region
        $region61: #{pallas_forward.1} parent=55 // pred_check
          %p4206 = pneg %p4205
        $region62: #{pallas_forward.1} parent=55 // pred_check_branch
          %4208 = sbr.rel (%p4206) target = $region64
        $region63: #{pallas_forward.1} parent=55 // pred_region
          %v4209 = vld [vmem:[#allocation2] sm:$0xff]
          %v4210 = vld [vmem:[#allocation2 + $0x8] sm:$0xff]
          %v4211 = vld [vmem:[%s6] sm:$0xff]
          %v4213 = vlaneseq
          %v4214 = vshrl.u32 %v4213, 7
          %v4215 = vsub.s32 0, %v4214
          %v4216 = vrot.slane %v4211, %v4215
          %v4217 = vlaneseq
          %v4218 = vshrl.u32 %v4217, 7
          %v4219 = vsub.s32 1, %v4218
          %v4220 = vrot.slane %v4211, %v4219
          %v4221 = vlaneseq
          %v4222 = vshrl.u32 %v4221, 7
          %v4223 = vsub.s32 2, %v4222
          %v4224 = vrot.slane %v4211, %v4223
          %v4225 = vlaneseq
          %v4226 = vshrl.u32 %v4225, 7
          %v4227 = vsub.s32 3, %v4226
          %v4228 = vrot.slane %v4211, %v4227
          %v4229 = vlaneseq
          %v4230 = vshrl.u32 %v4229, 7
          %v4231 = vsub.s32 4, %v4230
          %v4232 = vrot.slane %v4211, %v4231
          %v4233 = vlaneseq
          %v4234 = vshrl.u32 %v4233, 7
          %v4235 = vsub.s32 5, %v4234
          %v4236 = vrot.slane %v4211, %v4235
          %v4237 = vlaneseq
          %v4238 = vshrl.u32 %v4237, 7
          %v4239 = vsub.s32 6, %v4238
          %v4240 = vrot.slane %v4211, %v4239
          %v4241 = vlaneseq
          %v4242 = vshrl.u32 %v4241, 7
          %v4243 = vsub.s32 7, %v4242
          %v4244 = vrot.slane %v4211, %v4243
          %v4245 = vcombine.low %v4216, %v4220
          %v4246 = vcombine.low %v4224, %v4228
          %v4248 = vunpack.c.l.s4 1983009808
          %v4249 = vunpack.c.0.s8 %v4248
          %v4250 = vlaneseq
          %v4251 = vshrl.u32 %v4250, 7
          %v4252 = vsub.s32 %v4249, %v4251
          %v4253 = vrot.slane %v4245, %v4252
          %v4255 = vunpack.c.l.s4 1983009808
          %v4256 = vunpack.c.0.s8 %v4255
          %v4257 = vlaneseq
          %v4258 = vshrl.u32 %v4257, 7
          %v4259 = vsub.s32 %v4256, %v4258
          %v4260 = vrot.slane %v4246, %v4259
          %v4261 = vcombine.low %v4253, %v4260
          %v4262 = vcombine.low %v4232, %v4236
          %v4263 = vcombine.low %v4240, %v4244
          %v4265 = vunpack.c.l.s4 1983009808
          %v4266 = vunpack.c.0.s8 %v4265
          %v4267 = vlaneseq
          %v4268 = vshrl.u32 %v4267, 7
          %v4269 = vsub.s32 %v4266, %v4268
          %v4270 = vrot.slane %v4262, %v4269
          %v4272 = vunpack.c.l.s4 1983009808
          %v4273 = vunpack.c.0.s8 %v4272
          %v4274 = vlaneseq
          %v4275 = vshrl.u32 %v4274, 7
          %v4276 = vsub.s32 %v4273, %v4275
          %v4277 = vrot.slane %v4263, %v4276
          %v4278 = vcombine.low %v4270, %v4277
          %v4281 = vadd.f32 %v4209, %v4261
          %v4282 = vadd.f32 %v4210, %v4278
          %v4283 = vmax.f32 %v4281, 0.0
          %v4284 = vmax.f32 %v4282, 0.0
          %v4285 = vld [vmem:[%s7] sm:$0xff]
          %v4286 = vld [vmem:[%s7 + $0x8] sm:$0xff]
          %v4287 = vld [vmem:[%s7 + $0x10] sm:$0xff]
          %v4288 = vld [vmem:[%s7 + $0x18] sm:$0xff]
          %v4289 = vld [vmem:[%s7 + $0x20] sm:$0xff]
          %v4290 = vld [vmem:[%s7 + $0x28] sm:$0xff]
          %v4291 = vld [vmem:[%s7 + $0x30] sm:$0xff]
          %v4292 = vld [vmem:[%s7 + $0x38] sm:$0xff]
          %v4293 = vld [vmem:[%s7 + $0x40] sm:$0xff]
          %v4294 = vld [vmem:[%s7 + $0x48] sm:$0xff]
          %v4295 = vld [vmem:[%s7 + $0x50] sm:$0xff]
          %v4296 = vld [vmem:[%s7 + $0x58] sm:$0xff]
          %v4297 = vld [vmem:[%s7 + $0x60] sm:$0xff]
          %v4298 = vld [vmem:[%s7 + $0x68] sm:$0xff]
          %v4299 = vld [vmem:[%s7 + $0x70] sm:$0xff]
          %v4300 = vld [vmem:[%s7 + $0x78] sm:$0xff]
          %v4301 = vld [vmem:[%s7 + $0x80] sm:$0xff]
          %v4302 = vld [vmem:[%s7 + $0x88] sm:$0xff]
          %v4303 = vld [vmem:[%s7 + $0x90] sm:$0xff]
          %v4304 = vld [vmem:[%s7 + $0x98] sm:$0xff]
          %v4305 = vld [vmem:[%s7 + $0xa0] sm:$0xff]
          %v4306 = vld [vmem:[%s7 + $0xa8] sm:$0xff]
          %v4307 = vld [vmem:[%s7 + $0xb0] sm:$0xff]
          %v4308 = vld [vmem:[%s7 + $0xb8] sm:$0xff]
          %v4309 = vld [vmem:[%s7 + $0xc0] sm:$0xff]
          %v4310 = vld [vmem:[%s7 + $0xc8] sm:$0xff]
          %v4311 = vld [vmem:[%s7 + $0xd0] sm:$0xff]
          %v4312 = vld [vmem:[%s7 + $0xd8] sm:$0xff]
          %v4313 = vld [vmem:[%s7 + $0xe0] sm:$0xff]
          %v4314 = vld [vmem:[%s7 + $0xe8] sm:$0xff]
          %v4315 = vld [vmem:[%s7 + $0xf0] sm:$0xff]
          %v4316 = vld [vmem:[%s7 + $0xf8] sm:$0xff]
          %v4317 = vld [vmem:[%s7 + $0x100] sm:$0xff]
          %v4318 = vld [vmem:[%s7 + $0x108] sm:$0xff]
          %v4319 = vld [vmem:[%s7 + $0x110] sm:$0xff]
          %v4320 = vld [vmem:[%s7 + $0x118] sm:$0xff]
          %v4321 = vld [vmem:[%s7 + $0x120] sm:$0xff]
          %v4322 = vld [vmem:[%s7 + $0x128] sm:$0xff]
          %v4323 = vld [vmem:[%s7 + $0x130] sm:$0xff]
          %v4324 = vld [vmem:[%s7 + $0x138] sm:$0xff]
          %v4325 = vld [vmem:[%s7 + $0x140] sm:$0xff]
          %v4326 = vld [vmem:[%s7 + $0x148] sm:$0xff]
          %v4327 = vld [vmem:[%s7 + $0x150] sm:$0xff]
          %v4328 = vld [vmem:[%s7 + $0x158] sm:$0xff]
          %v4329 = vld [vmem:[%s7 + $0x160] sm:$0xff]
          %v4330 = vld [vmem:[%s7 + $0x168] sm:$0xff]
          %v4331 = vld [vmem:[%s7 + $0x170] sm:$0xff]
          %v4332 = vld [vmem:[%s7 + $0x178] sm:$0xff]
          %v4333 = vld [vmem:[%s7 + $0x180] sm:$0xff]
          %v4334 = vld [vmem:[%s7 + $0x188] sm:$0xff]
          %v4335 = vld [vmem:[%s7 + $0x190] sm:$0xff]
          %v4336 = vld [vmem:[%s7 + $0x198] sm:$0xff]
          %v4337 = vld [vmem:[%s7 + $0x1a0] sm:$0xff]
          %v4338 = vld [vmem:[%s7 + $0x1a8] sm:$0xff]
          %v4339 = vld [vmem:[%s7 + $0x1b0] sm:$0xff]
          %v4340 = vld [vmem:[%s7 + $0x1b8] sm:$0xff]
          %v4341 = vld [vmem:[%s7 + $0x1c0] sm:$0xff]
          %v4342 = vld [vmem:[%s7 + $0x1c8] sm:$0xff]
          %v4343 = vld [vmem:[%s7 + $0x1d0] sm:$0xff]
          %v4344 = vld [vmem:[%s7 + $0x1d8] sm:$0xff]
          %v4345 = vld [vmem:[%s7 + $0x1e0] sm:$0xff]
          %v4346 = vld [vmem:[%s7 + $0x1e8] sm:$0xff]
          %v4347 = vld [vmem:[%s7 + $0x1f0] sm:$0xff]
          %v4348 = vld [vmem:[%s7 + $0x1f8] sm:$0xff]
          %v4349 = vld [vmem:[%s7 + $0x200] sm:$0xff]
          %v4350 = vld [vmem:[%s7 + $0x208] sm:$0xff]
          %v4351 = vld [vmem:[%s7 + $0x210] sm:$0xff]
          %v4352 = vld [vmem:[%s7 + $0x218] sm:$0xff]
          %v4353 = vld [vmem:[%s7 + $0x220] sm:$0xff]
          %v4354 = vld [vmem:[%s7 + $0x228] sm:$0xff]
          %v4355 = vld [vmem:[%s7 + $0x230] sm:$0xff]
          %v4356 = vld [vmem:[%s7 + $0x238] sm:$0xff]
          %v4357 = vld [vmem:[%s7 + $0x240] sm:$0xff]
          %v4358 = vld [vmem:[%s7 + $0x248] sm:$0xff]
          %v4359 = vld [vmem:[%s7 + $0x250] sm:$0xff]
          %v4360 = vld [vmem:[%s7 + $0x258] sm:$0xff]
          %v4361 = vld [vmem:[%s7 + $0x260] sm:$0xff]
          %v4362 = vld [vmem:[%s7 + $0x268] sm:$0xff]
          %v4363 = vld [vmem:[%s7 + $0x270] sm:$0xff]
          %v4364 = vld [vmem:[%s7 + $0x278] sm:$0xff]
          %v4365 = vld [vmem:[%s7 + $0x280] sm:$0xff]
          %v4366 = vld [vmem:[%s7 + $0x288] sm:$0xff]
          %v4367 = vld [vmem:[%s7 + $0x290] sm:$0xff]
          %v4368 = vld [vmem:[%s7 + $0x298] sm:$0xff]
          %v4369 = vld [vmem:[%s7 + $0x2a0] sm:$0xff]
          %v4370 = vld [vmem:[%s7 + $0x2a8] sm:$0xff]
          %v4371 = vld [vmem:[%s7 + $0x2b0] sm:$0xff]
          %v4372 = vld [vmem:[%s7 + $0x2b8] sm:$0xff]
          %v4373 = vld [vmem:[%s7 + $0x2c0] sm:$0xff]
          %v4374 = vld [vmem:[%s7 + $0x2c8] sm:$0xff]
          %v4375 = vld [vmem:[%s7 + $0x2d0] sm:$0xff]
          %v4376 = vld [vmem:[%s7 + $0x2d8] sm:$0xff]
          %v4377 = vld [vmem:[%s7 + $0x2e0] sm:$0xff]
          %v4378 = vld [vmem:[%s7 + $0x2e8] sm:$0xff]
          %v4379 = vld [vmem:[%s7 + $0x2f0] sm:$0xff]
          %v4380 = vld [vmem:[%s7 + $0x2f8] sm:$0xff]
          %v4381 = vld [vmem:[%s7 + $0x300] sm:$0xff]
          %v4382 = vld [vmem:[%s7 + $0x308] sm:$0xff]
          %v4383 = vld [vmem:[%s7 + $0x310] sm:$0xff]
          %v4384 = vld [vmem:[%s7 + $0x318] sm:$0xff]
          %v4385 = vld [vmem:[%s7 + $0x320] sm:$0xff]
          %v4386 = vld [vmem:[%s7 + $0x328] sm:$0xff]
          %v4387 = vld [vmem:[%s7 + $0x330] sm:$0xff]
          %v4388 = vld [vmem:[%s7 + $0x338] sm:$0xff]
          %v4389 = vld [vmem:[%s7 + $0x340] sm:$0xff]
          %v4390 = vld [vmem:[%s7 + $0x348] sm:$0xff]
          %v4391 = vld [vmem:[%s7 + $0x350] sm:$0xff]
          %v4392 = vld [vmem:[%s7 + $0x358] sm:$0xff]
          %v4393 = vld [vmem:[%s7 + $0x360] sm:$0xff]
          %v4394 = vld [vmem:[%s7 + $0x368] sm:$0xff]
          %v4395 = vld [vmem:[%s7 + $0x370] sm:$0xff]
          %v4396 = vld [vmem:[%s7 + $0x378] sm:$0xff]
          %v4397 = vld [vmem:[%s7 + $0x380] sm:$0xff]
          %v4398 = vld [vmem:[%s7 + $0x388] sm:$0xff]
          %v4399 = vld [vmem:[%s7 + $0x390] sm:$0xff]
          %v4400 = vld [vmem:[%s7 + $0x398] sm:$0xff]
          %v4401 = vld [vmem:[%s7 + $0x3a0] sm:$0xff]
          %v4402 = vld [vmem:[%s7 + $0x3a8] sm:$0xff]
          %v4403 = vld [vmem:[%s7 + $0x3b0] sm:$0xff]
          %v4404 = vld [vmem:[%s7 + $0x3b8] sm:$0xff]
          %v4405 = vld [vmem:[%s7 + $0x3c0] sm:$0xff]
          %v4406 = vld [vmem:[%s7 + $0x3c8] sm:$0xff]
          %v4407 = vld [vmem:[%s7 + $0x3d0] sm:$0xff]
          %v4408 = vld [vmem:[%s7 + $0x3d8] sm:$0xff]
          %v4409 = vld [vmem:[%s7 + $0x3e0] sm:$0xff]
          %v4410 = vld [vmem:[%s7 + $0x3e8] sm:$0xff]
          %v4411 = vld [vmem:[%s7 + $0x3f0] sm:$0xff]
          %v4412 = vld [vmem:[%s7 + $0x3f8] sm:$0xff]
          %v4413 = vld [vmem:[%s8] sm:$0x1]
          %v4415 = vlaneseq
          %v4416 = vshrl.u32 %v4415, 7
          %v4417 = vsub.s32 0, %v4416
          %v4418 = vrot.slane %v4413, %v4417
          %v4422 = vcombine.high %v4283, %v4283
          %v4424 = vunpack.c.l.s4 1983009808
          %v4425 = vunpack.c.0.s8 %v4424
          %v4426 = vlaneseq
          %v4427 = vshrl.u32 %v4426, 7
          %v4428 = vsub.s32 %v4425, %v4427
          %v4429 = vrot.slane %v4283, %v4428
          %v4431 = vunpack.c.l.s4 1983009808
          %v4432 = vunpack.c.0.s8 %v4431
          %v4433 = vlaneseq
          %v4434 = vshrl.u32 %v4433, 7
          %v4435 = vsub.s32 %v4432, %v4434
          %v4436 = vrot.slane %v4422, %v4435
          %v4437 = vcombine.high %v4429, %v4429
          %v4438 = vcombine.high %v4436, %v4436
          %v4439 = vcombine.high %v4284, %v4284
          %v4441 = vunpack.c.l.s4 1983009808
          %v4442 = vunpack.c.0.s8 %v4441
          %v4443 = vlaneseq
          %v4444 = vshrl.u32 %v4443, 7
          %v4445 = vsub.s32 %v4442, %v4444
          %v4446 = vrot.slane %v4284, %v4445
          %v4448 = vunpack.c.l.s4 1983009808
          %v4449 = vunpack.c.0.s8 %v4448
          %v4450 = vlaneseq
          %v4451 = vshrl.u32 %v4450, 7
          %v4452 = vsub.s32 %v4449, %v4451
          %v4453 = vrot.slane %v4439, %v4452
          %v4454 = vcombine.high %v4446, %v4446
          %v4455 = vcombine.high %v4453, %v4453
          %4464 = vmatprep.subr.mxu0 0.0
          %4465 = vmatpush1.msra.mxu0 %v4300
          %4466 = vmatprep.subr.mxu0 0.0
          %4467 = vmatpush1.msra.mxu0 %v4299
          %4468 = vmatprep.subr.mxu0 0.0
          %4469 = vmatpush1.msra.mxu0 %v4298
          %4470 = vmatprep.subr.mxu0 0.0
          %4471 = vmatpush1.msra.mxu0 %v4297
          %4472 = vmatprep.subr.mxu0 0.0
          %4473 = vmatpush1.msra.mxu0 %v4296
          %4474 = vmatprep.subr.mxu0 0.0
          %4475 = vmatpush1.msra.mxu0 %v4295
          %4476 = vmatprep.subr.mxu0 0.0
          %4477 = vmatpush1.msra.mxu0 %v4294
          %4478 = vmatprep.subr.mxu0 0.0
          %4479 = vmatpush1.msra.mxu0 %v4293
          %4480 = vmatprep.subr.mxu0 0.0
          %4481 = vmatpush1.msra.mxu0 %v4292
          %4482 = vmatprep.subr.mxu0 0.0
          %4483 = vmatpush1.msra.mxu0 %v4291
          %4484 = vmatprep.subr.mxu0 0.0
          %4485 = vmatpush1.msra.mxu0 %v4290
          %4486 = vmatprep.subr.mxu0 0.0
          %4487 = vmatpush1.msra.mxu0 %v4289
          %4488 = vmatprep.subr.mxu0 0.0
          %4489 = vmatpush1.msra.mxu0 %v4288
          %4490 = vmatprep.subr.mxu0 0.0
          %4491 = vmatpush1.msra.mxu0 %v4287
          %4492 = vmatprep.subr.mxu0 0.0
          %4493 = vmatpush1.msra.mxu0 %v4286
          %4494 = vmatprep.subr.mxu0 0.0
          %4495 = vmatpush1.msra.mxu0 %v4285
          %4496 = vmatprep.subr.mxu0 0.0
          %4497 = vmatpush2.msra.mxu0 %v4316
          %4498 = vmatprep.subr.mxu0 0.0
          %4499 = vmatpush2.msra.mxu0 %v4315
          %4500 = vmatprep.subr.mxu0 0.0
          %4501 = vmatpush2.msra.mxu0 %v4314
          %4502 = vmatprep.subr.mxu0 0.0
          %4503 = vmatpush2.msra.mxu0 %v4313
          %4504 = vmatprep.subr.mxu0 0.0
          %4505 = vmatpush2.msra.mxu0 %v4312
          %4506 = vmatprep.subr.mxu0 0.0
          %4507 = vmatpush2.msra.mxu0 %v4311
          %4508 = vmatprep.subr.mxu0 0.0
          %4509 = vmatpush2.msra.mxu0 %v4310
          %4510 = vmatprep.subr.mxu0 0.0
          %4511 = vmatpush2.msra.mxu0 %v4309
          %4512 = vmatprep.subr.mxu0 0.0
          %4513 = vmatpush2.msra.mxu0 %v4308
          %4514 = vmatprep.subr.mxu0 0.0
          %4515 = vmatpush2.msra.mxu0 %v4307
          %4516 = vmatprep.subr.mxu0 0.0
          %4517 = vmatpush2.msra.mxu0 %v4306
          %4518 = vmatprep.subr.mxu0 0.0
          %4519 = vmatpush2.msra.mxu0 %v4305
          %4520 = vmatprep.subr.mxu0 0.0
          %4521 = vmatpush2.msra.mxu0 %v4304
          %4522 = vmatprep.subr.mxu0 0.0
          %4523 = vmatpush2.msra.mxu0 %v4303
          %4524 = vmatprep.subr.mxu0 0.0
          %4525 = vmatpush2.msra.mxu0 %v4302
          %4526 = vmatprep.subr.mxu0 0.0
          %4527 = vmatpush2.msra.mxu0 %v4301
          %4528 = vmatprep.mubr.f32.mxu0 %v4437
          %4529 = vmatmul.mubr.f32.gmra.mxu0 %v4429
          %v4530 = vpop.f32.mrf.mxu0
          %v4531 = vadd.f32 %v4418, %v4530
          %v4532 = vpop.f32.mrf.mxu0
          %4533 = vdwg.mxu0
          %4534 = vmatprep.subr.mxu0 0.0
          %4535 = vmatpush1.msra.mxu0 %v4332
          %4536 = vmatprep.subr.mxu0 0.0
          %4537 = vmatpush1.msra.mxu0 %v4331
          %4538 = vmatprep.subr.mxu0 0.0
          %4539 = vmatpush1.msra.mxu0 %v4330
          %4540 = vmatprep.subr.mxu0 0.0
          %4541 = vmatpush1.msra.mxu0 %v4329
          %4542 = vmatprep.subr.mxu0 0.0
          %4543 = vmatpush1.msra.mxu0 %v4328
          %4544 = vmatprep.subr.mxu0 0.0
          %4545 = vmatpush1.msra.mxu0 %v4327
          %4546 = vmatprep.subr.mxu0 0.0
          %4547 = vmatpush1.msra.mxu0 %v4326
          %4548 = vmatprep.subr.mxu0 0.0
          %4549 = vmatpush1.msra.mxu0 %v4325
          %4550 = vmatprep.subr.mxu0 0.0
          %4551 = vmatpush1.msra.mxu0 %v4324
          %4552 = vmatprep.subr.mxu0 0.0
          %4553 = vmatpush1.msra.mxu0 %v4323
          %4554 = vmatprep.subr.mxu0 0.0
          %4555 = vmatpush1.msra.mxu0 %v4322
          %4556 = vmatprep.subr.mxu0 0.0
          %4557 = vmatpush1.msra.mxu0 %v4321
          %4558 = vmatprep.subr.mxu0 0.0
          %4559 = vmatpush1.msra.mxu0 %v4320
          %4560 = vmatprep.subr.mxu0 0.0
          %4561 = vmatpush1.msra.mxu0 %v4319
          %4562 = vmatprep.subr.mxu0 0.0
          %4563 = vmatpush1.msra.mxu0 %v4318
          %4564 = vmatprep.subr.mxu0 0.0
          %4565 = vmatpush1.msra.mxu0 %v4317
          %4566 = vmatprep.subr.mxu0 0.0
          %4567 = vmatpush2.msra.mxu0 %v4348
          %4568 = vmatprep.subr.mxu0 0.0
          %4569 = vmatpush2.msra.mxu0 %v4347
          %4570 = vmatprep.subr.mxu0 0.0
          %4571 = vmatpush2.msra.mxu0 %v4346
          %4572 = vmatprep.subr.mxu0 0.0
          %4573 = vmatpush2.msra.mxu0 %v4345
          %4574 = vmatprep.subr.mxu0 0.0
          %4575 = vmatpush2.msra.mxu0 %v4344
          %4576 = vmatprep.subr.mxu0 0.0
          %4577 = vmatpush2.msra.mxu0 %v4343
          %4578 = vmatprep.subr.mxu0 0.0
          %4579 = vmatpush2.msra.mxu0 %v4342
          %4580 = vmatprep.subr.mxu0 0.0
          %4581 = vmatpush2.msra.mxu0 %v4341
          %4582 = vmatprep.subr.mxu0 0.0
          %4583 = vmatpush2.msra.mxu0 %v4340
          %4584 = vmatprep.subr.mxu0 0.0
          %4585 = vmatpush2.msra.mxu0 %v4339
          %4586 = vmatprep.subr.mxu0 0.0
          %4587 = vmatpush2.msra.mxu0 %v4338
          %4588 = vmatprep.subr.mxu0 0.0
          %4589 = vmatpush2.msra.mxu0 %v4337
          %4590 = vmatprep.subr.mxu0 0.0
          %4591 = vmatpush2.msra.mxu0 %v4336
          %4592 = vmatprep.subr.mxu0 0.0
          %4593 = vmatpush2.msra.mxu0 %v4335
          %4594 = vmatprep.subr.mxu0 0.0
          %4595 = vmatpush2.msra.mxu0 %v4334
          %4596 = vmatprep.subr.mxu0 0.0
          %4597 = vmatpush2.msra.mxu0 %v4333
          %4598 = vmatprep.mubr.f32.mxu0 %v4438
          %4599 = vmatmul.mubr.f32.gmra.mxu0 %v4436
          %v4600 = vpop.f32.mrf.mxu0
          %v4601 = vadd.f32 %v4531, %v4600
          %v4602 = vpop.f32.mrf.mxu0
          %4603 = vdwg.mxu0
          %4604 = vmatprep.subr.mxu0 0.0
          %4605 = vmatpush1.msra.mxu0 %v4364
          %4606 = vmatprep.subr.mxu0 0.0
          %4607 = vmatpush1.msra.mxu0 %v4363
          %4608 = vmatprep.subr.mxu0 0.0
          %4609 = vmatpush1.msra.mxu0 %v4362
          %4610 = vmatprep.subr.mxu0 0.0
          %4611 = vmatpush1.msra.mxu0 %v4361
          %4612 = vmatprep.subr.mxu0 0.0
          %4613 = vmatpush1.msra.mxu0 %v4360
          %4614 = vmatprep.subr.mxu0 0.0
          %4615 = vmatpush1.msra.mxu0 %v4359
          %4616 = vmatprep.subr.mxu0 0.0
          %4617 = vmatpush1.msra.mxu0 %v4358
          %4618 = vmatprep.subr.mxu0 0.0
          %4619 = vmatpush1.msra.mxu0 %v4357
          %4620 = vmatprep.subr.mxu0 0.0
          %4621 = vmatpush1.msra.mxu0 %v4356
          %4622 = vmatprep.subr.mxu0 0.0
          %4623 = vmatpush1.msra.mxu0 %v4355
          %4624 = vmatprep.subr.mxu0 0.0
          %4625 = vmatpush1.msra.mxu0 %v4354
          %4626 = vmatprep.subr.mxu0 0.0
          %4627 = vmatpush1.msra.mxu0 %v4353
          %4628 = vmatprep.subr.mxu0 0.0
          %4629 = vmatpush1.msra.mxu0 %v4352
          %4630 = vmatprep.subr.mxu0 0.0
          %4631 = vmatpush1.msra.mxu0 %v4351
          %4632 = vmatprep.subr.mxu0 0.0
          %4633 = vmatpush1.msra.mxu0 %v4350
          %4634 = vmatprep.subr.mxu0 0.0
          %4635 = vmatpush1.msra.mxu0 %v4349
          %4636 = vmatprep.subr.mxu0 0.0
          %4637 = vmatpush2.msra.mxu0 %v4380
          %4638 = vmatprep.subr.mxu0 0.0
          %4639 = vmatpush2.msra.mxu0 %v4379
          %4640 = vmatprep.subr.mxu0 0.0
          %4641 = vmatpush2.msra.mxu0 %v4378
          %4642 = vmatprep.subr.mxu0 0.0
          %4643 = vmatpush2.msra.mxu0 %v4377
          %4644 = vmatprep.subr.mxu0 0.0
          %4645 = vmatpush2.msra.mxu0 %v4376
          %4646 = vmatprep.subr.mxu0 0.0
          %4647 = vmatpush2.msra.mxu0 %v4375
          %4648 = vmatprep.subr.mxu0 0.0
          %4649 = vmatpush2.msra.mxu0 %v4374
          %4650 = vmatprep.subr.mxu0 0.0
          %4651 = vmatpush2.msra.mxu0 %v4373
          %4652 = vmatprep.subr.mxu0 0.0
          %4653 = vmatpush2.msra.mxu0 %v4372
          %4654 = vmatprep.subr.mxu0 0.0
          %4655 = vmatpush2.msra.mxu0 %v4371
          %4656 = vmatprep.subr.mxu0 0.0
          %4657 = vmatpush2.msra.mxu0 %v4370
          %4658 = vmatprep.subr.mxu0 0.0
          %4659 = vmatpush2.msra.mxu0 %v4369
          %4660 = vmatprep.subr.mxu0 0.0
          %4661 = vmatpush2.msra.mxu0 %v4368
          %4662 = vmatprep.subr.mxu0 0.0
          %4663 = vmatpush2.msra.mxu0 %v4367
          %4664 = vmatprep.subr.mxu0 0.0
          %4665 = vmatpush2.msra.mxu0 %v4366
          %4666 = vmatprep.subr.mxu0 0.0
          %4667 = vmatpush2.msra.mxu0 %v4365
          %4668 = vmatprep.mubr.f32.mxu0 %v4454
          %4669 = vmatmul.mubr.f32.gmra.mxu0 %v4446
          %v4670 = vpop.f32.mrf.mxu0
          %v4671 = vadd.f32 %v4601, %v4670
          %v4672 = vpop.f32.mrf.mxu0
          %4673 = vdwg.mxu0
          %4674 = vmatprep.subr.mxu0 0.0
          %4675 = vmatpush1.msra.mxu0 %v4396
          %4676 = vmatprep.subr.mxu0 0.0
          %4677 = vmatpush1.msra.mxu0 %v4395
          %4678 = vmatprep.subr.mxu0 0.0
          %4679 = vmatpush1.msra.mxu0 %v4394
          %4680 = vmatprep.subr.mxu0 0.0
          %4681 = vmatpush1.msra.mxu0 %v4393
          %4682 = vmatprep.subr.mxu0 0.0
          %4683 = vmatpush1.msra.mxu0 %v4392
          %4684 = vmatprep.subr.mxu0 0.0
          %4685 = vmatpush1.msra.mxu0 %v4391
          %4686 = vmatprep.subr.mxu0 0.0
          %4687 = vmatpush1.msra.mxu0 %v4390
          %4688 = vmatprep.subr.mxu0 0.0
          %4689 = vmatpush1.msra.mxu0 %v4389
          %4690 = vmatprep.subr.mxu0 0.0
          %4691 = vmatpush1.msra.mxu0 %v4388
          %4692 = vmatprep.subr.mxu0 0.0
          %4693 = vmatpush1.msra.mxu0 %v4387
          %4694 = vmatprep.subr.mxu0 0.0
          %4695 = vmatpush1.msra.mxu0 %v4386
          %4696 = vmatprep.subr.mxu0 0.0
          %4697 = vmatpush1.msra.mxu0 %v4385
          %4698 = vmatprep.subr.mxu0 0.0
          %4699 = vmatpush1.msra.mxu0 %v4384
          %4700 = vmatprep.subr.mxu0 0.0
          %4701 = vmatpush1.msra.mxu0 %v4383
          %4702 = vmatprep.subr.mxu0 0.0
          %4703 = vmatpush1.msra.mxu0 %v4382
          %4704 = vmatprep.subr.mxu0 0.0
          %4705 = vmatpush1.msra.mxu0 %v4381
          %4706 = vmatprep.subr.mxu0 0.0
          %4707 = vmatpush2.msra.mxu0 %v4412
          %4708 = vmatprep.subr.mxu0 0.0
          %4709 = vmatpush2.msra.mxu0 %v4411
          %4710 = vmatprep.subr.mxu0 0.0
          %4711 = vmatpush2.msra.mxu0 %v4410
          %4712 = vmatprep.subr.mxu0 0.0
          %4713 = vmatpush2.msra.mxu0 %v4409
          %4714 = vmatprep.subr.mxu0 0.0
          %4715 = vmatpush2.msra.mxu0 %v4408
          %4716 = vmatprep.subr.mxu0 0.0
          %4717 = vmatpush2.msra.mxu0 %v4407
          %4718 = vmatprep.subr.mxu0 0.0
          %4719 = vmatpush2.msra.mxu0 %v4406
          %4720 = vmatprep.subr.mxu0 0.0
          %4721 = vmatpush2.msra.mxu0 %v4405
          %4722 = vmatprep.subr.mxu0 0.0
          %4723 = vmatpush2.msra.mxu0 %v4404
          %4724 = vmatprep.subr.mxu0 0.0
          %4725 = vmatpush2.msra.mxu0 %v4403
          %4726 = vmatprep.subr.mxu0 0.0
          %4727 = vmatpush2.msra.mxu0 %v4402
          %4728 = vmatprep.subr.mxu0 0.0
          %4729 = vmatpush2.msra.mxu0 %v4401
          %4730 = vmatprep.subr.mxu0 0.0
          %4731 = vmatpush2.msra.mxu0 %v4400
          %4732 = vmatprep.subr.mxu0 0.0
          %4733 = vmatpush2.msra.mxu0 %v4399
          %4734 = vmatprep.subr.mxu0 0.0
          %4735 = vmatpush2.msra.mxu0 %v4398
          %4736 = vmatprep.subr.mxu0 0.0
          %4737 = vmatpush2.msra.mxu0 %v4397
          %4738 = vmatprep.mubr.f32.mxu0 %v4455
          %4739 = vmatmul.mubr.f32.gmra.mxu0 %v4453
          %v4740 = vpop.f32.mrf.mxu0
          %v4741 = vadd.f32 %v4671, %v4740
          %v4742 = vpop.f32.mrf.mxu0
          %4743 = vdwg.mxu0
          %4744 = vst [vmem:[#allocation4] sm:$0x3] %v4741
        $region64: #{pallas_forward.1} parent=55 // pred_fallthru
          _
        // Predicated region
        $region65: #{pallas_forward.1} parent=55 // pred_check
          %p4745 = pneg %p238
        $region66: #{pallas_forward.1} parent=55 // pred_check_branch
          %4747 = sbr.rel (%p4745) target = $region68
        $region67: #{pallas_forward.1} parent=55 // pred_region
          %s4749 = ssub.s32 32, 32
          %4750 = vsyncadd [#allocation5], %s4749
          %s4752 = sshll.u32 [#allocation4], 4
          %s4753 = int_to_ptr.vmem [resolvable:$true] %s4752
          %4755 = dma.vmem_to_hbm [thread:$0]  %s4753, 32, %s9, [#allocation5]
        $region68: #{pallas_forward.1} parent=55 // pred_fallthru
          _
        // Predicated region
        $region69: #{pallas_forward.1} parent=55 // pred_check
          %p4756 = pneg %p238
        $region70: #{pallas_forward.1} parent=55 // pred_check_branch
          %4758 = sbr.rel (%p4756) target = $region72
        $region71: #{pallas_forward.1} parent=55 // pred_region
          %4759 = dma.done [#allocation5], 32
        $region72: #{pallas_forward.1} parent=55 // pred_fallthru
          _
      $region56: #{pallas_forward.1} parent=5 // pred_fallthru
        _
      %p4760 = scmp.le.s32.totalorder 2, %s16
      // Predicated region
      $region73: #{pallas_forward.1} parent=5 // pred_check
        %p4761 = pneg %p4760
      $region74: #{pallas_forward.1} parent=5 // pred_check_branch
        %4763 = sbr.rel (%p4761) target = $region76
      $region75: #{pallas_forward.1} parent=5 // pred_region
        %s4764 = ssub.s32 %s16, 2
      $region76: #{pallas_forward.1} parent=5 // pred_fallthru
        _
    $region6: #{pallas_forward.1} parent=1 // loop_footer
      %s20 = sadd.s32 1, %s16
    $region7: #{pallas_forward.1} parent=1 // loop_footer_branch
      %15 = sbr.rel target = $region3
    $region8: #{pallas_forward.1} parent=1 // loop_exit
      _
    %4765 = vsyncpa [#allocation5], 1
    %s4766 = scalar_lea.sflag [#allocation5], 1
    %4767 = vsyncpa %s4766, 1

</llo_original>
